<compile_context>
chip_gen: v7x
topology: tpu7x:2x2x1
jax: 0.10.0
libtpu: 0.0.40
codegen_flags: <defaults>
</compile_context>

<pallas_src>
import functools

import jax
import jax.numpy as jnp
from jax import lax
from jax.experimental import pallas as pl
from jax.experimental.pallas import tpu as pltpu


# ------------------------------ helpers -------------------------------------

def _pick_tile(dim, cap, mult=1):
    """Largest tile <= cap that divides dim and is a multiple of `mult`.
    Falls back to the full dim (a full-extent block is always legal; for very
    large ragged dims this can blow the VMEM budget -- pad inputs instead)."""
    if dim <= cap:
        return dim
    t = (cap // mult) * mult
    while t >= mult:
        if dim % t == 0:
            return t
        t -= mult
    return dim


def _sigmoid(x):
    return 1.0 / (1.0 + jnp.exp(-x))


def _vmem_budget_bytes():
    """Per-generation VMEM budget: ~112 MiB on 128 MiB chips (v5e/v6e), ~48 MiB on
    v7x (64 MiB physical).  Falls back conservatively if the query is unavailable."""
    cap = None
    try:
        info = pltpu.get_tpu_info()
        cap = getattr(info, "vmem_capacity_bytes", None)
    except Exception:
        cap = None
    if not cap:
        cap = 64 * 1024 * 1024
    return int(min(int(cap) - 16 * 1024 * 1024, 112 * 1024 * 1024))


_VMEM_BUDGET = _vmem_budget_bytes()
_BIG_VMEM = _VMEM_BUDGET >= 96 * 1024 * 1024
_TM_CAP = 512 if _BIG_VMEM else 256     # token-tile cap
_TQ_CAP = 512 if _BIG_VMEM else 256     # flash q/k tile cap


def _col_cap(bytes_per_col, base):
    """Column-tile cap so double-buffered weight blocks fit the VMEM budget."""
    cap = (_VMEM_BUDGET // 3) // max(bytes_per_col, 1)
    return min(base, max(128, (cap // 128) * 128))


def _qkv_tn(D, N):
    return _pick_tile(N, _col_cap(6 * D, 512 if _BIG_VMEM else 256), 128)


def _proj_tn(K, D):
    return _pick_tile(D, _col_cap(6 * K, 512 if _BIG_VMEM else 256), 128)


def _ffn_ti(I, D):
    # v7x guidance: shrink the intermediate tile first, never the token/output tiles.
    return _pick_tile(I, _col_cap(12 * D, 1024 if _BIG_VMEM else 512), 128)


# ----------------------------- Pallas kernels -------------------------------

def _adaln_kernel(h_ref, w_ref, b_ref, o_ref):
    # emb = SiLU(c) @ W^T + b   (SiLU(c) precomputed once in XLA, bf16; f32 accumulate)
    o_ref[0] = jnp.dot(h_ref[...], w_ref[0],
                       preferred_element_type=jnp.float32) + b_ref[0]


def _qkv_rope_kernel(x_ref, scale_ref, shift_ref, w_ref, cos_ref, sin_ref,
                     o_ref, xn_ref, *, eps, tn, rope_cols, gated):
    # fused: RMSNorm(x)*scale_eff + shift (cached across n tiles) -> @ Wqkv^T -> rotary
    n = pl.program_id(2)

    @pl.when(n == 0)
    def _():
        x = x_ref[0]                                       # (tm, D) f32
        ms = jnp.mean(x * x, axis=-1, keepdims=True)
        xn = x * lax.rsqrt(ms + eps)
        # scale_eff = norm_w * (1 + scale) is pre-folded in XLA (one MAD here).
        xn_ref[...] = (xn * scale_ref[0] + shift_ref[0]).astype(jnp.bfloat16)

    y = jnp.dot(xn_ref[...], w_ref[...],
                preferred_element_type=jnp.float32)        # (tm, tn) f32

    def _rope(y):
        # interleaved-pair rotary: out = y*cos + swap_pairs(y)*sin_signed
        w = y.shape[-1]
        parity = lax.broadcasted_iota(jnp.int32, y.shape, 1) % 2
        y_next = pltpu.roll(y, w - 1, axis=1)              # y[:, j+1]
        y_prev = pltpu.roll(y, 1, axis=1)                  # y[:, j-1]
        y_swap = jnp.where(parity == 0, y_next, y_prev)
        return y * cos_ref[...] + y_swap * sin_ref[...]

    if gated:
        is_rope = pl.program_id(2) * tn < rope_cols        # V-column tiles skip rotary

        @pl.when(is_rope)
        def _():
            o_ref[0] = _rope(y).astype(o_ref.dtype)

        @pl.when(jnp.logical_not(is_rope))
        def _():
            o_ref[0] = y.astype(o_ref.dtype)
    else:
        o_ref[0] = _rope(y).astype(o_ref.dtype)


def _flash_attn_kernel(tv_ref, km_ref, q_ref, k_ref, v_ref, bias_ref, o_ref,
                       m_ref, l_ref, acc_ref, *, scale, rep):
    # one batch element / q-tile per (b, qi) pair; online softmax over KV tiles,
    # fully-masked tiles skipped via the prefetched validity table.
    qi = pl.program_id(1)
    ki = pl.program_id(2)

    @pl.when(ki == 0)
    def _():
        m_ref[...] = jnp.full_like(m_ref, -1e30)
        l_ref[...] = jnp.zeros_like(l_ref)
        acc_ref[...] = jnp.zeros_like(acc_ref)

    @pl.when(tv_ref[qi, ki] > 0)
    def _():
        q = q_ref[0]                                       # (H, tq, hd) bf16
        k = k_ref[0]                                       # (L, tk, hd) bf16
        v = v_ref[0]
        H, tq, hd = q.shape
        L, tk, _ = k.shape
        # GQA: group the rep query heads that share one KV head (pure view reshape)
        qg = q.reshape(L, rep * tq, hd)

        s = jnp.einsum('gqd,gkd->gqk', qg, k,
                       preferred_element_type=jnp.float32) * scale  # (L, rep*tq, tk)
        bias = bias_ref[...]                               # (tq, tk) f32
        if rep == 1:
            s = s + bias[None, :, :]
        else:
            s = (s.reshape(L, rep, tq, tk) + bias[None, None, :, :]
                 ).reshape(L, rep * tq, tk)

        m_prev = m_ref[...]
        m_new = jnp.maximum(m_prev, jnp.max(s, axis=-1, keepdims=True))
        alpha = jnp.exp(m_prev - m_new)
        p = jnp.exp(s - m_new)
        l_ref[...] = alpha * l_ref[...] + jnp.sum(p, axis=-1, keepdims=True)
        acc_ref[...] = alpha * acc_ref[...] + jnp.einsum(
            'gqk,gkd->gqd', p.astype(jnp.bfloat16), v,
            preferred_element_type=jnp.float32)
        m_ref[...] = m_new

    @pl.when(ki == pl.num_programs(2) - 1)
    def _():
        H, tq, hd = o_ref.shape[1], o_ref.shape[2], o_ref.shape[3]
        # exact normalization (review correctness note); fully-masked rows are
        # undefined (matches the NaN the torch reference would produce).
        out = acc_ref[...] / l_ref[...]
        o_ref[0] = out.reshape(H, tq, hd).astype(o_ref.dtype)


def _out_proj_kernel(y_ref, w_ref, gate_ref, res_ref, o_ref):
    # res + gate * (attn_out @ Wo^T)
    yw = jnp.dot(y_ref[0], w_ref[...], preferred_element_type=jnp.float32)
    o_ref[0] = res_ref[0] + gate_ref[0] * yw


def _ffn_kernel(x_ref, scale_ref, shift_ref, w13_ref, w2_ref, gate_ref,
                o_ref, acc_ref, xn_ref, *, eps, ti):
    # fused: RMSNorm(x)*scale_eff + shift -> SwiGLU (w1|w3 fused block) tiled over I
    #        -> res + gate*ffn
    it = pl.program_id(2)

    @pl.when(it == 0)
    def _():
        x = x_ref[0]                                       # (tm, D) f32
        ms = jnp.mean(x * x, axis=-1, keepdims=True)
        xn = x * lax.rsqrt(ms + eps)
        xn_ref[...] = (xn * scale_ref[0] + shift_ref[0]).astype(jnp.bfloat16)
        acc_ref[...] = jnp.zeros_like(acc_ref)

    xn = xn_ref[...]
    h13 = jnp.dot(xn, w13_ref[...], preferred_element_type=jnp.float32)  # (tm, 2*ti)
    h1 = h13[:, :ti]
    h3 = h13[:, ti:]
    h = (h1 * _sigmoid(h1)) * h3                           # dropout = identity (eval)
    acc_ref[...] += jnp.dot(h.astype(jnp.bfloat16), w2_ref[...],
                            preferred_element_type=jnp.float32)

    @pl.when(it == pl.num_programs(2) - 1)
    def _():
        o_ref[0] = x_ref[0] + gate_ref[0] * acc_ref[...]


def _final_norm_kernel(x_ref, scale_ref, shift_ref, o_ref, *, eps):
    x = x_ref[0]
    ms = jnp.mean(x * x, axis=-1, keepdims=True)
    xn = x * lax.rsqrt(ms + eps)
    o_ref[0] = xn * scale_ref[0] + shift_ref[0]


# ------------------------------ wrappers -------------------------------------

def adaln_linear_all(h, w_stack, b_stack):
    """h: (B, D) bf16 (= SiLU(c)); w_stack: (Lyr, D, N) bf16; b_stack: (Lyr, 1, N) f32
    -> (Lyr, B, N) f32.  One call for all layers (c is identical across layers)."""
    Lyr, D, N = w_stack.shape
    B = h.shape[0]
    tn = _pick_tile(N, 512, 128)
    return pl.pallas_call(
        _adaln_kernel,
        grid=(Lyr, N // tn),
        in_specs=[pl.BlockSpec((B, D), lambda l, n: (0, 0)),
                  pl.BlockSpec((1, D, tn), lambda l, n: (l, 0, n)),
                  pl.BlockSpec((1, 1, tn), lambda l, n: (l, 0, n))],
        out_specs=pl.BlockSpec((1, B, tn), lambda l, n: (l, 0, n)),
        out_shape=jax.ShapeDtypeStruct((Lyr, B, N), jnp.float32),
        compiler_params=pltpu.CompilerParams(
            dimension_semantics=("parallel", "arbitrary"),
            vmem_limit_bytes=_VMEM_BUDGET),
    )(h, w_stack, b_stack)


def qkv_rope_proj(x, scale_eff, shift, w_t, cos_all, sin_all, eps, tn):
    """x: (B,S,D) f32; scale_eff/shift: (B,1,D); w_t: (D,N) bf16;
    cos_all/sin_all: (S, rope_cols) bf16 -> roped qkv (B,S,N) bf16."""
    B, S, D = x.shape
    N = w_t.shape[1]
    rope_cols = cos_all.shape[1]
    gated = rope_cols != N                 # reduced table => V tiles skip rotary
    rope_blocks = rope_cols // tn
    tm = _pick_tile(S, _TM_CAP, 8)

    if gated:
        cs_map = lambda b, s, n: (s, jnp.minimum(n, rope_blocks - 1))
    else:
        cs_map = lambda b, s, n: (s, n)

    kern = functools.partial(_qkv_rope_kernel, eps=eps, tn=tn,
                             rope_cols=rope_cols, gated=gated)
    return pl.pallas_call(
        kern,
        grid=(B, S // tm, N // tn),
        in_specs=[pl.BlockSpec((1, tm, D), lambda b, s, n: (b, s, 0)),
                  pl.BlockSpec((1, 1, D), lambda b, s, n: (b, 0, 0)),
                  pl.BlockSpec((1, 1, D), lambda b, s, n: (b, 0, 0)),
                  pl.BlockSpec((D, tn), lambda b, s, n: (0, n)),
                  pl.BlockSpec((tm, tn), cs_map),
                  pl.BlockSpec((tm, tn), cs_map)],
        out_specs=pl.BlockSpec((1, tm, tn), lambda b, s, n: (b, s, n)),
        out_shape=jax.ShapeDtypeStruct((B, S, N), jnp.bfloat16),
        scratch_shapes=[pltpu.VMEM((tm, D), jnp.bfloat16)],
        compiler_params=pltpu.CompilerParams(
            dimension_semantics=("parallel", "parallel", "arbitrary"),
            vmem_limit_bytes=_VMEM_BUDGET),
    )(x, scale_eff, shift, w_t, cos_all, sin_all)


def flash_attention(q, k, v, bias, tile_valid, kmap, tq, tk):
    """q: (B,H,S,hd); k,v: (B,L,S,hd) bf16; bias: (S,S) f32;
    tile_valid/kmap: (nq, nk) int32 (scalar-prefetched) -> (B,H,S,hd) bf16."""
    B, H, S, hd = q.shape
    L = k.shape[1]
    rep = H // L
    nq, nk = S // tq, S // tk
    scale = 1.0 / (hd ** 0.5)
    kern = functools.partial(_flash_attn_kernel, scale=scale, rep=rep)
    grid_spec = pltpu.PrefetchScalarGridSpec(
        num_scalar_prefetch=2,
        grid=(B, nq, nk),
        in_specs=[
            pl.BlockSpec((1, H, tq, hd), lambda b, qi, ki, tv, km: (b, 0, qi, 0)),
            # skipped (masked) KV tiles re-use the last valid block -> DMA elided
            pl.BlockSpec((1, L, tk, hd), lambda b, qi, ki, tv, km: (b, 0, km[qi, ki], 0)),
            pl.BlockSpec((1, L, tk, hd), lambda b, qi, ki, tv, km: (b, 0, km[qi, ki], 0)),
            pl.BlockSpec((tq, tk),       lambda b, qi, ki, tv, km: (qi, km[qi, ki])),
        ],
        out_specs=pl.BlockSpec((1, H, tq, hd), lambda b, qi, ki, tv, km: (b, 0, qi, 0)),
        scratch_shapes=[pltpu.VMEM((L, rep * tq, 1), jnp.float32),
                        pltpu.VMEM((L, rep * tq, 1), jnp.float32),
                        pltpu.VMEM((L, rep * tq, hd), jnp.float32)])
    return pl.pallas_call(
        kern,
        grid_spec=grid_spec,
        out_shape=jax.ShapeDtypeStruct((B, H, S, hd), jnp.bfloat16),
        compiler_params=pltpu.CompilerParams(
            dimension_semantics=("parallel", "parallel", "arbitrary"),
            vmem_limit_bytes=_VMEM_BUDGET),
    )(tile_valid, kmap, q, k, v, bias)


def attn_out_proj(y, w_t, gate, res):
    """res + gate * (y @ Wo^T).  y: (B,S,K) bf16; w_t: (K,D) bf16; gate: (B,1,D)."""
    B, S, K = y.shape
    D = w_t.shape[1]
    tm = _pick_tile(S, _TM_CAP, 8)
    tn = _proj_tn(K, D)
    return pl.pallas_call(
        _out_proj_kernel,
        grid=(B, S // tm, D // tn),
        in_specs=[pl.BlockSpec((1, tm, K), lambda b, s, n: (b, s, 0)),
                  pl.BlockSpec((K, tn), lambda b, s, n: (0, n)),
                  pl.BlockSpec((1, 1, tn), lambda b, s, n: (b, 0, n)),
                  pl.BlockSpec((1, tm, tn), lambda b, s, n: (b, s, n))],
        out_specs=pl.BlockSpec((1, tm, tn), lambda b, s, n: (b, s, n)),
        out_shape=jax.ShapeDtypeStruct((B, S, D), jnp.float32),
        compiler_params=pltpu.CompilerParams(
            dimension_semantics=("parallel", "parallel", "arbitrary"),
            vmem_limit_bytes=_VMEM_BUDGET),
    )(y, w_t, gate, res)


def ffn_gate_res(x, scale_eff, shift, w13_t, w2_t, gate, eps):
    """x + gate * SwiGLU(RMSNorm(x)*scale_eff+shift), tiled over the intermediate dim
    with a fused (D, 2*ti) w1|w3 block."""
    B, S, D = x.shape
    I = w13_t.shape[1] // 2
    ti = _ffn_ti(I, D)
    tm = _pick_tile(S, _TM_CAP, 8)
    kern = functools.partial(_ffn_kernel, eps=eps, ti=ti)
    return pl.pallas_call(
        kern,
        grid=(B, S // tm, I // ti),
        in_specs=[pl.BlockSpec((1, tm, D), lambda b, s, i: (b, s, 0)),
                  pl.BlockSpec((1, 1, D), lambda b, s, i: (b, 0, 0)),
                  pl.BlockSpec((1, 1, D), lambda b, s, i: (b, 0, 0)),
                  pl.BlockSpec((D, 2 * ti), lambda b, s, i: (0, i)),
                  pl.BlockSpec((ti, D), lambda b, s, i: (i, 0)),
                  pl.BlockSpec((1, 1, D), lambda b, s, i: (b, 0, 0))],
        out_specs=pl.BlockSpec((1, tm, D), lambda b, s, i: (b, s, 0)),
        out_shape=jax.ShapeDtypeStruct((B, S, D), jnp.float32),
        scratch_shapes=[pltpu.VMEM((tm, D), jnp.float32),
                        pltpu.VMEM((tm, D), jnp.bfloat16)],
        compiler_params=pltpu.CompilerParams(
            dimension_semantics=("parallel", "parallel", "arbitrary"),
            vmem_limit_bytes=_VMEM_BUDGET),
    )(x, scale_eff, shift, w13_t, w2_t, gate)


def final_adaln_norm(x, scale_eff, shift, eps):
    B, S, D = x.shape
    tm = _pick_tile(S, _TM_CAP, 8)
    kern = functools.partial(_final_norm_kernel, eps=eps)
    return pl.pallas_call(
        kern,
        grid=(B, S // tm),
        in_specs=[pl.BlockSpec((1, tm, D), lambda b, s: (b, s, 0)),
                  pl.BlockSpec((1, 1, D), lambda b, s: (b, 0, 0)),
                  pl.BlockSpec((1, 1, D), lambda b, s: (b, 0, 0))],
        out_specs=pl.BlockSpec((1, tm, D), lambda b, s: (b, s, 0)),
        out_shape=jax.ShapeDtypeStruct((B, S, D), jnp.float32),
        compiler_params=pltpu.CompilerParams(
            dimension_semantics=("parallel", "parallel"),
            vmem_limit_bytes=_VMEM_BUDGET),
    )(x, scale_eff, shift)


# --------------------------- model definition --------------------------------

def precompute_freqs_cis(seq_len, n_elem, base=10000.0):
    freqs = 1.0 / (base ** (jnp.arange(0, n_elem, 2)[: n_elem // 2].astype(jnp.float32)
                            / n_elem))
    t = jnp.arange(seq_len, dtype=jnp.float32)
    freqs = jnp.outer(t, freqs)
    cache = jnp.stack([jnp.cos(freqs), jnp.sin(freqs)], axis=-1)
    return cache.astype(jnp.bfloat16)  # matches the torch bf16 buffer


def build_rope_tables(freqs_cis, n_head, n_local, head_dim, with_v_identity):
    """Precompute (S, cols) bf16 cos / signed-sin tables for the fused interleaved
    rotary in the QKV kernel.  If with_v_identity, V columns are appended with
    identity (cos=1, sin=0); otherwise the tables only cover the Q/K columns and
    the kernel skips rotary on V tiles."""
    cos = freqs_cis[..., 0].astype(jnp.float32)             # (S, hd//2)
    sin = freqs_cis[..., 1].astype(jnp.float32)
    S = cos.shape[0]
    cos_h = jnp.repeat(cos, 2, axis=-1)                     # [c0,c0,c1,c1,...]
    sin_h = jnp.repeat(sin, 2, axis=-1)
    sign = jnp.tile(jnp.array([-1.0, 1.0], jnp.float32), head_dim // 2)
    sin_h = sin_h * sign                                    # [-s0,+s0,-s1,+s1,...]
    cos_all = jnp.tile(cos_h, (1, n_head + n_local))
    sin_all = jnp.tile(sin_h, (1, n_head + n_local))
    if with_v_identity:
        cos_all = jnp.concatenate(
            [cos_all, jnp.ones((S, n_local * head_dim), jnp.float32)], axis=-1)
        sin_all = jnp.concatenate(
            [sin_all, jnp.zeros((S, n_local * head_dim), jnp.float32)], axis=-1)
    return cos_all.astype(jnp.bfloat16), sin_all.astype(jnp.bfloat16)


def init_params(key, cfg):
    D = cfg["dim"]
    I = cfg["intermediate_size"]
    H = cfg["n_head"]
    L = cfg["n_local_heads"]
    hd = cfg["head_dim"]
    N = (H + 2 * L) * hd
    nlayer = cfg["n_layer"]
    ti = _ffn_ti(I, D)

    def lin_t(k, in_d, out_d):
        # nn.Linear weight is (out, in); store the transpose in bf16 once.
        w = 0.02 * jax.random.normal(k, (out_d, in_d), jnp.float32)
        return jnp.asarray(w.T, jnp.bfloat16)

    layers = []
    adaln_ws = []
    for _ in range(nlayer):
        key, *ks = jax.random.split(key, 7)
        adaln_ws.append(lin_t(ks[0], D, 6 * D))
        w1_t = lin_t(ks[3], D, I)
        w3_t = lin_t(ks[4], D, I)
        nI = I // ti
        # tile-interleave w1/w3 so each FFN i-tile fetches one (D, 2*ti) block
        w13_t = jnp.concatenate([w1_t.reshape(D, nI, ti), w3_t.reshape(D, nI, ti)],
                                axis=2).reshape(D, 2 * I)
        layers.append(dict(
            wqkv_t=lin_t(ks[1], D, N),
            wo_t=lin_t(ks[2], H * hd, D),
            w13_t=w13_t,
            w2_t=lin_t(ks[5], I, D),
        ))
    key, kf = jax.random.split(key)
    return dict(
        layers=layers,
        adaln_w_t=jnp.stack(adaln_ws),                          # (n_layer, D, 6D) bf16
        adaln_b=jnp.zeros((nlayer, 1, 6 * D), jnp.float32),
        attn_norm_w=jnp.ones((nlayer, D), jnp.float32),
        ffn_norm_w=jnp.ones((nlayer, D), jnp.float32),
        final_adaln_w_t=lin_t(kf, D, 2 * D)[None],              # (1, D, 2D) bf16
        final_adaln_b=jnp.zeros((1, 1, 2 * D), jnp.float32),
        final_norm_w=jnp.ones((D,), jnp.float32),
    )


def transformer_forward(params, x, c, input_pos, mask, cfg):
    B, S, D = x.shape
    H = cfg["n_head"]
    L = cfg["n_local_heads"]
    hd = cfg["head_dim"]
    eps = cfg["norm_eps"]
    kv_size = L * hd
    n_layer = cfg["n_layer"]

    # mirrors: mask = mask[..., input_pos]; freqs_cis = self.freqs_cis[input_pos]
    mask = mask[..., input_pos]                                    # (1,1,S,S) bool
    mask2d = mask[0, 0]
    bias = jnp.where(mask2d, 0.0, -1e30).astype(jnp.float32)       # (S,S) f32

    # flash tiling + tile-skip / DMA-remap tables (computed once per forward in XLA)
    tq = _pick_tile(S, _TQ_CAP, 8)
    tk = _pick_tile(S, _TQ_CAP, 8)
    nq, nk = S // tq, S // tk
    valid = mask2d.reshape(nq, tq, nk, tk).any(axis=(1, 3))        # (nq, nk) bool
    tile_valid = valid.astype(jnp.int32)
    kids = jnp.arange(nk, dtype=jnp.int32)[None, :]
    kmap = jnp.maximum(lax.cummax(jnp.where(valid, kids, -1), axis=1),
                       0).astype(jnp.int32)

    # RoPE tables (bf16; V-identity columns dropped when the column tiling allows)
    N = (H + 2 * L) * hd
    tn_qkv = _qkv_tn(D, N)
    gated = ((H + L) * hd) % tn_qkv == 0
    freqs = precompute_freqs_cis(cfg["block_size"], hd, cfg["rope_base"])[input_pos]
    cos_all, sin_all = build_rope_tables(freqs, H, L, hd, with_v_identity=not gated)

    # --- batched adaLN conditioning (c identical across layers: one call) ---
    c2d = c.reshape(B, D).astype(jnp.float32)
    h_silu = (c2d * _sigmoid(c2d)).astype(jnp.bfloat16)
    embs = adaln_linear_all(h_silu, params["adaln_w_t"], params["adaln_b"])
    embs = embs.reshape(n_layer, B, 6, D)
    shift_msa = embs[:, :, 0, :][:, :, None, :]                    # (n_layer,B,1,D)
    gate_msa = embs[:, :, 2, :][:, :, None, :]
    shift_mlp = embs[:, :, 3, :][:, :, None, :]
    gate_mlp = embs[:, :, 5, :][:, :, None, :]
    # fold RMSNorm weight into the adaLN scale (one MAD per token tile in-kernel)
    scale_msa_eff = params["attn_norm_w"][:, None, None, :] * (
        1.0 + embs[:, :, 1, :][:, :, None, :])
    scale_mlp_eff = params["ffn_norm_w"][:, None, None, :] * (
        1.0 + embs[:, :, 4, :][:, :, None, :])

    embs_f = adaln_linear_all(h_silu, params["final_adaln_w_t"],
                              params["final_adaln_b"]).reshape(1, B, 2, D)
    scale_f_eff = (params["final_norm_w"][None, :] *
                   (1.0 + embs_f[0, :, 0, :]))[:, None, :]          # (B,1,D)
    shift_f = embs_f[0, :, 1, :][:, None, :]

    x = x.astype(jnp.float32)

    for l in range(n_layer):
        lp = params["layers"][l]

        # --- fused RMSNorm+mod -> QKV projection -> RoPE (bf16 out) ---
        qkv = qkv_rope_proj(x, scale_msa_eff[l], shift_msa[l], lp["wqkv_t"],
                            cos_all, sin_all, eps, tn_qkv)          # (B,S,N) bf16
        q = qkv[..., :H * hd].reshape(B, S, H, hd).transpose(0, 2, 1, 3)
        k = qkv[..., H * hd:H * hd + kv_size].reshape(B, S, L, hd).transpose(0, 2, 1, 3)
        v = qkv[..., H * hd + kv_size:].reshape(B, S, L, hd).transpose(0, 2, 1, 3)

        # --- flash attention (GQA by grouping, masked-tile skipping) ---
        y = flash_attention(q, k, v, bias, tile_valid, kmap, tq, tk)  # (B,H,S,hd) bf16
        y = y.transpose(0, 2, 1, 3).reshape(B, S, H * hd)

        # --- output projection fused with gated residual ---
        x = attn_out_proj(y, lp["wo_t"], gate_msa[l], x)

        # --- fused RMSNorm+mod -> SwiGLU FFN -> gated residual ---
        x = ffn_gate_res(x, scale_mlp_eff[l], shift_mlp[l], lp["w13_t"], lp["w2_t"],
                         gate_mlp[l], eps)

    # --- final AdaptiveLayerNormFinal ---
    return final_adaln_norm(x, scale_f_eff, shift_f, eps)


# ---------------------------------- main --------------------------------------

if __name__ == "__main__":
    cfg = dict(
        block_size=16,
        n_layer=2,
        n_head=4,
        n_local_heads=4,      # == n_head, required by the reference wqkv split
        dim=128,              # lane-dense (multiple of 128) small demo config
        head_dim=32,
        intermediate_size=256,
        rope_base=10000.0,
        norm_eps=1e-5,
    )

    key = jax.random.PRNGKey(0)
    kp, kx, kc = jax.random.split(key, 3)
    params = init_params(kp, cfg)

    B, S, D = 2, 8, cfg["dim"]
    x = jax.random.normal(kx, (B, S, D), jnp.float32)
    c = jax.random.normal(kc, (B, 1, D), jnp.float32)
    input_pos = jnp.arange(S, dtype=jnp.int32)

    causal = jnp.tril(jnp.ones((cfg["block_size"], cfg["block_size"]), dtype=bool))
    mask = causal[None, None, input_pos]   # (1, 1, S, block_size), as a caller would pass

    @jax.jit
    def run(params, x, c, input_pos, mask):
        return transformer_forward(params, x, c, input_pos, mask, cfg)

    out = run(params, x, c, input_pos, mask)
    out = jax.block_until_ready(out)
    assert out.shape == (B, S, D) and out.dtype == jnp.float32
    print("KERNEL_OK")
</pallas_src>

<mosaic_0001>
module attributes {stable_mosaic.version = 11 : i64} {
  func.func @_adaln_kernel(%arg0: i32, %arg1: i32, %arg2: memref<2x128xbf16, #tpu.memory_space<vmem>>, %arg3: memref<1x128x384xbf16, #tpu.memory_space<vmem>>, %arg4: memref<1x1x384xf32, #tpu.memory_space<vmem>>, %arg5: memref<1x2x384xf32, #tpu.memory_space<vmem>>) attributes {dimension_semantics = [#tpu.dimension_semantics<parallel>, #tpu.dimension_semantics<arbitrary>], iteration_bounds = array<i64: 2, 2>, scalar_prefetch = 0 : i64, scratch_operands = 0 : i64, tpu.core_type = #tpu.core_type<tc>, window_params = [{pipeline_mode = #tpu.pipeline_mode<synchronous>, transform_indices = @transform_0, window_bounds = array<i64: 2, 128>}, {transform_indices = @transform_1, window_bounds = array<i64: 1, 128, 384>}, {transform_indices = @transform_2, window_bounds = array<i64: 1, 1, 384>}, {transform_indices = @transform_3, window_bounds = array<i64: 1, 2, 384>}]} {
    %c0 = arith.constant 0 : index
    %c0_0 = arith.constant 0 : index
    %0 = vector.load %arg2[%c0, %c0_0] : memref<2x128xbf16, #tpu.memory_space<vmem>>, vector<2x128xbf16>
    %c0_1 = arith.constant 0 : index
    %c0_2 = arith.constant 0 : index
    %c0_3 = arith.constant 0 : index
    %1 = vector.load %arg3[%c0_1, %c0_2, %c0_3] : memref<1x128x384xbf16, #tpu.memory_space<vmem>>, vector<1x128x384xbf16>
    %2 = vector.shape_cast %1 : vector<1x128x384xbf16> to vector<128x384xbf16>
    %cst = arith.constant dense<0.000000e+00> : vector<2x384xf32>
    %3 = tpu.matmul %0, %2, %cst {dimension_numbers = #tpu.dot_dimension_numbers<[1], [0], [0], [1], [0, 0, 1, 1], [], []>} : vector<2x128xbf16>, vector<128x384xbf16>, vector<2x384xf32> -> vector<2x384xf32>
    %c0_4 = arith.constant 0 : index
    %c0_5 = arith.constant 0 : index
    %c0_6 = arith.constant 0 : index
    %4 = vector.load %arg4[%c0_4, %c0_5, %c0_6] : memref<1x1x384xf32, #tpu.memory_space<vmem>>, vector<1x1x384xf32>
    %5 = vector.shape_cast %4 : vector<1x1x384xf32> to vector<1x384xf32>
    %6 = vector.broadcast %5 : vector<1x384xf32> to vector<2x384xf32>
    %7 = arith.addf %3, %6 : vector<2x384xf32>
    %c0_7 = arith.constant 0 : index
    %c0_8 = arith.constant 0 : index
    %c0_9 = arith.constant 0 : index
    %8 = vector.load %arg5[%c0_7, %c0_8, %c0_9] : memref<1x2x384xf32, #tpu.memory_space<vmem>>, vector<1x2x384xf32>
    %9 = vector.shape_cast %8 : vector<1x2x384xf32> to vector<2x384xf32>
    %10 = vector.shape_cast %7 : vector<2x384xf32> to vector<1x2x384xf32>
    tpu.vector_store %arg5[%c0_7, %c0_8, %c0_9], %10 {strides = array<i32>} : memref<1x2x384xf32, #tpu.memory_space<vmem>>, vector<1x2x384xf32>,
    return
  }
  func.func @transform_0(%arg0: i32, %arg1: i32) -> (i32, i32) {
    %c0_i32 = arith.constant 0 : i32
    %c0_i32_0 = arith.constant 0 : i32
    %c0_i32_1 = arith.constant 0 : i32
    return %c0_i32, %c0_i32_0 : i32, i32
  }
  func.func @transform_1(%arg0: i32, %arg1: i32) -> (i32, i32, i32) {
    %c0_i32 = arith.constant 0 : i32
    %c0_i32_0 = arith.constant 0 : i32
    return %arg0, %c0_i32, %arg1 : i32, i32, i32
  }
  func.func @transform_2(%arg0: i32, %arg1: i32) -> (i32, i32, i32) {
    %c0_i32 = arith.constant 0 : i32
    %c0_i32_0 = arith.constant 0 : i32
    return %arg0, %c0_i32, %arg1 : i32, i32, i32
  }
  func.func @transform_3(%arg0: i32, %arg1: i32) -> (i32, i32, i32) {
    %c0_i32 = arith.constant 0 : i32
    %c0_i32_0 = arith.constant 0 : i32
    return %arg0, %c0_i32, %arg1 : i32, i32, i32
  }
}

module attributes {stable_mosaic.version = 11 : i64} {
  func.func @_qkv_rope_kernel(%arg0: i32, %arg1: i32, %arg2: i32, %arg3: memref<1x8x128xf32, #tpu.memory_space<vmem>>, %arg4: memref<1x1x128xf32, #tpu.memory_space<vmem>>, %arg5: memref<1x1x128xf32, #tpu.memory_space<vmem>>, %arg6: memref<128x128xbf16, #tpu.memory_space<vmem>>, %arg7: memref<8x128xbf16, #tpu.memory_space<vmem>>, %arg8: memref<8x128xbf16, #tpu.memory_space<vmem>>, %arg9: memref<1x8x128xbf16, #tpu.memory_space<vmem>>, %arg10: memref<8x128xbf16, #tpu.memory_space<vmem>>) attributes {dimension_semantics = [#tpu.dimension_semantics<parallel>, #tpu.dimension_semantics<parallel>, #tpu.dimension_semantics<arbitrary>], iteration_bounds = array<i64: 2, 1, 3>, scalar_prefetch = 0 : i64, scratch_operands = 1 : i64, tpu.core_type = #tpu.core_type<tc>, window_params = [{transform_indices = @transform_0, window_bounds = array<i64: 1, 8, 128>}, {transform_indices = @transform_1, window_bounds = array<i64: 1, 1, 128>}, {transform_indices = @transform_2, window_bounds = array<i64: 1, 1, 128>}, {transform_indices = @transform_3, window_bounds = array<i64: 128, 128>}, {transform_indices = @transform_4, window_bounds = array<i64: 8, 128>}, {transform_indices = @transform_5, window_bounds = array<i64: 8, 128>}, {transform_indices = @transform_6, window_bounds = array<i64: 1, 8, 128>}]} {
    %c0_i32 = arith.constant 0 : i32
    %0 = arith.cmpi eq, %arg2, %c0_i32 : i32
    %1 = arith.extui %0 : i1 to i32
    %c0_i32_0 = arith.constant 0 : i32
    %2 = arith.cmpi ne, %1, %c0_i32_0 : i32
    scf.if %2 {
      %c0_6 = arith.constant 0 : index
      %c0_7 = arith.constant 0 : index
      %c0_8 = arith.constant 0 : index
      %13 = vector.load %arg3[%c0_6, %c0_7, %c0_8] : memref<1x8x128xf32, #tpu.memory_space<vmem>>, vector<1x8x128xf32>
      %14 = vector.shape_cast %13 : vector<1x8x128xf32> to vector<8x128xf32>
      %15 = arith.mulf %14, %14 : vector<8x128xf32>
      %cst_9 = arith.constant dense<0.000000e+00> : vector<8xf32>
      %16 = vector.multi_reduction <add>, %15, %cst_9 [1] : vector<8x128xf32> to vector<8xf32>
      %17 = vector.shape_cast %16 : vector<8xf32> to vector<8x1xf32>
      %cst_10 = arith.constant 1.280000e+02 : f32
      %18 = vector.broadcast %cst_10 : f32 to vector<8x1xf32>
      %19 = arith.divf %17, %18 : vector<8x1xf32>
      %cst_11 = arith.constant 9.99999974E-6 : f32
      %20 = vector.broadcast %cst_11 : f32 to vector<8x1xf32>
      %21 = arith.addf %19, %20 : vector<8x1xf32>
      %22 = math.rsqrt %21 : vector<8x1xf32>
      %23 = vector.broadcast %22 : vector<8x1xf32> to vector<8x128xf32>
      %24 = arith.mulf %14, %23 : vector<8x128xf32>
      %c0_12 = arith.constant 0 : index
      %c0_13 = arith.constant 0 : index
      %c0_14 = arith.constant 0 : index
      %25 = vector.load %arg4[%c0_12, %c0_13, %c0_14] : memref<1x1x128xf32, #tpu.memory_space<vmem>>, vector<1x1x128xf32>
      %26 = vector.shape_cast %25 : vector<1x1x128xf32> to vector<1x128xf32>
      %27 = vector.broadcast %26 : vector<1x128xf32> to vector<8x128xf32>
      %28 = arith.mulf %24, %27 : vector<8x128xf32>
      %c0_15 = arith.constant 0 : index
      %c0_16 = arith.constant 0 : index
      %c0_17 = arith.constant 0 : index
      %29 = vector.load %arg5[%c0_15, %c0_16, %c0_17] : memref<1x1x128xf32, #tpu.memory_space<vmem>>, vector<1x1x128xf32>
      %30 = vector.shape_cast %29 : vector<1x1x128xf32> to vector<1x128xf32>
      %31 = vector.broadcast %30 : vector<1x128xf32> to vector<8x128xf32>
      %32 = arith.addf %28, %31 : vector<8x128xf32>
      %33 = arith.truncf %32 : vector<8x128xf32> to vector<8x128xbf16>
      %c0_18 = arith.constant 0 : index
      %c0_19 = arith.constant 0 : index
      %34 = vector.load %arg10[%c0_18, %c0_19] : memref<8x128xbf16, #tpu.memory_space<vmem>>, vector<8x128xbf16>
      tpu.vector_store %arg10[%c0_18, %c0_19], %33 {strides = array<i32>} : memref<8x128xbf16, #tpu.memory_space<vmem>>, vector<8x128xbf16>,
    } else {
    }
    %c0 = arith.constant 0 : index
    %c0_1 = arith.constant 0 : index
    %3 = vector.load %arg10[%c0, %c0_1] : memref<8x128xbf16, #tpu.memory_space<vmem>>, vector<8x128xbf16>
    %c0_2 = arith.constant 0 : index
    %c0_3 = arith.constant 0 : index
    %4 = vector.load %arg6[%c0_2, %c0_3] : memref<128x128xbf16, #tpu.memory_space<vmem>>, vector<128x128xbf16>
    %cst = arith.constant dense<0.000000e+00> : vector<8x128xf32>
    %5 = tpu.matmul %3, %4, %cst {dimension_numbers = #tpu.dot_dimension_numbers<[1], [0], [0], [1], [0, 0, 1, 1], [], []>} : vector<8x128xbf16>, vector<128x128xbf16>, vector<8x128xf32> -> vector<8x128xf32>
    %c128_i32 = arith.constant 128 : i32
    %6 = arith.muli %arg2, %c128_i32 : i32
    %c256_i32 = arith.constant 256 : i32
    %7 = arith.cmpi slt, %6, %c256_i32 : i32
    %8 = arith.extui %7 : i1 to i32
    %c0_i32_4 = arith.constant 0 : i32
    %9 = arith.cmpi ne, %8, %c0_i32_4 : i32
    scf.if %9 {
      %13 = tpu.iota {dimensions = array<i32: 1>} : vector<8x128xi32>
      %c2_i32 = arith.constant 2 : i32
      %c0_i32_6 = arith.constant 0 : i32
      %14 = arith.cmpi eq, %c2_i32, %c0_i32_6 : i32
      %c1_i32 = arith.constant 1 : i32
      %15 = arith.select %14, %c1_i32, %c2_i32 : i32
      %16 = vector.broadcast %15 : i32 to vector<8x128xi32>
      %17 = arith.remsi %13, %16 : vector<8x128xi32>
      %c0_i32_7 = arith.constant 0 : i32
      %18 = vector.broadcast %c0_i32_7 : i32 to vector<8x128xi32>
      %19 = arith.cmpi ne, %17, %18 : vector<8x128xi32>
      %c0_i32_8 = arith.constant 0 : i32
      %20 = vector.broadcast %c0_i32_8 : i32 to vector<8x128xi32>
      %21 = arith.cmpi slt, %17, %20 : vector<8x128xi32>
      %c0_i32_9 = arith.constant 0 : i32
      %22 = arith.cmpi slt, %15, %c0_i32_9 : i32
      %23 = vector.broadcast %22 : i1 to vector<8x128xi1>
      %24 = vector.broadcast %23 : vector<8x128xi1> to vector<8x128xi1>
      %25 = arith.xori %21, %24 : vector<8x128xi1>
      %26 = arith.andi %25, %19 : vector<8x128xi1>
      %27 = vector.broadcast %15 : i32 to vector<8x128xi32>
      %28 = arith.addi %17, %27 : vector<8x128xi32>
      %29 = arith.select %26, %28, %17 : vector<8x128xi1>, vector<8x128xi32>
      %c127_i32 = arith.constant 127 : i32
      %30 = tpu.dynamic_rotate %5 by %c127_i32 dim 1 : vector<8x128xf32>, i32 -> vector<8x128xf32>
      %c1_i32_10 = arith.constant 1 : i32
      %31 = tpu.dynamic_rotate %5 by %c1_i32_10 dim 1 : vector<8x128xf32>, i32 -> vector<8x128xf32>
      %c0_i32_11 = arith.constant 0 : i32
      %32 = vector.broadcast %c0_i32_11 : i32 to vector<8x128xi32>
      %33 = arith.cmpi eq, %29, %32 : vector<8x128xi32>
      %34 = arith.select %33, %30, %31 : vector<8x128xi1>, vector<8x128xf32>
      %c0_12 = arith.constant 0 : index
      %c0_13 = arith.constant 0 : index
      %35 = vector.load %arg7[%c0_12, %c0_13] : memref<8x128xbf16, #tpu.memory_space<vmem>>, vector<8x128xbf16>
      %36 = arith.extf %35 : vector<8x128xbf16> to vector<8x128xf32>
      %37 = arith.mulf %5, %36 : vector<8x128xf32>
      %c0_14 = arith.constant 0 : index
      %c0_15 = arith.constant 0 : index
      %38 = vector.load %arg8[%c0_14, %c0_15] : memref<8x128xbf16, #tpu.memory_space<vmem>>, vector<8x128xbf16>
      %39 = arith.extf %38 : vector<8x128xbf16> to vector<8x128xf32>
      %40 = arith.mulf %34, %39 : vector<8x128xf32>
      %41 = arith.addf %37, %40 : vector<8x128xf32>
      %42 = arith.truncf %41 : vector<8x128xf32> to vector<8x128xbf16>
      %c0_16 = arith.constant 0 : index
      %c0_17 = arith.constant 0 : index
      %c0_18 = arith.constant 0 : index
      %43 = vector.load %arg9[%c0_16, %c0_17, %c0_18] : memref<1x8x128xbf16, #tpu.memory_space<vmem>>, vector<1x8x128xbf16>
      %44 = vector.shape_cast %43 : vector<1x8x128xbf16> to vector<8x128xbf16>
      %45 = vector.shape_cast %42 : vector<8x128xbf16> to vector<1x8x128xbf16>
      tpu.vector_store %arg9[%c0_16, %c0_17, %c0_18], %45 {strides = array<i32>} : memref<1x8x128xbf16, #tpu.memory_space<vmem>>, vector<1x8x128xbf16>,
    } else {
    }
    %true = arith.constant true
    %10 = arith.xori %7, %true : i1
    %11 = arith.extui %10 : i1 to i32
    %c0_i32_5 = arith.constant 0 : i32
    %12 = arith.cmpi ne, %11, %c0_i32_5 : i32
    scf.if %12 {
      %13 = arith.truncf %5 : vector<8x128xf32> to vector<8x128xbf16>
      %c0_6 = arith.constant 0 : index
      %c0_7 = arith.constant 0 : index
      %c0_8 = arith.constant 0 : index
      %14 = vector.load %arg9[%c0_6, %c0_7, %c0_8] : memref<1x8x128xbf16, #tpu.memory_space<vmem>>, vector<1x8x128xbf16>
      %15 = vector.shape_cast %14 : vector<1x8x128xbf16> to vector<8x128xbf16>
      %16 = vector.shape_cast %13 : vector<8x128xbf16> to vector<1x8x128xbf16>
      tpu.vector_store %arg9[%c0_6, %c0_7, %c0_8], %16 {strides = array<i32>} : memref<1x8x128xbf16, #tpu.memory_space<vmem>>, vector<1x8x128xbf16>,
    } else {
    }
    return
  }
  func.func @transform_0(%arg0: i32, %arg1: i32, %arg2: i32) -> (i32, i32, i32) {
    %c0_i32 = arith.constant 0 : i32
    %c0_i32_0 = arith.constant 0 : i32
    return %arg0, %arg1, %c0_i32 : i32, i32, i32
  }
  func.func @transform_1(%arg0: i32, %arg1: i32, %arg2: i32) -> (i32, i32, i32) {
    %c0_i32 = arith.constant 0 : i32
    %c0_i32_0 = arith.constant 0 : i32
    %c0_i32_1 = arith.constant 0 : i32
    return %arg0, %c0_i32, %c0_i32_0 : i32, i32, i32
  }
  func.func @transform_2(%arg0: i32, %arg1: i32, %arg2: i32) -> (i32, i32, i32) {
    %c0_i32 = arith.constant 0 : i32
    %c0_i32_0 = arith.constant 0 : i32
    %c0_i32_1 = arith.constant 0 : i32
    return %arg0, %c0_i32, %c0_i32_0 : i32, i32, i32
  }
  func.func @transform_3(%arg0: i32, %arg1: i32, %arg2: i32) -> (i32, i32) {
    %c0_i32 = arith.constant 0 : i32
    %c0_i32_0 = arith.constant 0 : i32
    return %c0_i32, %arg2 : i32, i32
  }
  func.func @transform_4(%arg0: i32, %arg1: i32, %arg2: i32) -> (i32, i32) {
    %c1_i32 = arith.constant 1 : i32
    %0 = arith.minsi %arg2, %c1_i32 : i32
    %c0_i32 = arith.constant 0 : i32
    return %arg1, %0 : i32, i32
  }
  func.func @transform_5(%arg0: i32, %arg1: i32, %arg2: i32) -> (i32, i32) {
    %c1_i32 = arith.constant 1 : i32
    %0 = arith.minsi %arg2, %c1_i32 : i32
    %c0_i32 = arith.constant 0 : i32
    return %arg1, %0 : i32, i32
  }
  func.func @transform_6(%arg0: i32, %arg1: i32, %arg2: i32) -> (i32, i32, i32) {
    %c0_i32 = arith.constant 0 : i32
    return %arg0, %arg1, %arg2 : i32, i32, i32
  }
}

module attributes {stable_mosaic.version = 11 : i64} {
  func.func @_out_proj_kernel(%arg0: i32, %arg1: i32, %arg2: i32, %arg3: memref<1x8x128xbf16, #tpu.memory_space<vmem>>, %arg4: memref<128x128xbf16, #tpu.memory_space<vmem>>, %arg5: memref<1x1x128xf32, #tpu.memory_space<vmem>>, %arg6: memref<1x8x128xf32, #tpu.memory_space<vmem>>, %arg7: memref<1x8x128xf32, #tpu.memory_space<vmem>>) attributes {dimension_semantics = [#tpu.dimension_semantics<parallel>, #tpu.dimension_semantics<parallel>, #tpu.dimension_semantics<arbitrary>], iteration_bounds = array<i64: 2, 1, 1>, scalar_prefetch = 0 : i64, scratch_operands = 0 : i64, tpu.core_type = #tpu.core_type<tc>, window_params = [{transform_indices = @transform_0, window_bounds = array<i64: 1, 8, 128>}, {transform_indices = @transform_1, window_bounds = array<i64: 128, 128>}, {transform_indices = @transform_2, window_bounds = array<i64: 1, 1, 128>}, {transform_indices = @transform_3, window_bounds = array<i64: 1, 8, 128>}, {transform_indices = @transform_4, window_bounds = array<i64: 1, 8, 128>}]} {
    %c0 = arith.constant 0 : index
    %c0_0 = arith.constant 0 : index
    %c0_1 = arith.constant 0 : index
    %0 = vector.load %arg3[%c0, %c0_0, %c0_1] : memref<1x8x128xbf16, #tpu.memory_space<vmem>>, vector<1x8x128xbf16>
    %1 = vector.shape_cast %0 : vector<1x8x128xbf16> to vector<8x128xbf16>
    %c0_2 = arith.constant 0 : index
    %c0_3 = arith.constant 0 : index
    %2 = vector.load %arg4[%c0_2, %c0_3] : memref<128x128xbf16, #tpu.memory_space<vmem>>, vector<128x128xbf16>
    %cst = arith.constant dense<0.000000e+00> : vector<8x128xf32>
    %3 = tpu.matmul %1, %2, %cst {dimension_numbers = #tpu.dot_dimension_numbers<[1], [0], [0], [1], [0, 0, 1, 1], [], []>} : vector<8x128xbf16>, vector<128x128xbf16>, vector<8x128xf32> -> vector<8x128xf32>
    %c0_4 = arith.constant 0 : index
    %c0_5 = arith.constant 0 : index
    %c0_6 = arith.constant 0 : index
    %4 = vector.load %arg6[%c0_4, %c0_5, %c0_6] : memref<1x8x128xf32, #tpu.memory_space<vmem>>, vector<1x8x128xf32>
    %5 = vector.shape_cast %4 : vector<1x8x128xf32> to vector<8x128xf32>
    %c0_7 = arith.constant 0 : index
    %c0_8 = arith.constant 0 : index
    %c0_9 = arith.constant 0 : index
    %6 = vector.load %arg5[%c0_7, %c0_8, %c0_9] : memref<1x1x128xf32, #tpu.memory_space<vmem>>, vector<1x1x128xf32>
    %7 = vector.shape_cast %6 : vector<1x1x128xf32> to vector<1x128xf32>
    %8 = vector.broadcast %7 : vector<1x128xf32> to vector<8x128xf32>
    %9 = arith.mulf %8, %3 : vector<8x128xf32>
    %10 = arith.addf %5, %9 : vector<8x128xf32>
    %c0_10 = arith.constant 0 : index
    %c0_11 = arith.constant 0 : index
    %c0_12 = arith.constant 0 : index
    %11 = vector.load %arg7[%c0_10, %c0_11, %c0_12] : memref<1x8x128xf32, #tpu.memory_space<vmem>>, vector<1x8x128xf32>
    %12 = vector.shape_cast %11 : vector<1x8x128xf32> to vector<8x128xf32>
    %13 = vector.shape_cast %10 : vector<8x128xf32> to vector<1x8x128xf32>
    tpu.vector_store %arg7[%c0_10, %c0_11, %c0_12], %13 {strides = array<i32>} : memref<1x8x128xf32, #tpu.memory_space<vmem>>, vector<1x8x128xf32>,
    return
  }
  func.func @transform_0(%arg0: i32, %arg1: i32, %arg2: i32) -> (i32, i32, i32) {
    %c0_i32 = arith.constant 0 : i32
    %c0_i32_0 = arith.constant 0 : i32
    return %arg0, %arg1, %c0_i32 : i32, i32, i32
  }
  func.func @transform_1(%arg0: i32, %arg1: i32, %arg2: i32) -> (i32, i32) {
    %c0_i32 = arith.constant 0 : i32
    %c0_i32_0 = arith.constant 0 : i32
    return %c0_i32, %arg2 : i32, i32
  }
  func.func @transform_2(%arg0: i32, %arg1: i32, %arg2: i32) -> (i32, i32, i32) {
    %c0_i32 = arith.constant 0 : i32
    %c0_i32_0 = arith.constant 0 : i32
    return %arg0, %c0_i32, %arg2 : i32, i32, i32
  }
  func.func @transform_3(%arg0: i32, %arg1: i32, %arg2: i32) -> (i32, i32, i32) {
    %c0_i32 = arith.constant 0 : i32
    return %arg0, %arg1, %arg2 : i32, i32, i32
  }
  func.func @transform_4(%arg0: i32, %arg1: i32, %arg2: i32) -> (i32, i32, i32) {
    %c0_i32 = arith.constant 0 : i32
    return %arg0, %arg1, %arg2 : i32, i32, i32
  }
}

module attributes {stable_mosaic.version = 11 : i64} {
  func.func @_flash_attn_kernel(%arg0: i32, %arg1: i32, %arg2: i32, %arg3: memref<1x1xi32, #tpu.memory_space<smem>>, %arg4: memref<1x1xi32, #tpu.memory_space<smem>>, %arg5: memref<1x4x8x32xbf16, #tpu.memory_space<vmem>>, %arg6: memref<1x4x8x32xbf16, #tpu.memory_space<vmem>>, %arg7: memref<1x4x8x32xbf16, #tpu.memory_space<vmem>>, %arg8: memref<8x8xf32, #tpu.memory_space<vmem>>, %arg9: memref<1x4x8x32xbf16, #tpu.memory_space<vmem>>, %arg10: memref<4x8x1xf32, #tpu.memory_space<vmem>>, %arg11: memref<4x8x1xf32, #tpu.memory_space<vmem>>, %arg12: memref<4x8x32xf32, #tpu.memory_space<vmem>>) attributes {dimension_semantics = [#tpu.dimension_semantics<parallel>, #tpu.dimension_semantics<parallel>, #tpu.dimension_semantics<arbitrary>], iteration_bounds = array<i64: 2, 1, 1>, scalar_prefetch = 2 : i64, scratch_operands = 3 : i64, tpu.core_type = #tpu.core_type<tc>, window_params = [{transform_indices = @transform_0, window_bounds = array<i64: 1, 4, 8, 32>}, {transform_indices = @transform_1, window_bounds = array<i64: 1, 4, 8, 32>}, {transform_indices = @transform_2, window_bounds = array<i64: 1, 4, 8, 32>}, {transform_indices = @transform_3, window_bounds = array<i64: 8, 8>}, {transform_indices = @transform_4, window_bounds = array<i64: 1, 4, 8, 32>}]} {
    %c0_i32 = arith.constant 0 : i32
    %0 = arith.cmpi eq, %arg2, %c0_i32 : i32
    %1 = arith.extui %0 : i1 to i32
    %c0_i32_0 = arith.constant 0 : i32
    %2 = arith.cmpi ne, %1, %c0_i32_0 : i32
    scf.if %2 {
      %cst = arith.constant -1.000000e+30 : f32
      %12 = vector.broadcast %cst : f32 to vector<4x8x1xf32>
      %c0 = arith.constant 0 : index
      %c0_5 = arith.constant 0 : index
      %c0_6 = arith.constant 0 : index
      %13 = vector.load %arg10[%c0, %c0_5, %c0_6] : memref<4x8x1xf32, #tpu.memory_space<vmem>>, vector<4x8x1xf32>
      tpu.vector_store %arg10[%c0, %c0_5, %c0_6], %12 {strides = array<i32>} : memref<4x8x1xf32, #tpu.memory_space<vmem>>, vector<4x8x1xf32>,
      %cst_7 = arith.constant 0.000000e+00 : f32
      %14 = vector.broadcast %cst_7 : f32 to vector<4x8x1xf32>
      %c0_8 = arith.constant 0 : index
      %c0_9 = arith.constant 0 : index
      %c0_10 = arith.constant 0 : index
      %15 = vector.load %arg11[%c0_8, %c0_9, %c0_10] : memref<4x8x1xf32, #tpu.memory_space<vmem>>, vector<4x8x1xf32>
      tpu.vector_store %arg11[%c0_8, %c0_9, %c0_10], %14 {strides = array<i32>} : memref<4x8x1xf32, #tpu.memory_space<vmem>>, vector<4x8x1xf32>,
      %cst_11 = arith.constant 0.000000e+00 : f32
      %16 = vector.broadcast %cst_11 : f32 to vector<4x8x32xf32>
      %c0_12 = arith.constant 0 : index
      %c0_13 = arith.constant 0 : index
      %c0_14 = arith.constant 0 : index
      %17 = vector.load %arg12[%c0_12, %c0_13, %c0_14] : memref<4x8x32xf32, #tpu.memory_space<vmem>>, vector<4x8x32xf32>
      tpu.vector_store %arg12[%c0_12, %c0_13, %c0_14], %16 {strides = array<i32>} : memref<4x8x32xf32, #tpu.memory_space<vmem>>, vector<4x8x32xf32>,
    } else {
    }
    %3 = arith.index_cast %arg1 : i32 to index
    %4 = arith.index_cast %arg2 : i32 to index
    %5 = memref.load %arg3[%3, %4] : memref<1x1xi32, #tpu.memory_space<smem>>
    %c0_i32_1 = arith.constant 0 : i32
    %6 = arith.cmpi sgt, %5, %c0_i32_1 : i32
    %7 = arith.extui %6 : i1 to i32
    %c0_i32_2 = arith.constant 0 : i32
    %8 = arith.cmpi ne, %7, %c0_i32_2 : i32
    scf.if %8 {
      %c0 = arith.constant 0 : index
      %c0_5 = arith.constant 0 : index
      %c0_6 = arith.constant 0 : index
      %c0_7 = arith.constant 0 : index
      %12 = vector.load %arg5[%c0, %c0_5, %c0_6, %c0_7] : memref<1x4x8x32xbf16, #tpu.memory_space<vmem>>, vector<1x4x8x32xbf16>
      %13 = vector.shape_cast %12 : vector<1x4x8x32xbf16> to vector<4x8x32xbf16>
      %c0_8 = arith.constant 0 : index
      %c0_9 = arith.constant 0 : index
      %c0_10 = arith.constant 0 : index
      %c0_11 = arith.constant 0 : index
      %14 = vector.load %arg6[%c0_8, %c0_9, %c0_10, %c0_11] : memref<1x4x8x32xbf16, #tpu.memory_space<vmem>>, vector<1x4x8x32xbf16>
      %15 = vector.shape_cast %14 : vector<1x4x8x32xbf16> to vector<4x8x32xbf16>
      %c0_12 = arith.constant 0 : index
      %c0_13 = arith.constant 0 : index
      %c0_14 = arith.constant 0 : index
      %c0_15 = arith.constant 0 : index
      %16 = vector.load %arg7[%c0_12, %c0_13, %c0_14, %c0_15] : memref<1x4x8x32xbf16, #tpu.memory_space<vmem>>, vector<1x4x8x32xbf16>
      %17 = vector.shape_cast %16 : vector<1x4x8x32xbf16> to vector<4x8x32xbf16>
      "tpu.trace_start"() <{level = 10 : i32, message = "gqd,gkd->gqk"}> : () -> ()
      %cst = arith.constant dense<0.000000e+00> : vector<4x8x8xf32>
      %18 = tpu.matmul %13, %15, %cst {dimension_numbers = #tpu.dot_dimension_numbers<[2], [2], [1], [1], [0, 0, 0, 1, 1, 1], [0], [0]>} : vector<4x8x32xbf16>, vector<4x8x32xbf16>, vector<4x8x8xf32> -> vector<4x8x8xf32>
      "tpu.trace_stop"() : () -> ()
      %cst_16 = arith.constant 0.176776692 : f32
      %19 = vector.broadcast %cst_16 : f32 to vector<4x8x8xf32>
      %20 = arith.mulf %18, %19 : vector<4x8x8xf32>
      %c0_17 = arith.constant 0 : index
      %c0_18 = arith.constant 0 : index
      %21 = vector.load %arg8[%c0_17, %c0_18] : memref<8x8xf32, #tpu.memory_space<vmem>>, vector<8x8xf32>
      %22 = vector.shape_cast %21 : vector<8x8xf32> to vector<1x8x8xf32>
      %23 = vector.broadcast %22 : vector<1x8x8xf32> to vector<4x8x8xf32>
      %24 = arith.addf %20, %23 : vector<4x8x8xf32>
      %c0_19 = arith.constant 0 : index
      %c0_20 = arith.constant 0 : index
      %c0_21 = arith.constant 0 : index
      %25 = vector.load %arg10[%c0_19, %c0_20, %c0_21] : memref<4x8x1xf32, #tpu.memory_space<vmem>>, vector<4x8x1xf32>
      %cst_22 = arith.constant dense<0xFF800000> : vector<4x8xf32>
      %26 = vector.multi_reduction <maximumf>, %24, %cst_22 [2] : vector<4x8x8xf32> to vector<4x8xf32>
      %27 = vector.shape_cast %26 : vector<4x8xf32> to vector<4x8x1xf32>
      %28 = arith.maximumf %25, %27 : vector<4x8x1xf32>
      %29 = arith.subf %25, %28 : vector<4x8x1xf32>
      %30 = math.exp %29 : vector<4x8x1xf32>
      %31 = vector.broadcast %28 : vector<4x8x1xf32> to vector<4x8x8xf32>
      %32 = arith.subf %24, %31 : vector<4x8x8xf32>
      %33 = math.exp %32 : vector<4x8x8xf32>
      %c0_23 = arith.constant 0 : index
      %c0_24 = arith.constant 0 : index
      %c0_25 = arith.constant 0 : index
      %34 = vector.load %arg11[%c0_23, %c0_24, %c0_25] : memref<4x8x1xf32, #tpu.memory_space<vmem>>, vector<4x8x1xf32>
      %35 = arith.mulf %30, %34 : vector<4x8x1xf32>
      %cst_26 = arith.constant dense<0.000000e+00> : vector<4x8xf32>
      %36 = vector.multi_reduction <add>, %33, %cst_26 [2] : vector<4x8x8xf32> to vector<4x8xf32>
      %37 = vector.shape_cast %36 : vector<4x8xf32> to vector<4x8x1xf32>
      %38 = arith.addf %35, %37 : vector<4x8x1xf32>
      %c0_27 = arith.constant 0 : index
      %c0_28 = arith.constant 0 : index
      %c0_29 = arith.constant 0 : index
      %39 = vector.load %arg11[%c0_27, %c0_28, %c0_29] : memref<4x8x1xf32, #tpu.memory_space<vmem>>, vector<4x8x1xf32>
      tpu.vector_store %arg11[%c0_27, %c0_28, %c0_29], %38 {strides = array<i32>} : memref<4x8x1xf32, #tpu.memory_space<vmem>>, vector<4x8x1xf32>,
      %c0_30 = arith.constant 0 : index
      %c0_31 = arith.constant 0 : index
      %c0_32 = arith.constant 0 : index
      %40 = vector.load %arg12[%c0_30, %c0_31, %c0_32] : memref<4x8x32xf32, #tpu.memory_space<vmem>>, vector<4x8x32xf32>
      %41 = vector.broadcast %30 : vector<4x8x1xf32> to vector<4x8x32xf32>
      %42 = arith.mulf %41, %40 : vector<4x8x32xf32>
      %43 = arith.truncf %33 : vector<4x8x8xf32> to vector<4x8x8xbf16>
      "tpu.trace_start"() <{level = 10 : i32, message = "gqk,gkd->gqd"}> : () -> ()
      %cst_33 = arith.constant dense<0.000000e+00> : vector<4x8x32xf32>
      %44 = tpu.matmul %43, %17, %cst_33 {dimension_numbers = #tpu.dot_dimension_numbers<[2], [1], [1], [2], [0, 0, 0, 1, 1, 2], [0], [0]>} : vector<4x8x8xbf16>, vector<4x8x32xbf16>, vector<4x8x32xf32> -> vector<4x8x32xf32>
      "tpu.trace_stop"() : () -> ()
      %45 = arith.addf %42, %44 : vector<4x8x32xf32>
      %c0_34 = arith.constant 0 : index
      %c0_35 = arith.constant 0 : index
      %c0_36 = arith.constant 0 : index
      %46 = vector.load %arg12[%c0_34, %c0_35, %c0_36] : memref<4x8x32xf32, #tpu.memory_space<vmem>>, vector<4x8x32xf32>
      tpu.vector_store %arg12[%c0_34, %c0_35, %c0_36], %45 {strides = array<i32>} : memref<4x8x32xf32, #tpu.memory_space<vmem>>, vector<4x8x32xf32>,
      %c0_37 = arith.constant 0 : index
      %c0_38 = arith.constant 0 : index
      %c0_39 = arith.constant 0 : index
      %47 = vector.load %arg10[%c0_37, %c0_38, %c0_39] : memref<4x8x1xf32, #tpu.memory_space<vmem>>, vector<4x8x1xf32>
      tpu.vector_store %arg10[%c0_37, %c0_38, %c0_39], %28 {strides = array<i32>} : memref<4x8x1xf32, #tpu.memory_space<vmem>>, vector<4x8x1xf32>,
    } else {
    }
    %c0_i32_3 = arith.constant 0 : i32
    %9 = arith.cmpi eq, %arg2, %c0_i32_3 : i32
    %10 = arith.extui %9 : i1 to i32
    %c0_i32_4 = arith.constant 0 : i32
    %11 = arith.cmpi ne, %10, %c0_i32_4 : i32
    scf.if %11 {
      %c0 = arith.constant 0 : index
      %c0_5 = arith.constant 0 : index
      %c0_6 = arith.constant 0 : index
      %12 = vector.load %arg12[%c0, %c0_5, %c0_6] : memref<4x8x32xf32, #tpu.memory_space<vmem>>, vector<4x8x32xf32>
      %c0_7 = arith.constant 0 : index
      %c0_8 = arith.constant 0 : index
      %c0_9 = arith.constant 0 : index
      %13 = vector.load %arg11[%c0_7, %c0_8, %c0_9] : memref<4x8x1xf32, #tpu.memory_space<vmem>>, vector<4x8x1xf32>
      %14 = vector.broadcast %13 : vector<4x8x1xf32> to vector<4x8x32xf32>
      %15 = arith.divf %12, %14 : vector<4x8x32xf32>
      %16 = arith.truncf %15 : vector<4x8x32xf32> to vector<4x8x32xbf16>
      %c0_10 = arith.constant 0 : index
      %c0_11 = arith.constant 0 : index
      %c0_12 = arith.constant 0 : index
      %c0_13 = arith.constant 0 : index
      %17 = vector.load %arg9[%c0_10, %c0_11, %c0_12, %c0_13] : memref<1x4x8x32xbf16, #tpu.memory_space<vmem>>, vector<1x4x8x32xbf16>
      %18 = vector.shape_cast %17 : vector<1x4x8x32xbf16> to vector<4x8x32xbf16>
      %19 = vector.shape_cast %16 : vector<4x8x32xbf16> to vector<1x4x8x32xbf16>
      tpu.vector_store %arg9[%c0_10, %c0_11, %c0_12, %c0_13], %19 {strides = array<i32>} : memref<1x4x8x32xbf16, #tpu.memory_space<vmem>>, vector<1x4x8x32xbf16>,
    } else {
    }
    return
  }
  func.func @transform_0(%arg0: i32, %arg1: i32, %arg2: i32, %arg3: memref<1x1xi32, #tpu.memory_space<smem>>, %arg4: memref<1x1xi32, #tpu.memory_space<smem>>) -> (i32, i32, i32, i32) {
    %c0_i32 = arith.constant 0 : i32
    %c0_i32_0 = arith.constant 0 : i32
    %c0_i32_1 = arith.constant 0 : i32
    return %arg0, %c0_i32, %arg1, %c0_i32_0 : i32, i32, i32, i32
  }
  func.func @transform_1(%arg0: i32, %arg1: i32, %arg2: i32, %arg3: memref<1x1xi32, #tpu.memory_space<smem>>, %arg4: memref<1x1xi32, #tpu.memory_space<smem>>) -> (i32, i32, i32, i32) {
    %0 = arith.index_cast %arg1 : i32 to index
    %1 = arith.index_cast %arg2 : i32 to index
    %2 = memref.load %arg4[%0, %1] : memref<1x1xi32, #tpu.memory_space<smem>>
    %c0_i32 = arith.constant 0 : i32
    %c0_i32_0 = arith.constant 0 : i32
    %c0_i32_1 = arith.constant 0 : i32
    return %arg0, %c0_i32, %2, %c0_i32_0 : i32, i32, i32, i32
  }
  func.func @transform_2(%arg0: i32, %arg1: i32, %arg2: i32, %arg3: memref<1x1xi32, #tpu.memory_space<smem>>, %arg4: memref<1x1xi32, #tpu.memory_space<smem>>) -> (i32, i32, i32, i32) {
    %0 = arith.index_cast %arg1 : i32 to index
    %1 = arith.index_cast %arg2 : i32 to index
    %2 = memref.load %arg4[%0, %1] : memref<1x1xi32, #tpu.memory_space<smem>>
    %c0_i32 = arith.constant 0 : i32
    %c0_i32_0 = arith.constant 0 : i32
    %c0_i32_1 = arith.constant 0 : i32
    return %arg0, %c0_i32, %2, %c0_i32_0 : i32, i32, i32, i32
  }
  func.func @transform_3(%arg0: i32, %arg1: i32, %arg2: i32, %arg3: memref<1x1xi32, #tpu.memory_space<smem>>, %arg4: memref<1x1xi32, #tpu.memory_space<smem>>) -> (i32, i32) {
    %0 = arith.index_cast %arg1 : i32 to index
    %1 = arith.index_cast %arg2 : i32 to index
    %2 = memref.load %arg4[%0, %1] : memref<1x1xi32, #tpu.memory_space<smem>>
    %c0_i32 = arith.constant 0 : i32
    return %arg1, %2 : i32, i32
  }
  func.func @transform_4(%arg0: i32, %arg1: i32, %arg2: i32, %arg3: memref<1x1xi32, #tpu.memory_space<smem>>, %arg4: memref<1x1xi32, #tpu.memory_space<smem>>) -> (i32, i32, i32, i32) {
    %c0_i32 = arith.constant 0 : i32
    %c0_i32_0 = arith.constant 0 : i32
    %c0_i32_1 = arith.constant 0 : i32
    return %arg0, %c0_i32, %arg1, %c0_i32_0 : i32, i32, i32, i32
  }
}

module attributes {stable_mosaic.version = 11 : i64} {
  func.func @_ffn_kernel(%arg0: i32, %arg1: i32, %arg2: i32, %arg3: memref<1x8x128xf32, #tpu.memory_space<vmem>>, %arg4: memref<1x1x128xf32, #tpu.memory_space<vmem>>, %arg5: memref<1x1x128xf32, #tpu.memory_space<vmem>>, %arg6: memref<128x512xbf16, #tpu.memory_space<vmem>>, %arg7: memref<256x128xbf16, #tpu.memory_space<vmem>>, %arg8: memref<1x1x128xf32, #tpu.memory_space<vmem>>, %arg9: memref<1x8x128xf32, #tpu.memory_space<vmem>>, %arg10: memref<8x128xf32, #tpu.memory_space<vmem>>, %arg11: memref<8x128xbf16, #tpu.memory_space<vmem>>) attributes {dimension_semantics = [#tpu.dimension_semantics<parallel>, #tpu.dimension_semantics<parallel>, #tpu.dimension_semantics<arbitrary>], iteration_bounds = array<i64: 2, 1, 1>, scalar_prefetch = 0 : i64, scratch_operands = 2 : i64, tpu.core_type = #tpu.core_type<tc>, window_params = [{transform_indices = @transform_0, window_bounds = array<i64: 1, 8, 128>}, {transform_indices = @transform_1, window_bounds = array<i64: 1, 1, 128>}, {transform_indices = @transform_2, window_bounds = array<i64: 1, 1, 128>}, {transform_indices = @transform_3, window_bounds = array<i64: 128, 512>}, {transform_indices = @transform_4, window_bounds = array<i64: 256, 128>}, {transform_indices = @transform_5, window_bounds = array<i64: 1, 1, 128>}, {transform_indices = @transform_6, window_bounds = array<i64: 1, 8, 128>}]} {
    %c0_i32 = arith.constant 0 : i32
    %0 = arith.cmpi eq, %arg2, %c0_i32 : i32
    %1 = arith.extui %0 : i1 to i32
    %c0_i32_0 = arith.constant 0 : i32
    %2 = arith.cmpi ne, %1, %c0_i32_0 : i32
    scf.if %2 {
      %c0_16 = arith.constant 0 : index
      %c0_17 = arith.constant 0 : index
      %c0_18 = arith.constant 0 : index
      %26 = vector.load %arg3[%c0_16, %c0_17, %c0_18] : memref<1x8x128xf32, #tpu.memory_space<vmem>>, vector<1x8x128xf32>
      %27 = vector.shape_cast %26 : vector<1x8x128xf32> to vector<8x128xf32>
      %28 = arith.mulf %27, %27 : vector<8x128xf32>
      %cst_19 = arith.constant dense<0.000000e+00> : vector<8xf32>
      %29 = vector.multi_reduction <add>, %28, %cst_19 [1] : vector<8x128xf32> to vector<8xf32>
      %30 = vector.shape_cast %29 : vector<8xf32> to vector<8x1xf32>
      %cst_20 = arith.constant 1.280000e+02 : f32
      %31 = vector.broadcast %cst_20 : f32 to vector<8x1xf32>
      %32 = arith.divf %30, %31 : vector<8x1xf32>
      %cst_21 = arith.constant 9.99999974E-6 : f32
      %33 = vector.broadcast %cst_21 : f32 to vector<8x1xf32>
      %34 = arith.addf %32, %33 : vector<8x1xf32>
      %35 = math.rsqrt %34 : vector<8x1xf32>
      %36 = vector.broadcast %35 : vector<8x1xf32> to vector<8x128xf32>
      %37 = arith.mulf %27, %36 : vector<8x128xf32>
      %c0_22 = arith.constant 0 : index
      %c0_23 = arith.constant 0 : index
      %c0_24 = arith.constant 0 : index
      %38 = vector.load %arg4[%c0_22, %c0_23, %c0_24] : memref<1x1x128xf32, #tpu.memory_space<vmem>>, vector<1x1x128xf32>
      %39 = vector.shape_cast %38 : vector<1x1x128xf32> to vector<1x128xf32>
      %40 = vector.broadcast %39 : vector<1x128xf32> to vector<8x128xf32>
      %41 = arith.mulf %37, %40 : vector<8x128xf32>
      %c0_25 = arith.constant 0 : index
      %c0_26 = arith.constant 0 : index
      %c0_27 = arith.constant 0 : index
      %42 = vector.load %arg5[%c0_25, %c0_26, %c0_27] : memref<1x1x128xf32, #tpu.memory_space<vmem>>, vector<1x1x128xf32>
      %43 = vector.shape_cast %42 : vector<1x1x128xf32> to vector<1x128xf32>
      %44 = vector.broadcast %43 : vector<1x128xf32> to vector<8x128xf32>
      %45 = arith.addf %41, %44 : vector<8x128xf32>
      %46 = arith.truncf %45 : vector<8x128xf32> to vector<8x128xbf16>
      %c0_28 = arith.constant 0 : index
      %c0_29 = arith.constant 0 : index
      %47 = vector.load %arg11[%c0_28, %c0_29] : memref<8x128xbf16, #tpu.memory_space<vmem>>, vector<8x128xbf16>
      tpu.vector_store %arg11[%c0_28, %c0_29], %46 {strides = array<i32>} : memref<8x128xbf16, #tpu.memory_space<vmem>>, vector<8x128xbf16>,
      %cst_30 = arith.constant 0.000000e+00 : f32
      %48 = vector.broadcast %cst_30 : f32 to vector<8x128xf32>
      %c0_31 = arith.constant 0 : index
      %c0_32 = arith.constant 0 : index
      %49 = vector.load %arg10[%c0_31, %c0_32] : memref<8x128xf32, #tpu.memory_space<vmem>>, vector<8x128xf32>
      tpu.vector_store %arg10[%c0_31, %c0_32], %48 {strides = array<i32>} : memref<8x128xf32, #tpu.memory_space<vmem>>, vector<8x128xf32>,
    } else {
    }
    %c0 = arith.constant 0 : index
    %c0_1 = arith.constant 0 : index
    %3 = vector.load %arg11[%c0, %c0_1] : memref<8x128xbf16, #tpu.memory_space<vmem>>, vector<8x128xbf16>
    %c0_2 = arith.constant 0 : index
    %c0_3 = arith.constant 0 : index
    %4 = vector.load %arg6[%c0_2, %c0_3] : memref<128x512xbf16, #tpu.memory_space<vmem>>, vector<128x512xbf16>
    %cst = arith.constant dense<0.000000e+00> : vector<8x512xf32>
    %5 = tpu.matmul %3, %4, %cst {dimension_numbers = #tpu.dot_dimension_numbers<[1], [0], [0], [1], [0, 0, 1, 1], [], []>} : vector<8x128xbf16>, vector<128x512xbf16>, vector<8x512xf32> -> vector<8x512xf32>
    %6 = vector.extract_strided_slice %5 {offsets = [0, 0], sizes = [8, 256], strides = [1, 1]} : vector<8x512xf32> to vector<8x256xf32>
    %7 = vector.extract_strided_slice %5 {offsets = [0, 256], sizes = [8, 256], strides = [1, 1]} : vector<8x512xf32> to vector<8x256xf32>
    %cst_4 = arith.constant 0.000000e+00 : f32
    %8 = vector.broadcast %cst_4 : f32 to vector<8x256xf32>
    %9 = arith.subf %8, %6 : vector<8x256xf32>
    %10 = math.exp %9 : vector<8x256xf32>
    %cst_5 = arith.constant 1.000000e+00 : f32
    %11 = vector.broadcast %cst_5 : f32 to vector<8x256xf32>
    %12 = arith.addf %11, %10 : vector<8x256xf32>
    %cst_6 = arith.constant 1.000000e+00 : f32
    %13 = vector.broadcast %cst_6 : f32 to vector<8x256xf32>
    %14 = arith.divf %13, %12 : vector<8x256xf32>
    %15 = arith.mulf %6, %14 : vector<8x256xf32>
    %16 = arith.mulf %15, %7 : vector<8x256xf32>
    %c0_7 = arith.constant 0 : index
    %c0_8 = arith.constant 0 : index
    %17 = vector.load %arg10[%c0_7, %c0_8] : memref<8x128xf32, #tpu.memory_space<vmem>>, vector<8x128xf32>
    %18 = arith.truncf %16 : vector<8x256xf32> to vector<8x256xbf16>
    %c0_9 = arith.constant 0 : index
    %c0_10 = arith.constant 0 : index
    %19 = vector.load %arg7[%c0_9, %c0_10] : memref<256x128xbf16, #tpu.memory_space<vmem>>, vector<256x128xbf16>
    %cst_11 = arith.constant dense<0.000000e+00> : vector<8x128xf32>
    %20 = tpu.matmul %18, %19, %cst_11 {dimension_numbers = #tpu.dot_dimension_numbers<[1], [0], [0], [1], [0, 0, 1, 1], [], []>} : vector<8x256xbf16>, vector<256x128xbf16>, vector<8x128xf32> -> vector<8x128xf32>
    %21 = arith.addf %17, %20 : vector<8x128xf32>
    %c0_12 = arith.constant 0 : index
    %c0_13 = arith.constant 0 : index
    %22 = vector.load %arg10[%c0_12, %c0_13] : memref<8x128xf32, #tpu.memory_space<vmem>>, vector<8x128xf32>
    tpu.vector_store %arg10[%c0_12, %c0_13], %21 {strides = array<i32>} : memref<8x128xf32, #tpu.memory_space<vmem>>, vector<8x128xf32>,
    %c0_i32_14 = arith.constant 0 : i32
    %23 = arith.cmpi eq, %arg2, %c0_i32_14 : i32
    %24 = arith.extui %23 : i1 to i32
    %c0_i32_15 = arith.constant 0 : i32
    %25 = arith.cmpi ne, %24, %c0_i32_15 : i32
    scf.if %25 {
      %c0_16 = arith.constant 0 : index
      %c0_17 = arith.constant 0 : index
      %c0_18 = arith.constant 0 : index
      %26 = vector.load %arg3[%c0_16, %c0_17, %c0_18] : memref<1x8x128xf32, #tpu.memory_space<vmem>>, vector<1x8x128xf32>
      %27 = vector.shape_cast %26 : vector<1x8x128xf32> to vector<8x128xf32>
      %c0_19 = arith.constant 0 : index
      %c0_20 = arith.constant 0 : index
      %c0_21 = arith.constant 0 : index
      %28 = vector.load %arg8[%c0_19, %c0_20, %c0_21] : memref<1x1x128xf32, #tpu.memory_space<vmem>>, vector<1x1x128xf32>
      %29 = vector.shape_cast %28 : vector<1x1x128xf32> to vector<1x128xf32>
      %c0_22 = arith.constant 0 : index
      %c0_23 = arith.constant 0 : index
      %30 = vector.load %arg10[%c0_22, %c0_23] : memref<8x128xf32, #tpu.memory_space<vmem>>, vector<8x128xf32>
      %31 = vector.broadcast %29 : vector<1x128xf32> to vector<8x128xf32>
      %32 = arith.mulf %31, %30 : vector<8x128xf32>
      %33 = arith.addf %27, %32 : vector<8x128xf32>
      %c0_24 = arith.constant 0 : index
      %c0_25 = arith.constant 0 : index
      %c0_26 = arith.constant 0 : index
      %34 = vector.load %arg9[%c0_24, %c0_25, %c0_26] : memref<1x8x128xf32, #tpu.memory_space<vmem>>, vector<1x8x128xf32>
      %35 = vector.shape_cast %34 : vector<1x8x128xf32> to vector<8x128xf32>
      %36 = vector.shape_cast %33 : vector<8x128xf32> to vector<1x8x128xf32>
      tpu.vector_store %arg9[%c0_24, %c0_25, %c0_26], %36 {strides = array<i32>} : memref<1x8x128xf32, #tpu.memory_space<vmem>>, vector<1x8x128xf32>,
    } else {
    }
    return
  }
  func.func @transform_0(%arg0: i32, %arg1: i32, %arg2: i32) -> (i32, i32, i32) {
    %c0_i32 = arith.constant 0 : i32
    %c0_i32_0 = arith.constant 0 : i32
    return %arg0, %arg1, %c0_i32 : i32, i32, i32
  }
  func.func @transform_1(%arg0: i32, %arg1: i32, %arg2: i32) -> (i32, i32, i32) {
    %c0_i32 = arith.constant 0 : i32
    %c0_i32_0 = arith.constant 0 : i32
    %c0_i32_1 = arith.constant 0 : i32
    return %arg0, %c0_i32, %c0_i32_0 : i32, i32, i32
  }
  func.func @transform_2(%arg0: i32, %arg1: i32, %arg2: i32) -> (i32, i32, i32) {
    %c0_i32 = arith.constant 0 : i32
    %c0_i32_0 = arith.constant 0 : i32
    %c0_i32_1 = arith.constant 0 : i32
    return %arg0, %c0_i32, %c0_i32_0 : i32, i32, i32
  }
  func.func @transform_3(%arg0: i32, %arg1: i32, %arg2: i32) -> (i32, i32) {
    %c0_i32 = arith.constant 0 : i32
    %c0_i32_0 = arith.constant 0 : i32
    return %c0_i32, %arg2 : i32, i32
  }
  func.func @transform_4(%arg0: i32, %arg1: i32, %arg2: i32) -> (i32, i32) {
    %c0_i32 = arith.constant 0 : i32
    %c0_i32_0 = arith.constant 0 : i32
    return %arg2, %c0_i32 : i32, i32
  }
  func.func @transform_5(%arg0: i32, %arg1: i32, %arg2: i32) -> (i32, i32, i32) {
    %c0_i32 = arith.constant 0 : i32
    %c0_i32_0 = arith.constant 0 : i32
    %c0_i32_1 = arith.constant 0 : i32
    return %arg0, %c0_i32, %c0_i32_0 : i32, i32, i32
  }
  func.func @transform_6(%arg0: i32, %arg1: i32, %arg2: i32) -> (i32, i32, i32) {
    %c0_i32 = arith.constant 0 : i32
    %c0_i32_0 = arith.constant 0 : i32
    return %arg0, %arg1, %c0_i32 : i32, i32, i32
  }
}

module attributes {stable_mosaic.version = 11 : i64} {
  func.func @_adaln_kernel(%arg0: i32, %arg1: i32, %arg2: memref<2x128xbf16, #tpu.memory_space<vmem>>, %arg3: memref<1x128x256xbf16, #tpu.memory_space<vmem>>, %arg4: memref<1x1x256xf32, #tpu.memory_space<vmem>>, %arg5: memref<1x2x256xf32, #tpu.memory_space<vmem>>) attributes {dimension_semantics = [#tpu.dimension_semantics<parallel>, #tpu.dimension_semantics<arbitrary>], iteration_bounds = array<i64: 1, 1>, scalar_prefetch = 0 : i64, scratch_operands = 0 : i64, tpu.core_type = #tpu.core_type<tc>, window_params = [{pipeline_mode = #tpu.pipeline_mode<synchronous>, transform_indices = @transform_0, window_bounds = array<i64: 2, 128>}, {transform_indices = @transform_1, window_bounds = array<i64: 1, 128, 256>}, {transform_indices = @transform_2, window_bounds = array<i64: 1, 1, 256>}, {transform_indices = @transform_3, window_bounds = array<i64: 1, 2, 256>}]} {
    %c0 = arith.constant 0 : index
    %c0_0 = arith.constant 0 : index
    %0 = vector.load %arg2[%c0, %c0_0] : memref<2x128xbf16, #tpu.memory_space<vmem>>, vector<2x128xbf16>
    %c0_1 = arith.constant 0 : index
    %c0_2 = arith.constant 0 : index
    %c0_3 = arith.constant 0 : index
    %1 = vector.load %arg3[%c0_1, %c0_2, %c0_3] : memref<1x128x256xbf16, #tpu.memory_space<vmem>>, vector<1x128x256xbf16>
    %2 = vector.shape_cast %1 : vector<1x128x256xbf16> to vector<128x256xbf16>
    %cst = arith.constant dense<0.000000e+00> : vector<2x256xf32>
    %3 = tpu.matmul %0, %2, %cst {dimension_numbers = #tpu.dot_dimension_numbers<[1], [0], [0], [1], [0, 0, 1, 1], [], []>} : vector<2x128xbf16>, vector<128x256xbf16>, vector<2x256xf32> -> vector<2x256xf32>
    %c0_4 = arith.constant 0 : index
    %c0_5 = arith.constant 0 : index
    %c0_6 = arith.constant 0 : index
    %4 = vector.load %arg4[%c0_4, %c0_5, %c0_6] : memref<1x1x256xf32, #tpu.memory_space<vmem>>, vector<1x1x256xf32>
    %5 = vector.shape_cast %4 : vector<1x1x256xf32> to vector<1x256xf32>
    %6 = vector.broadcast %5 : vector<1x256xf32> to vector<2x256xf32>
    %7 = arith.addf %3, %6 : vector<2x256xf32>
    %c0_7 = arith.constant 0 : index
    %c0_8 = arith.constant 0 : index
    %c0_9 = arith.constant 0 : index
    %8 = vector.load %arg5[%c0_7, %c0_8, %c0_9] : memref<1x2x256xf32, #tpu.memory_space<vmem>>, vector<1x2x256xf32>
    %9 = vector.shape_cast %8 : vector<1x2x256xf32> to vector<2x256xf32>
    %10 = vector.shape_cast %7 : vector<2x256xf32> to vector<1x2x256xf32>
    tpu.vector_store %arg5[%c0_7, %c0_8, %c0_9], %10 {strides = array<i32>} : memref<1x2x256xf32, #tpu.memory_space<vmem>>, vector<1x2x256xf32>,
    return
  }
  func.func @transform_0(%arg0: i32, %arg1: i32) -> (i32, i32) {
    %c0_i32 = arith.constant 0 : i32
    %c0_i32_0 = arith.constant 0 : i32
    %c0_i32_1 = arith.constant 0 : i32
    return %c0_i32, %c0_i32_0 : i32, i32
  }
  func.func @transform_1(%arg0: i32, %arg1: i32) -> (i32, i32, i32) {
    %c0_i32 = arith.constant 0 : i32
    %c0_i32_0 = arith.constant 0 : i32
    return %arg0, %c0_i32, %arg1 : i32, i32, i32
  }
  func.func @transform_2(%arg0: i32, %arg1: i32) -> (i32, i32, i32) {
    %c0_i32 = arith.constant 0 : i32
    %c0_i32_0 = arith.constant 0 : i32
    return %arg0, %c0_i32, %arg1 : i32, i32, i32
  }
  func.func @transform_3(%arg0: i32, %arg1: i32) -> (i32, i32, i32) {
    %c0_i32 = arith.constant 0 : i32
    %c0_i32_0 = arith.constant 0 : i32
    return %arg0, %c0_i32, %arg1 : i32, i32, i32
  }
}

module attributes {stable_mosaic.version = 11 : i64} {
  func.func @_final_norm_kernel(%arg0: i32, %arg1: i32, %arg2: memref<1x8x128xf32, #tpu.memory_space<vmem>>, %arg3: memref<1x1x128xf32, #tpu.memory_space<vmem>>, %arg4: memref<1x1x128xf32, #tpu.memory_space<vmem>>, %arg5: memref<1x8x128xf32, #tpu.memory_space<vmem>>) attributes {dimension_semantics = [#tpu.dimension_semantics<parallel>, #tpu.dimension_semantics<parallel>], iteration_bounds = array<i64: 2, 1>, scalar_prefetch = 0 : i64, scratch_operands = 0 : i64, tpu.core_type = #tpu.core_type<tc>, window_params = [{transform_indices = @transform_0, window_bounds = array<i64: 1, 8, 128>}, {transform_indices = @transform_1, window_bounds = array<i64: 1, 1, 128>}, {transform_indices = @transform_2, window_bounds = array<i64: 1, 1, 128>}, {transform_indices = @transform_3, window_bounds = array<i64: 1, 8, 128>}]} {
    %c0 = arith.constant 0 : index
    %c0_0 = arith.constant 0 : index
    %c0_1 = arith.constant 0 : index
    %0 = vector.load %arg2[%c0, %c0_0, %c0_1] : memref<1x8x128xf32, #tpu.memory_space<vmem>>, vector<1x8x128xf32>
    %1 = vector.shape_cast %0 : vector<1x8x128xf32> to vector<8x128xf32>
    %2 = arith.mulf %1, %1 : vector<8x128xf32>
    %cst = arith.constant dense<0.000000e+00> : vector<8xf32>
    %3 = vector.multi_reduction <add>, %2, %cst [1] : vector<8x128xf32> to vector<8xf32>
    %4 = vector.shape_cast %3 : vector<8xf32> to vector<8x1xf32>
    %cst_2 = arith.constant 1.280000e+02 : f32
    %5 = vector.broadcast %cst_2 : f32 to vector<8x1xf32>
    %6 = arith.divf %4, %5 : vector<8x1xf32>
    %cst_3 = arith.constant 9.99999974E-6 : f32
    %7 = vector.broadcast %cst_3 : f32 to vector<8x1xf32>
    %8 = arith.addf %6, %7 : vector<8x1xf32>
    %9 = math.rsqrt %8 : vector<8x1xf32>
    %10 = vector.broadcast %9 : vector<8x1xf32> to vector<8x128xf32>
    %11 = arith.mulf %1, %10 : vector<8x128xf32>
    %c0_4 = arith.constant 0 : index
    %c0_5 = arith.constant 0 : index
    %c0_6 = arith.constant 0 : index
    %12 = vector.load %arg3[%c0_4, %c0_5, %c0_6] : memref<1x1x128xf32, #tpu.memory_space<vmem>>, vector<1x1x128xf32>
    %13 = vector.shape_cast %12 : vector<1x1x128xf32> to vector<1x128xf32>
    %14 = vector.broadcast %13 : vector<1x128xf32> to vector<8x128xf32>
    %15 = arith.mulf %11, %14 : vector<8x128xf32>
    %c0_7 = arith.constant 0 : index
    %c0_8 = arith.constant 0 : index
    %c0_9 = arith.constant 0 : index
    %16 = vector.load %arg4[%c0_7, %c0_8, %c0_9] : memref<1x1x128xf32, #tpu.memory_space<vmem>>, vector<1x1x128xf32>
    %17 = vector.shape_cast %16 : vector<1x1x128xf32> to vector<1x128xf32>
    %18 = vector.broadcast %17 : vector<1x128xf32> to vector<8x128xf32>
    %19 = arith.addf %15, %18 : vector<8x128xf32>
    %c0_10 = arith.constant 0 : index
    %c0_11 = arith.constant 0 : index
    %c0_12 = arith.constant 0 : index
    %20 = vector.load %arg5[%c0_10, %c0_11, %c0_12] : memref<1x8x128xf32, #tpu.memory_space<vmem>>, vector<1x8x128xf32>
    %21 = vector.shape_cast %20 : vector<1x8x128xf32> to vector<8x128xf32>
    %22 = vector.shape_cast %19 : vector<8x128xf32> to vector<1x8x128xf32>
    tpu.vector_store %arg5[%c0_10, %c0_11, %c0_12], %22 {strides = array<i32>} : memref<1x8x128xf32, #tpu.memory_space<vmem>>, vector<1x8x128xf32>,
    return
  }
  func.func @transform_0(%arg0: i32, %arg1: i32) -> (i32, i32, i32) {
    %c0_i32 = arith.constant 0 : i32
    %c0_i32_0 = arith.constant 0 : i32
    return %arg0, %arg1, %c0_i32 : i32, i32, i32
  }
  func.func @transform_1(%arg0: i32, %arg1: i32) -> (i32, i32, i32) {
    %c0_i32 = arith.constant 0 : i32
    %c0_i32_0 = arith.constant 0 : i32
    %c0_i32_1 = arith.constant 0 : i32
    return %arg0, %c0_i32, %c0_i32_0 : i32, i32, i32
  }
  func.func @transform_2(%arg0: i32, %arg1: i32) -> (i32, i32, i32) {
    %c0_i32 = arith.constant 0 : i32
    %c0_i32_0 = arith.constant 0 : i32
    %c0_i32_1 = arith.constant 0 : i32
    return %arg0, %c0_i32, %c0_i32_0 : i32, i32, i32
  }
  func.func @transform_3(%arg0: i32, %arg1: i32) -> (i32, i32, i32) {
    %c0_i32 = arith.constant 0 : i32
    %c0_i32_0 = arith.constant 0 : i32
    return %arg0, %arg1, %c0_i32 : i32, i32, i32
  }
}

</mosaic_0001>

<llo_original>
// kernel: tile.15
$region0: #{tile.15}
  #allocation0 [shape = 's32[1]{0}', space=sflag, size = 0x4, scoped, tag = 'scoped memory for tile.15']
  %s0 = inlined_call_operand.vmem [shape: f32[2], index: 0, kind: input, shape index: {}]
  %s1 = inlined_call_operand.vmem [shape: f32[16,2], index: 1, kind: output, shape index: {}]
  // Predicated region
  $region2: #{tile.15} parent=0 // pred_check
    _
  $region3: #{tile.15} parent=0 // pred_check_branch
    %3 = sbr.rel (0) target = $region5
  $region4: #{tile.15} parent=0 // pred_region
    _
  $region5: #{tile.15} parent=0 // pred_fallthru
    _
  %v4 = vld [vmem:[%s0] ss:$0 sm:$0xff]
  %5 = vst [vmem:[%s1] sm:$0xff] %v4
  %s6 = scalar_lea.vmem %s1, 8
  %7 = vst [vmem:[%s6] sm:$0xff] %v4

// kernel: run.11
$region0: #{run.11}
  #allocation0 [shape = 'u32[]', space=smem, size = 0x4, offset = 0x4, fixed_abs, tag = 'smem constant byte address 0x4 - core index']
  #allocation1 [shape = 'u32[144,128]{1,0:T(1,128)}', space=vmem, size = 0x12000, scoped, tag = 'internal scratch']
  %s0 = inlined_call_operand.vmem [shape: bf16[2,128], index: 0, kind: input, shape index: {}]
  %s1 = inlined_call_operand.hbm [shape: bf16[2,128,768], index: 1, kind: input, shape index: {}]
  %s2 = inlined_call_operand.vmem [shape: f32[2,1,768], index: 2, kind: input, shape index: {}]
  %s3 = inlined_call_operand.vmem [shape: f32[2,2,768], index: 3, kind: output, shape index: {}]
  %s4 = sld [smem:[#allocation0]]
  $region49: #{run.11} parent=0
    _
  %s6 = ssub.s32 1, %s4
  %s7 = scalar_select 0, %s6, %s4
  $region1: #{run.11} parent=0
    #allocation2 [shape = 'u8[196608]{0}', space=vmem, size = 0x30000, scoped, tag = 'input window, operand 1']
    #allocation3 [shape = 's32[2]{0}', space=sflag, size = 0x8, scoped, tag = 'scoped memory for run.11']
    %8 = vsyncpa [#allocation3], 0
    %s9 = scalar_lea.sflag [#allocation3], 1
    %10 = vsyncpa %s9, 0
    loop: start=0, step=1, limit=6
    $region2: #{run.11} parent=1 // loop_pre_header
      _
    $region3: #{run.11} parent=1 // loop_header
      %s12 = sphi 0, %s16
      %p13 = scmp.ge.s32.totalorder %s12, 6
      %s19 = sphi 0, %s31
      %s20 = sphi 0, %s27
      %s21 = sphi 0, %s19
      %s22 = sphi 0, %s20
      %s23 = sphi 0, %s21
      %s24 = sphi 0, %s22
      %s32 = sphi 0, %s32
      %s34 = sphi 0, %s32
      %s35 = sphi 0, %s34
      %s49 = sphi 0, %s35
      %s57 = sphi 0, %s59
      %s60 = sphi 0, %s57
      %s61 = sphi 0, %s60
      %s77 = sphi 0, %s61
      %s85 = sphi 0, %s87
      %s88 = sphi 0, %s85
      %s89 = sphi 0, %s88
      %s105 = sphi 0, %s89
      %s113 = sphi 0, %s115
      %s116 = sphi 0, %s113
      %s117 = sphi 0, %s116
      %s133 = sphi 0, %s117
    $region4: #{run.11} parent=1 // loop_header_branch
      %15 = sbr.rel (%p13) target = $region8
    $region5: #{run.11} parent=1 // loop_body
      %s17 = ssub.s32 %s12, 1
      %s18 = ssub.s32 %s12, 2
      %s25 = sadd.s32 1, %s20
      %p26 = scmp.ge.s32.totalorder %s25, 2
      %s27 = scalar_select %p26, 0, %s25
      %s28 = sadd.s32 1, %s19
      %s29 = scalar_select %p26, %s28, %s19
      %p30 = scmp.ge.s32.totalorder %s29, 2
      %s31 = scalar_select %p30, 0, %s29
      %s33 = sadd.s32 %s32, 1
      %p36 = scmp.eq.s32.totalorder %s12, 3
      %p37 = scmp.ne.s32.totalorder %s32, %s34
      %p38 = scmp.eq.s32.totalorder %s12, 0
      %p39 = por %p37, %p38
      %p40 = scmp.ne.s32.totalorder %s32, %s34
      %p41 = scmp.eq.s32.totalorder %s17, 3
      %p42 = por %p40, %p41
      %p43 = scmp.ne.s32.totalorder %s34, %s35
      %p44 = scmp.eq.s32.totalorder %s17, 0
      %p45 = por %p43, %p44
      %p46 = scmp.ne.s32.totalorder %s34, %s35
      %p47 = scmp.eq.s32.totalorder %s18, 3
      %p48 = por %p46, %p47
      %p50 = scmp.ne.s32.totalorder %s35, %s49
      %p51 = scmp.eq.s32.totalorder %s18, 0
      %p52 = por %p50, %p51
      %s53 = ssub.s32 %s19, %s31
      %s54 = ssub.s32 %s20, %s27
      %s55 = sor.u32 %s53, %s54
      %p56 = scmp.eq.s32.totalorder %s55, 0
      %s58 = sadd.s32 %s57, 1
      %s59 = scalar_select %p56, %s57, %s58
      %p62 = pneg %p56
      %p63 = scmp.eq.s32.totalorder %s12, 3
      %p64 = por %p62, %p63
      %p65 = scmp.ne.s32.totalorder %s57, %s60
      %p66 = scmp.eq.s32.totalorder %s12, 0
      %p67 = por %p65, %p66
      %p68 = scmp.ne.s32.totalorder %s57, %s60
      %p69 = scmp.eq.s32.totalorder %s17, 3
      %p70 = por %p68, %p69
      %p71 = scmp.ne.s32.totalorder %s60, %s61
      %p72 = scmp.eq.s32.totalorder %s17, 0
      %p73 = por %p71, %p72
      %p74 = scmp.ne.s32.totalorder %s60, %s61
      %p75 = scmp.eq.s32.totalorder %s18, 3
      %p76 = por %p74, %p75
      %p78 = scmp.ne.s32.totalorder %s61, %s77
      %p79 = scmp.eq.s32.totalorder %s18, 0
      %p80 = por %p78, %p79
      %s81 = ssub.s32 %s19, %s31
      %s82 = ssub.s32 %s20, %s27
      %s83 = sor.u32 %s81, %s82
      %p84 = scmp.eq.s32.totalorder %s83, 0
      %s86 = sadd.s32 %s85, 1
      %s87 = scalar_select %p84, %s85, %s86
      %p90 = pneg %p84
      %p91 = scmp.eq.s32.totalorder %s12, 3
      %p92 = por %p90, %p91
      %p93 = scmp.ne.s32.totalorder %s85, %s88
      %p94 = scmp.eq.s32.totalorder %s12, 0
      %p95 = por %p93, %p94
      %p96 = scmp.ne.s32.totalorder %s85, %s88
      %p97 = scmp.eq.s32.totalorder %s17, 3
      %p98 = por %p96, %p97
      %p99 = scmp.ne.s32.totalorder %s88, %s89
      %p100 = scmp.eq.s32.totalorder %s17, 0
      %p101 = por %p99, %p100
      %p102 = scmp.ne.s32.totalorder %s88, %s89
      %p103 = scmp.eq.s32.totalorder %s18, 3
      %p104 = por %p102, %p103
      %p106 = scmp.ne.s32.totalorder %s89, %s105
      %p107 = scmp.eq.s32.totalorder %s18, 0
      %p108 = por %p106, %p107
      %s109 = ssub.s32 %s19, %s31
      %s110 = ssub.s32 %s20, %s27
      %s111 = sor.u32 %s109, %s110
      %p112 = scmp.eq.s32.totalorder %s111, 0
      %s114 = sadd.s32 %s113, 1
      %s115 = scalar_select %p112, %s113, %s114
      %p118 = pneg %p112
      %p119 = scmp.eq.s32.totalorder %s12, 3
      %p120 = por %p118, %p119
      %p121 = scmp.ne.s32.totalorder %s113, %s116
      %p122 = scmp.eq.s32.totalorder %s12, 0
      %p123 = por %p121, %p122
      %p124 = scmp.ne.s32.totalorder %s113, %s116
      %p125 = scmp.eq.s32.totalorder %s17, 3
      %p126 = por %p124, %p125
      %p127 = scmp.ne.s32.totalorder %s116, %s117
      %p128 = scmp.eq.s32.totalorder %s17, 0
      %p129 = por %p127, %p128
      %p130 = scmp.ne.s32.totalorder %s116, %s117
      %p131 = scmp.eq.s32.totalorder %s18, 3
      %p132 = por %p130, %p131
      %p134 = scmp.ne.s32.totalorder %s117, %s133
      %p135 = scmp.eq.s32.totalorder %s18, 0
      %p136 = por %p134, %p135
      %p137 = scmp.le.s32.totalorder 1, %s12
      %p138 = scmp.lt.s32.totalorder %s12, 5
      %p139 = pnand %p137, %p138
      %p140 = pneg %p139
      // Predicated region
      $region9: #{run.11} parent=5 // pred_check
        _
      $region10: #{run.11} parent=5 // pred_check_branch
        %142 = sbr.rel (%p139) target = $region12
      $region11: #{run.11} parent=5 // pred_region
        %s143 = ssub.s32 %s12, 1
        // Predicated region
        $region13: #{run.11} parent=11 // pred_check
          %p144 = pneg %p45
        $region14: #{run.11} parent=11 // pred_check_branch
          %146 = sbr.rel (%p144) target = $region16
        $region15: #{run.11} parent=11 // pred_region
          _
        $region16: #{run.11} parent=11 // pred_fallthru
          _
      $region12: #{run.11} parent=5 // pred_fallthru
        _
      %p147 = scmp.lt.s32.totalorder %s12, 4
      // Predicated region
      $region17: #{run.11} parent=5 // pred_check
        %p148 = pneg %p147
      $region18: #{run.11} parent=5 // pred_check_branch
        %150 = sbr.rel (%p148) target = $region20
      $region19: #{run.11} parent=5 // pred_region
        // Predicated region
        $region21: #{run.11} parent=19 // pred_check
          %p151 = pneg %p67
        $region22: #{run.11} parent=19 // pred_check_branch
          %153 = sbr.rel (%p151) target = $region24
        $region23: #{run.11} parent=19 // pred_region
          %s154 = sand.u32 %s57, 1
          %s155 = scalar_lea.sflag [#allocation3], %s154
          %s156 = sand.u32 %s57, 1
          %s157 = smul.addr %s156, 192
          %s158 = scalar_lea.vmem [#allocation2], %s157
          %s159 = smul.u32 3, %s20
          %s161 = ssub.s32 3072, 3072
          %162 = vsyncadd %s155, %s161
          %s163 = smul.addr %s19, 96
          %s164 = sadd.s32 %s159, %s163
          %s165 = smul.addr %s164, 64
          %s166 = scalar_lea.hbm %s1, %s165
          %s167 = sshll.u32 %s158, 4
          %s168 = int_to_ptr.vmem [resolvable:$true] %s167
          %173 = dma.hbm_to_vmem [thread:$0]  %s166, 3072, %s168, %s155, 384, 192, 12
        $region24: #{run.11} parent=19 // pred_fallthru
          _
        // Predicated region
        $region25: #{run.11} parent=19 // pred_check
          %p174 = pneg %p95
        $region26: #{run.11} parent=19 // pred_check_branch
          %176 = sbr.rel (%p174) target = $region28
        $region27: #{run.11} parent=19 // pred_region
          %s177 = smul.u32 3, %s20
          %p178 = scmp.lt.s32.totalorder %s19, 1
          %s179 = scalar_select %p178, %s19, 1
          %p180 = scmp.lt.s32.totalorder %s177, 5
          %s181 = scalar_select %p180, %s177, 5
          %s182 = smul.addr %s179, 6
          %s183 = sadd.s32 %s181, %s182
          %s184 = scalar_lea.vmem %s2, %s183
          %s185 = smul.u32 3, %s20
        $region28: #{run.11} parent=19 // pred_fallthru
          _
      $region20: #{run.11} parent=5 // pred_fallthru
        _
      %p186 = scmp.le.s32.totalorder 1, %s12
      %p187 = scmp.lt.s32.totalorder %s12, 5
      %p188 = pnand %p186, %p187
      %p189 = pneg %p188
      // Predicated region
      $region29: #{run.11} parent=5 // pred_check
        _
      $region30: #{run.11} parent=5 // pred_check_branch
        %191 = sbr.rel (%p188) target = $region32
      $region31: #{run.11} parent=5 // pred_region
        %s192 = ssub.s32 %s12, 1
        %s193 = sand.u32 %s60, 1
        %s194 = scalar_lea.sflag [#allocation3], %s193
        %s195 = sand.u32 %s60, 1
        %s196 = smul.addr %s195, 192
        %s197 = scalar_lea.vmem [#allocation2], %s196
        // Predicated region
        $region33: #{run.11} parent=31 // pred_check
          %p198 = pneg %p73
        $region34: #{run.11} parent=31 // pred_check_branch
          %200 = sbr.rel (%p198) target = $region36
        $region35: #{run.11} parent=31 // pred_region
          %201 = dma.done %s194, 3072
        $region36: #{run.11} parent=31 // pred_fallthru
          _
        %p202 = pneg %p45
        %p203 = pneg %p42
        %s204 = sand.u32 %s60, 1
        %s205 = scalar_lea.sflag [#allocation3], %s204
        %s206 = sand.u32 %s60, 1
        %s207 = smul.addr %s206, 192
        %s208 = scalar_lea.vmem [#allocation2], %s207
        %p209 = pneg %p73
        %p210 = pneg %p70
        %s211 = smul.u32 3, %s22
        %p212 = scmp.lt.s32.totalorder %s21, 1
        %s213 = scalar_select %p212, %s21, 1
        %p214 = scmp.lt.s32.totalorder %s211, 5
        %s215 = scalar_select %p214, %s211, 5
        %s216 = smul.addr %s213, 6
        %s217 = sadd.s32 %s215, %s216
        %s218 = scalar_lea.vmem %s2, %s217
        %p219 = pneg %p101
        %p220 = pneg %p98
        %p221 = pneg %p129
        %p222 = pneg %p126
        %s223 = smul.u32 3, %s22
        %p224 = scmp.lt.s32.totalorder %s21, 1
        %s225 = scalar_select %p224, %s21, 1
        %p226 = scmp.lt.s32.totalorder %s223, 5
        %s227 = scalar_select %p226, %s223, 5
        %s228 = smul.addr %s225, 6
        %s229 = sadd.s32 %s227, %s228
        %s230 = smul.addr %s229, 2
        %s231 = scalar_lea.vmem %s3, %s230
        %s232 = smul.u32 3, %s22
        %s233 = smul.u32 3, %s22
        %p234 = scmp.lt.s32.totalorder %s21, 1
        %s235 = scalar_select %p234, %s21, 1
        %p236 = scmp.lt.s32.totalorder %s233, 5
        %s237 = scalar_select %p236, %s233, 5
        %s238 = smul.addr %s235, 6
        %s239 = sadd.s32 %s237, %s238
        %s240 = scalar_lea.vmem %s2, %s239
        %s241 = smul.u32 3, %s22
        %s242 = smul.u32 3, %s22
        %p243 = scmp.lt.s32.totalorder %s21, 1
        %s244 = scalar_select %p243, %s21, 1
        %p245 = scmp.lt.s32.totalorder %s242, 5
        %s246 = scalar_select %p245, %s242, 5
        %s247 = smul.addr %s244, 6
        %s248 = sadd.s32 %s246, %s247
        %s249 = smul.addr %s248, 2
        %s250 = scalar_lea.vmem %s3, %s249
        %s251 = smul.u32 3, %s22
        %v253 = vld [vmem:[%s0] sm:$0x1]
        %v254 = vld [vmem:[%s197] sm:$0xff]
        %v255 = vld [vmem:[%s197 + $0x8] sm:$0xf]
        %v256 = vld [vmem:[%s197 + $0xc] sm:$0xff]
        %v257 = vld [vmem:[%s197 + $0x14] sm:$0xf]
        %v258 = vld [vmem:[%s197 + $0x18] sm:$0xff]
        %v259 = vld [vmem:[%s197 + $0x20] sm:$0xf]
        %v260 = vld [vmem:[%s197 + $0x24] sm:$0xff]
        %v261 = vld [vmem:[%s197 + $0x2c] sm:$0xf]
        %v262 = vld [vmem:[%s197 + $0x30] sm:$0xff]
        %v263 = vld [vmem:[%s197 + $0x38] sm:$0xf]
        %v264 = vld [vmem:[%s197 + $0x3c] sm:$0xff]
        %v265 = vld [vmem:[%s197 + $0x44] sm:$0xf]
        %v266 = vld [vmem:[%s197 + $0x48] sm:$0xff]
        %v267 = vld [vmem:[%s197 + $0x50] sm:$0xf]
        %v268 = vld [vmem:[%s197 + $0x54] sm:$0xff]
        %v269 = vld [vmem:[%s197 + $0x5c] sm:$0xf]
        %v270 = vld [vmem:[%s197 + $0x60] sm:$0xff]
        %v271 = vld [vmem:[%s197 + $0x68] sm:$0xf]
        %v272 = vld [vmem:[%s197 + $0x6c] sm:$0xff]
        %v273 = vld [vmem:[%s197 + $0x74] sm:$0xf]
        %v274 = vld [vmem:[%s197 + $0x78] sm:$0xff]
        %v275 = vld [vmem:[%s197 + $0x80] sm:$0xf]
        %v276 = vld [vmem:[%s197 + $0x84] sm:$0xff]
        %v277 = vld [vmem:[%s197 + $0x8c] sm:$0xf]
        %v278 = vld [vmem:[%s197 + $0x90] sm:$0xff]
        %v279 = vld [vmem:[%s197 + $0x98] sm:$0xf]
        %v280 = vld [vmem:[%s197 + $0x9c] sm:$0xff]
        %v281 = vld [vmem:[%s197 + $0xa4] sm:$0xf]
        %v282 = vld [vmem:[%s197 + $0xa8] sm:$0xff]
        %v283 = vld [vmem:[%s197 + $0xb0] sm:$0xf]
        %v284 = vld [vmem:[%s197 + $0xb4] sm:$0xff]
        %v285 = vld [vmem:[%s197 + $0xbc] sm:$0xf]
        %v286 = vld [vmem:[%s240] sm:$0x7]
        %v288 = vlaneseq
        %v289 = vshrl.u32 %v288, 7
        %v290 = vsub.s32 0, %v289
        %v291 = vrot.slane %v286, %v290
        %v292 = vlaneseq
        %v293 = vshrl.u32 %v292, 7
        %v294 = vsub.s32 1, %v293
        %v295 = vrot.slane %v286, %v294
        %v296 = vlaneseq
        %v297 = vshrl.u32 %v296, 7
        %v298 = vsub.s32 2, %v297
        %v299 = vrot.slane %v286, %v298
        %v335 = vunpack.c.l.b16 %v254
        %v336 = vunpack.c.h.b16 %v254
        %v337 = vunpack.c.l.b16 %v255
        %v338 = vunpack.c.l.b16 %v256
        %v339 = vunpack.c.h.b16 %v256
        %v340 = vunpack.c.l.b16 %v257
        %v341 = vunpack.c.l.b16 %v258
        %v342 = vunpack.c.h.b16 %v258
        %v343 = vunpack.c.l.b16 %v259
        %v344 = vunpack.c.l.b16 %v260
        %v345 = vunpack.c.h.b16 %v260
        %v346 = vunpack.c.l.b16 %v261
        %v347 = vunpack.c.l.b16 %v262
        %v348 = vunpack.c.h.b16 %v262
        %v349 = vunpack.c.l.b16 %v263
        %v350 = vunpack.c.l.b16 %v264
        %v351 = vunpack.c.h.b16 %v264
        %v352 = vunpack.c.l.b16 %v265
        %v353 = vunpack.c.l.b16 %v266
        %v354 = vunpack.c.h.b16 %v266
        %v355 = vunpack.c.l.b16 %v267
        %v356 = vunpack.c.l.b16 %v268
        %v357 = vunpack.c.h.b16 %v268
        %v358 = vunpack.c.l.b16 %v269
        %v359 = vunpack.c.l.b16 %v270
        %v360 = vunpack.c.h.b16 %v270
        %v361 = vunpack.c.l.b16 %v271
        %v362 = vunpack.c.l.b16 %v272
        %v363 = vunpack.c.h.b16 %v272
        %v364 = vunpack.c.l.b16 %v273
        %v365 = vunpack.c.l.b16 %v274
        %v366 = vunpack.c.h.b16 %v274
        %v367 = vunpack.c.l.b16 %v275
        %v368 = vunpack.c.l.b16 %v276
        %v369 = vunpack.c.h.b16 %v276
        %v370 = vunpack.c.l.b16 %v277
        %v371 = vunpack.c.l.b16 %v278
        %v372 = vunpack.c.h.b16 %v278
        %v373 = vunpack.c.l.b16 %v279
        %v374 = vunpack.c.l.b16 %v280
        %v375 = vunpack.c.h.b16 %v280
        %v376 = vunpack.c.l.b16 %v281
        %v377 = vunpack.c.l.b16 %v282
        %v378 = vunpack.c.h.b16 %v282
        %v379 = vunpack.c.l.b16 %v283
        %v380 = vunpack.c.l.b16 %v284
        %v381 = vunpack.c.h.b16 %v284
        %v382 = vunpack.c.l.b16 %v285
        %v383 = vpack.c.b16 %v338, %v335
        %v384 = vpack.c.b16 %v339, %v336
        %v385 = vpack.c.b16 %v340, %v337
        %v386 = vpack.c.b16 %v344, %v341
        %v387 = vpack.c.b16 %v345, %v342
        %v388 = vpack.c.b16 %v346, %v343
        %v389 = vpack.c.b16 %v350, %v347
        %v390 = vpack.c.b16 %v351, %v348
        %v391 = vpack.c.b16 %v352, %v349
        %v392 = vpack.c.b16 %v356, %v353
        %v393 = vpack.c.b16 %v357, %v354
        %v394 = vpack.c.b16 %v358, %v355
        %v395 = vpack.c.b16 %v362, %v359
        %v396 = vpack.c.b16 %v363, %v360
        %v397 = vpack.c.b16 %v364, %v361
        %v398 = vpack.c.b16 %v368, %v365
        %v399 = vpack.c.b16 %v369, %v366
        %v400 = vpack.c.b16 %v370, %v367
        %v401 = vpack.c.b16 %v374, %v371
        %v402 = vpack.c.b16 %v375, %v372
        %v403 = vpack.c.b16 %v376, %v373
        %v404 = vpack.c.b16 %v380, %v377
        %v405 = vpack.c.b16 %v381, %v378
        %v406 = vpack.c.b16 %v382, %v379
        %431 = vmatprep.subr.bf16.mxu0 %v384
        %432 = vmatpush1.bf16.msra.mxu0 %v383
        %433 = vmatprep.subr.bf16.mxu0 %v387
        %434 = vmatpush1.bf16.msra.mxu0 %v386
        %435 = vmatprep.subr.bf16.mxu0 %v390
        %436 = vmatpush1.bf16.msra.mxu0 %v389
        %437 = vmatprep.subr.bf16.mxu0 %v393
        %438 = vmatpush1.bf16.msra.mxu0 %v392
        %439 = vmatprep.subr.bf16.mxu0 %v396
        %440 = vmatpush1.bf16.msra.mxu0 %v395
        %441 = vmatprep.subr.bf16.mxu0 %v399
        %442 = vmatpush1.bf16.msra.mxu0 %v398
        %443 = vmatprep.subr.bf16.mxu0 %v402
        %444 = vmatpush1.bf16.msra.mxu0 %v401
        %445 = vmatprep.subr.bf16.mxu0 %v405
        %446 = vmatpush1.bf16.msra.mxu0 %v404
        %447 = vmatprep.subr.bf16.mxu0 0
        %448 = vmatpush1.bf16.msra.mxu0 0
        %449 = vmatprep.subr.bf16.mxu0 0
        %450 = vmatpush1.bf16.msra.mxu0 0
        %451 = vmatprep.subr.bf16.mxu0 0
        %452 = vmatpush1.bf16.msra.mxu0 0
        %453 = vmatprep.subr.bf16.mxu0 0
        %454 = vmatpush1.bf16.msra.mxu0 0
        %455 = vmatprep.subr.bf16.mxu0 0
        %456 = vmatpush1.bf16.msra.mxu0 0
        %457 = vmatprep.subr.bf16.mxu0 0
        %458 = vmatpush1.bf16.msra.mxu0 0
        %459 = vmatprep.subr.bf16.mxu0 0
        %460 = vmatpush1.bf16.msra.mxu0 0
        %461 = vmatprep.subr.bf16.mxu0 0
        %462 = vmatpush1.bf16.msra.mxu0 0
        %463 = vmatprep.mubr.bf16.mxu0 0
        %464 = vmatmul.mubr.bf16.gmra.mrb[0].mxu0 %v253
        %v465 = vpop.f32.mrb[0].mxu0
        %v466 = vadd.f32 %v291, %v465
        %v467 = vpop.f32.mrb[0].mxu0
        %v468 = vadd.f32 %v295, %v467
        %v469 = vpop.f32.mrb[0].mxu0
        %v470 = vpop.f32.mrb[0].mxu0
        %471 = vdwg.mxu0
        %472 = vmatprep.subr.bf16.mxu0 0
        %473 = vmatpush1.bf16.msra.mxu0 %v385
        %474 = vmatprep.subr.bf16.mxu0 0
        %475 = vmatpush1.bf16.msra.mxu0 %v388
        %476 = vmatprep.subr.bf16.mxu0 0
        %477 = vmatpush1.bf16.msra.mxu0 %v391
        %478 = vmatprep.subr.bf16.mxu0 0
        %479 = vmatpush1.bf16.msra.mxu0 %v394
        %480 = vmatprep.subr.bf16.mxu0 0
        %481 = vmatpush1.bf16.msra.mxu0 %v397
        %482 = vmatprep.subr.bf16.mxu0 0
        %483 = vmatpush1.bf16.msra.mxu0 %v400
        %484 = vmatprep.subr.bf16.mxu0 0
        %485 = vmatpush1.bf16.msra.mxu0 %v403
        %486 = vmatprep.subr.bf16.mxu0 0
        %487 = vmatpush1.bf16.msra.mxu0 %v406
        %488 = vmatprep.subr.bf16.mxu0 0
        %489 = vmatpush1.bf16.msra.mxu0 0
        %490 = vmatprep.subr.bf16.mxu0 0
        %491 = vmatpush1.bf16.msra.mxu0 0
        %492 = vmatprep.subr.bf16.mxu0 0
        %493 = vmatpush1.bf16.msra.mxu0 0
        %494 = vmatprep.subr.bf16.mxu0 0
        %495 = vmatpush1.bf16.msra.mxu0 0
        %496 = vmatprep.subr.bf16.mxu0 0
        %497 = vmatpush1.bf16.msra.mxu0 0
        %498 = vmatprep.subr.bf16.mxu0 0
        %499 = vmatpush1.bf16.msra.mxu0 0
        %500 = vmatprep.subr.bf16.mxu0 0
        %501 = vmatpush1.bf16.msra.mxu0 0
        %502 = vmatprep.subr.bf16.mxu0 0
        %503 = vmatpush1.bf16.msra.mxu0 0
        %504 = vmatprep.mubr.bf16.mxu0 0
        %505 = vmatmul.mubr.bf16.gmra.mrb[0].mxu0 %v253
        %v506 = vpop.f32.mrb[0].mxu0
        %v507 = vadd.f32 %v299, %v506
        %v508 = vpop.f32.mrb[0].mxu0
        %v509 = vpop.f32.mrb[0].mxu0
        %v510 = vpop.f32.mrb[0].mxu0
        %511 = vdwg.mxu0
        %v515 = vcombine.low %v466, %v468
        %v517 = vunpack.c.l.s4 1983009808
        %v518 = vunpack.c.0.s8 %v517
        %v519 = vlaneseq
        %v520 = vshrl.u32 %v519, 7
        %v521 = vsub.s32 %v518, %v520
        %v522 = vrot.slane %v515, %v521
        %v524 = vunpack.c.l.s4 1983009808
        %v525 = vunpack.c.0.s8 %v524
        %v526 = vlaneseq
        %v527 = vshrl.u32 %v526, 7
        %v528 = vsub.s32 %v525, %v527
        %v529 = vrot.slane %v507, %v528
        %v530 = vcombine.low %v522, %v529
        %532 = vst [vmem:[%s250] sm:$0x3f] %v530
        %s533 = smul.u32 3, %s22
        %p534 = scmp.lt.s32.totalorder %s21, 1
        %s535 = scalar_select %p534, %s21, 1
        %p536 = scmp.lt.s32.totalorder %s533, 5
        %s537 = scalar_select %p536, %s533, 5
        %s538 = smul.addr %s535, 6
        %s539 = sadd.s32 %s537, %s538
        %s540 = smul.addr %s539, 2
        %s541 = scalar_lea.vmem %s3, %s540
        // Predicated region
        $region37: #{run.11} parent=31 // pred_check
          %p542 = pneg %p126
        $region38: #{run.11} parent=31 // pred_check_branch
          %544 = sbr.rel (%p542) target = $region40
        $region39: #{run.11} parent=31 // pred_region
          %s545 = smul.u32 3, %s22
        $region40: #{run.11} parent=31 // pred_fallthru
          _
      $region32: #{run.11} parent=5 // pred_fallthru
        _
      %p546 = scmp.le.s32.totalorder 2, %s12
      // Predicated region
      $region41: #{run.11} parent=5 // pred_check
        %p547 = pneg %p546
      $region42: #{run.11} parent=5 // pred_check_branch
        %549 = sbr.rel (%p547) target = $region44
      $region43: #{run.11} parent=5 // pred_region
        %s550 = ssub.s32 %s12, 2
        // Predicated region
        $region45: #{run.11} parent=43 // pred_check
          %p551 = pneg %p132
        $region46: #{run.11} parent=43 // pred_check_branch
          %553 = sbr.rel (%p551) target = $region48
        $region47: #{run.11} parent=43 // pred_region
          %s554 = smul.u32 3, %s24
          %p555 = scmp.lt.s32.totalorder %s23, 1
          %s556 = scalar_select %p555, %s23, 1
          %p557 = scmp.lt.s32.totalorder %s554, 5
          %s558 = scalar_select %p557, %s554, 5
          %s559 = smul.addr %s556, 6
          %s560 = sadd.s32 %s558, %s559
          %s561 = smul.addr %s560, 2
          %s562 = scalar_lea.vmem %s3, %s561
        $region48: #{run.11} parent=43 // pred_fallthru
          _
      $region44: #{run.11} parent=5 // pred_fallthru
        _
    $region6: #{run.11} parent=1 // loop_footer
      %s16 = sadd.s32 1, %s12
    $region7: #{run.11} parent=1 // loop_footer_branch
      %11 = sbr.rel target = $region3
    $region8: #{run.11} parent=1 // loop_exit
      _
    %563 = vsyncpa [#allocation3], 1
    %s564 = scalar_lea.sflag [#allocation3], 1
    %565 = vsyncpa %s564, 1

// kernel: run.13
$region0: #{run.13}
  #allocation0 [shape = 'u32[]', space=smem, size = 0x4, offset = 0x4, fixed_abs, tag = 'smem constant byte address 0x4 - core index']
  #allocation1 [shape = 'u32[144,128]{1,0:T(1,128)}', space=vmem, size = 0x12000, scoped, tag = 'internal scratch']
  #allocation2 [shape = 'bf16[8,128]{1,0:T(8,128)(2,1)}', space=vmem, size = 0x800, scoped, tag = 'scratch operand']
  %s0 = inlined_call_operand.vmem [shape: f32[2,8,128], index: 0, kind: input, shape index: {}]
  %s1 = inlined_call_operand.vmem [shape: f32[2,1,128], index: 1, kind: input, shape index: {}]
  %s2 = inlined_call_operand.vmem [shape: f32[2,1,128], index: 2, kind: input, shape index: {}]
  %s3 = inlined_call_operand.vmem [shape: bf16[128,384], index: 3, kind: input, shape index: {}]
  %s4 = inlined_call_operand.vmem [shape: bf16[8,256], index: 4, kind: input, shape index: {}]
  %s5 = inlined_call_operand.vmem [shape: bf16[8,256], index: 5, kind: input, shape index: {}]
  %s6 = inlined_call_operand.vmem [shape: bf16[2,8,384], index: 6, kind: output, shape index: {}]
  %s7 = sld [smem:[#allocation0]]
  $region110: #{run.13} parent=0
    _
  %s9 = ssub.s32 1, %s7
  %s10 = scalar_select 0, %s9, %s7
  $region1: #{run.13} parent=0
    #allocation3 [shape = 'u8[65536]{0}', space=vmem, size = 0x10000, scoped, tag = 'input window, operand 3']
    loop: start=0, step=1, limit=8
    $region2: #{run.13} parent=1 // loop_pre_header
      _
    $region3: #{run.13} parent=1 // loop_header
      %s12 = sphi 0, %s16
      %p13 = scmp.ge.s32.totalorder %s12, 8
      %s19 = sphi 0, %s38
      %s20 = sphi 0, %s34
      %s21 = sphi 0, %s30
      %s22 = sphi 0, %s19
      %s23 = sphi 0, %s20
      %s24 = sphi 0, %s21
      %s25 = sphi 0, %s22
      %s26 = sphi 0, %s23
      %s27 = sphi 0, %s24
      %s43 = sphi 0, %s45
      %s46 = sphi 0, %s43
      %s47 = sphi 0, %s46
      %s63 = sphi 0, %s47
      %s69 = sphi 0, %s71
      %s72 = sphi 0, %s69
      %s73 = sphi 0, %s72
      %s89 = sphi 0, %s73
      %s95 = sphi 0, %s97
      %s98 = sphi 0, %s95
      %s99 = sphi 0, %s98
      %s115 = sphi 0, %s99
      %s121 = sphi 0, %s123
      %s124 = sphi 0, %s121
      %s125 = sphi 0, %s124
      %s141 = sphi 0, %s125
      %s153 = sphi 0, %s155
      %s156 = sphi 0, %s153
      %s157 = sphi 0, %s156
      %s173 = sphi 0, %s157
      %s185 = sphi 0, %s187
      %s188 = sphi 0, %s185
      %s189 = sphi 0, %s188
      %s205 = sphi 0, %s189
      %s215 = sphi 0, %s217
      %s218 = sphi 0, %s215
      %s219 = sphi 0, %s218
      %s235 = sphi 0, %s219
    $region4: #{run.13} parent=1 // loop_header_branch
      %15 = sbr.rel (%p13) target = $region8
    $region5: #{run.13} parent=1 // loop_body
      %s17 = ssub.s32 %s12, 1
      %s18 = ssub.s32 %s12, 2
      %s28 = sadd.s32 1, %s21
      %p29 = scmp.ge.s32.totalorder %s28, 3
      %s30 = scalar_select %p29, 0, %s28
      %s31 = sadd.s32 1, %s20
      %s32 = scalar_select %p29, %s31, %s20
      %p33 = scmp.ge.s32.totalorder %s32, 1
      %s34 = scalar_select %p33, 0, %s32
      %s35 = sadd.s32 1, %s19
      %s36 = scalar_select %p33, %s35, %s19
      %p37 = scmp.ge.s32.totalorder %s36, 2
      %s38 = scalar_select %p37, 0, %s36
      %s39 = ssub.s32 %s19, %s38
      %s40 = ssub.s32 %s20, %s34
      %s41 = sor.u32 %s39, %s40
      %p42 = scmp.eq.s32.totalorder %s41, 0
      %s44 = sadd.s32 %s43, 1
      %s45 = scalar_select %p42, %s43, %s44
      %p48 = pneg %p42
      %p49 = scmp.eq.s32.totalorder %s12, 5
      %p50 = por %p48, %p49
      %p51 = scmp.ne.s32.totalorder %s43, %s46
      %p52 = scmp.eq.s32.totalorder %s12, 0
      %p53 = por %p51, %p52
      %p54 = scmp.ne.s32.totalorder %s43, %s46
      %p55 = scmp.eq.s32.totalorder %s17, 5
      %p56 = por %p54, %p55
      %p57 = scmp.ne.s32.totalorder %s46, %s47
      %p58 = scmp.eq.s32.totalorder %s17, 0
      %p59 = por %p57, %p58
      %p60 = scmp.ne.s32.totalorder %s46, %s47
      %p61 = scmp.eq.s32.totalorder %s18, 5
      %p62 = por %p60, %p61
      %p64 = scmp.ne.s32.totalorder %s47, %s63
      %p65 = scmp.eq.s32.totalorder %s18, 0
      %p66 = por %p64, %p65
      %s67 = ssub.s32 %s19, %s38
      %p68 = scmp.eq.s32.totalorder %s67, 0
      %s70 = sadd.s32 %s69, 1
      %s71 = scalar_select %p68, %s69, %s70
      %p74 = pneg %p68
      %p75 = scmp.eq.s32.totalorder %s12, 5
      %p76 = por %p74, %p75
      %p77 = scmp.ne.s32.totalorder %s69, %s72
      %p78 = scmp.eq.s32.totalorder %s12, 0
      %p79 = por %p77, %p78
      %p80 = scmp.ne.s32.totalorder %s69, %s72
      %p81 = scmp.eq.s32.totalorder %s17, 5
      %p82 = por %p80, %p81
      %p83 = scmp.ne.s32.totalorder %s72, %s73
      %p84 = scmp.eq.s32.totalorder %s17, 0
      %p85 = por %p83, %p84
      %p86 = scmp.ne.s32.totalorder %s72, %s73
      %p87 = scmp.eq.s32.totalorder %s18, 5
      %p88 = por %p86, %p87
      %p90 = scmp.ne.s32.totalorder %s73, %s89
      %p91 = scmp.eq.s32.totalorder %s18, 0
      %p92 = por %p90, %p91
      %s93 = ssub.s32 %s19, %s38
      %p94 = scmp.eq.s32.totalorder %s93, 0
      %s96 = sadd.s32 %s95, 1
      %s97 = scalar_select %p94, %s95, %s96
      %p100 = pneg %p94
      %p101 = scmp.eq.s32.totalorder %s12, 5
      %p102 = por %p100, %p101
      %p103 = scmp.ne.s32.totalorder %s95, %s98
      %p104 = scmp.eq.s32.totalorder %s12, 0
      %p105 = por %p103, %p104
      %p106 = scmp.ne.s32.totalorder %s95, %s98
      %p107 = scmp.eq.s32.totalorder %s17, 5
      %p108 = por %p106, %p107
      %p109 = scmp.ne.s32.totalorder %s98, %s99
      %p110 = scmp.eq.s32.totalorder %s17, 0
      %p111 = por %p109, %p110
      %p112 = scmp.ne.s32.totalorder %s98, %s99
      %p113 = scmp.eq.s32.totalorder %s18, 5
      %p114 = por %p112, %p113
      %p116 = scmp.ne.s32.totalorder %s99, %s115
      %p117 = scmp.eq.s32.totalorder %s18, 0
      %p118 = por %p116, %p117
      %s119 = ssub.s32 %s21, %s30
      %p120 = scmp.eq.s32.totalorder %s119, 0
      %s122 = sadd.s32 %s121, 1
      %s123 = scalar_select %p120, %s121, %s122
      %p126 = pneg %p120
      %p127 = scmp.eq.s32.totalorder %s12, 5
      %p128 = por %p126, %p127
      %p129 = scmp.ne.s32.totalorder %s121, %s124
      %p130 = scmp.eq.s32.totalorder %s12, 0
      %p131 = por %p129, %p130
      %p132 = scmp.ne.s32.totalorder %s121, %s124
      %p133 = scmp.eq.s32.totalorder %s17, 5
      %p134 = por %p132, %p133
      %p135 = scmp.ne.s32.totalorder %s124, %s125
      %p136 = scmp.eq.s32.totalorder %s17, 0
      %p137 = por %p135, %p136
      %p138 = scmp.ne.s32.totalorder %s124, %s125
      %p139 = scmp.eq.s32.totalorder %s18, 5
      %p140 = por %p138, %p139
      %p142 = scmp.ne.s32.totalorder %s125, %s141
      %p143 = scmp.eq.s32.totalorder %s18, 0
      %p144 = por %p142, %p143
      %p145 = scmp.lt.s32.totalorder %s21, 1
      %s146 = scalar_select %p145, %s21, 1
      %p147 = scmp.lt.s32.totalorder %s30, 1
      %s148 = scalar_select %p147, %s30, 1
      %s149 = ssub.s32 %s20, %s34
      %s150 = ssub.s32 %s146, %s148
      %s151 = sor.u32 %s149, %s150
      %p152 = scmp.eq.s32.totalorder %s151, 0
      %s154 = sadd.s32 %s153, 1
      %s155 = scalar_select %p152, %s153, %s154
      %p158 = pneg %p152
      %p159 = scmp.eq.s32.totalorder %s12, 5
      %p160 = por %p158, %p159
      %p161 = scmp.ne.s32.totalorder %s153, %s156
      %p162 = scmp.eq.s32.totalorder %s12, 0
      %p163 = por %p161, %p162
      %p164 = scmp.ne.s32.totalorder %s153, %s156
      %p165 = scmp.eq.s32.totalorder %s17, 5
      %p166 = por %p164, %p165
      %p167 = scmp.ne.s32.totalorder %s156, %s157
      %p168 = scmp.eq.s32.totalorder %s17, 0
      %p169 = por %p167, %p168
      %p170 = scmp.ne.s32.totalorder %s156, %s157
      %p171 = scmp.eq.s32.totalorder %s18, 5
      %p172 = por %p170, %p171
      %p174 = scmp.ne.s32.totalorder %s157, %s173
      %p175 = scmp.eq.s32.totalorder %s18, 0
      %p176 = por %p174, %p175
      %p177 = scmp.lt.s32.totalorder %s21, 1
      %s178 = scalar_select %p177, %s21, 1
      %p179 = scmp.lt.s32.totalorder %s30, 1
      %s180 = scalar_select %p179, %s30, 1
      %s181 = ssub.s32 %s20, %s34
      %s182 = ssub.s32 %s178, %s180
      %s183 = sor.u32 %s181, %s182
      %p184 = scmp.eq.s32.totalorder %s183, 0
      %s186 = sadd.s32 %s185, 1
      %s187 = scalar_select %p184, %s185, %s186
      %p190 = pneg %p184
      %p191 = scmp.eq.s32.totalorder %s12, 5
      %p192 = por %p190, %p191
      %p193 = scmp.ne.s32.totalorder %s185, %s188
      %p194 = scmp.eq.s32.totalorder %s12, 0
      %p195 = por %p193, %p194
      %p196 = scmp.ne.s32.totalorder %s185, %s188
      %p197 = scmp.eq.s32.totalorder %s17, 5
      %p198 = por %p196, %p197
      %p199 = scmp.ne.s32.totalorder %s188, %s189
      %p200 = scmp.eq.s32.totalorder %s17, 0
      %p201 = por %p199, %p200
      %p202 = scmp.ne.s32.totalorder %s188, %s189
      %p203 = scmp.eq.s32.totalorder %s18, 5
      %p204 = por %p202, %p203
      %p206 = scmp.ne.s32.totalorder %s189, %s205
      %p207 = scmp.eq.s32.totalorder %s18, 0
      %p208 = por %p206, %p207
      %s209 = ssub.s32 %s19, %s38
      %s210 = ssub.s32 %s20, %s34
      %s211 = sor.u32 %s209, %s210
      %s212 = ssub.s32 %s21, %s30
      %s213 = sor.u32 %s211, %s212
      %p214 = scmp.eq.s32.totalorder %s213, 0
      %s216 = sadd.s32 %s215, 1
      %s217 = scalar_select %p214, %s215, %s216
      %p220 = pneg %p214
      %p221 = scmp.eq.s32.totalorder %s12, 5
      %p222 = por %p220, %p221
      %p223 = scmp.ne.s32.totalorder %s215, %s218
      %p224 = scmp.eq.s32.totalorder %s12, 0
      %p225 = por %p223, %p224
      %p226 = scmp.ne.s32.totalorder %s215, %s218
      %p227 = scmp.eq.s32.totalorder %s17, 5
      %p228 = por %p226, %p227
      %p229 = scmp.ne.s32.totalorder %s218, %s219
      %p230 = scmp.eq.s32.totalorder %s17, 0
      %p231 = por %p229, %p230
      %p232 = scmp.ne.s32.totalorder %s218, %s219
      %p233 = scmp.eq.s32.totalorder %s18, 5
      %p234 = por %p232, %p233
      %p236 = scmp.ne.s32.totalorder %s219, %s235
      %p237 = scmp.eq.s32.totalorder %s18, 0
      %p238 = por %p236, %p237
      %p239 = scmp.le.s32.totalorder 1, %s12
      %p240 = scmp.lt.s32.totalorder %s12, 7
      %p241 = pnand %p239, %p240
      %p242 = pneg %p241
      // Predicated region
      $region9: #{run.13} parent=5 // pred_check
        _
      $region10: #{run.13} parent=5 // pred_check_branch
        %244 = sbr.rel (%p241) target = $region12
      $region11: #{run.13} parent=5 // pred_region
        %s245 = ssub.s32 %s12, 1
      $region12: #{run.13} parent=5 // pred_fallthru
        _
      %p246 = scmp.lt.s32.totalorder %s12, 6
      // Predicated region
      $region13: #{run.13} parent=5 // pred_check
        %p247 = pneg %p246
      $region14: #{run.13} parent=5 // pred_check_branch
        %249 = sbr.rel (%p247) target = $region16
      $region15: #{run.13} parent=5 // pred_region
        // Predicated region
        $region17: #{run.13} parent=15 // pred_check
          %p250 = pneg %p53
        $region18: #{run.13} parent=15 // pred_check_branch
          %252 = sbr.rel (%p250) target = $region20
        $region19: #{run.13} parent=15 // pred_region
          %p253 = scmp.lt.s32.totalorder %s19, 1
          %s254 = scalar_select %p253, %s19, 1
          %p255 = scmp.lt.s32.totalorder %s20, 0
          %s256 = scalar_select %p255, %s20, 0
          %s257 = sadd.s32 %s256, %s254
          %s258 = smul.addr %s257, 8
          %s259 = scalar_lea.vmem %s0, %s258
        $region20: #{run.13} parent=15 // pred_fallthru
          _
        // Predicated region
        $region21: #{run.13} parent=15 // pred_check
          %p260 = pneg %p79
        $region22: #{run.13} parent=15 // pred_check_branch
          %262 = sbr.rel (%p260) target = $region24
        $region23: #{run.13} parent=15 // pred_region
          %p263 = scmp.lt.s32.totalorder %s19, 1
          %s264 = scalar_select %p263, %s19, 1
          %s265 = scalar_lea.vmem %s1, %s264
        $region24: #{run.13} parent=15 // pred_fallthru
          _
        // Predicated region
        $region25: #{run.13} parent=15 // pred_check
          %p266 = pneg %p105
        $region26: #{run.13} parent=15 // pred_check_branch
          %268 = sbr.rel (%p266) target = $region28
        $region27: #{run.13} parent=15 // pred_region
          %p269 = scmp.lt.s32.totalorder %s19, 1
          %s270 = scalar_select %p269, %s19, 1
          %s271 = scalar_lea.vmem %s2, %s270
        $region28: #{run.13} parent=15 // pred_fallthru
          _
        // Predicated region
        $region29: #{run.13} parent=15 // pred_check
          %p272 = pneg %p131
        $region30: #{run.13} parent=15 // pred_check_branch
          %274 = sbr.rel (%p272) target = $region32
        $region31: #{run.13} parent=15 // pred_region
          %s275 = sand.u32 %s121, 1
          %s276 = sand.u32 %s121, 1
          %s277 = smul.addr %s276, 64
          %s278 = scalar_lea.vmem [#allocation3], %s277
          %s279 = smul.addr %s21, 4
          %s280 = scalar_lea.vmem %s3, %s279
          // Predicated region
          $region33: #{run.13} parent=31 // pred_check
            _
          $region34: #{run.13} parent=31 // pred_check_branch
            %282 = sbr.rel (0) target = $region36
          $region35: #{run.13} parent=31 // pred_region
            // Predicated region
            $region37: #{run.13} parent=35 // pred_check
              _
            $region38: #{run.13} parent=35 // pred_check_branch
              %284 = sbr.rel target = $region40
            $region39: #{run.13} parent=35 // pred_region
              // Predicated region
              $region52: #{run.13} parent=39 // pred_check
                _
              $region53: #{run.13} parent=39 // pred_check_branch
                %329 = sbr.rel (0) target = $region55
              $region54: #{run.13} parent=39 // pred_region
                loop: start=0, step=1, limit=1
                $region56: #{run.13} parent=54 // loop_pre_header
                  _
                $region57: #{run.13} parent=54 // loop_header
                  %s331 = sphi 0, %s335
                  %p332 = scmp.ge.s32.totalorder %s331, 1
                  %s336 = sphi %s280, %s280
                  %s337 = sphi %s278, %s278
                $region58: #{run.13} parent=54 // loop_header_branch
                  %334 = sbr.rel (%p332) target = $region62
                $region59: #{run.13} parent=54 // loop_body
                  _
                $region60: #{run.13} parent=54 // loop_footer
                  %s335 = sadd.s32 1, %s331
                $region61: #{run.13} parent=54 // loop_footer_branch
                  %330 = sbr.rel target = $region57
                $region62: #{run.13} parent=54 // loop_exit
                  _
                loop: start=0, step=1, limit=1
                $region63: #{run.13} parent=54 // loop_pre_header
                  _
                $region64: #{run.13} parent=54 // loop_header
                  %s340 = sphi 0, %s344
                  %p341 = scmp.ge.s32.totalorder %s340, 1
                  %s345 = sphi %s280, %s280
                  %s346 = sphi %s278, %s278
                $region65: #{run.13} parent=54 // loop_header_branch
                  %343 = sbr.rel (%p341) target = $region69
                $region66: #{run.13} parent=54 // loop_body
                  %v347 = vld [vmem:[%s345] sm:$0xf]
                  %348 = vst [vmem:[%s346] sm:$0xf] %v347
                  %v349 = vld [vmem:[%s345 + $0xc] sm:$0xf]
                  %350 = vst [vmem:[%s346 + $0x4] sm:$0xf] %v349
                  %v351 = vld [vmem:[%s345 + $0x18] sm:$0xf]
                  %352 = vst [vmem:[%s346 + $0x8] sm:$0xf] %v351
                  %v353 = vld [vmem:[%s345 + $0x24] sm:$0xf]
                  %354 = vst [vmem:[%s346 + $0xc] sm:$0xf] %v353
                  %v355 = vld [vmem:[%s345 + $0x30] sm:$0xf]
                  %356 = vst [vmem:[%s346 + $0x10] sm:$0xf] %v355
                  %v357 = vld [vmem:[%s345 + $0x3c] sm:$0xf]
                  %358 = vst [vmem:[%s346 + $0x14] sm:$0xf] %v357
                  %v359 = vld [vmem:[%s345 + $0x48] sm:$0xf]
                  %360 = vst [vmem:[%s346 + $0x18] sm:$0xf] %v359
                  %v361 = vld [vmem:[%s345 + $0x54] sm:$0xf]
                  %362 = vst [vmem:[%s346 + $0x1c] sm:$0xf] %v361
                  %v363 = vld [vmem:[%s345 + $0x60] sm:$0xf]
                  %364 = vst [vmem:[%s346 + $0x20] sm:$0xf] %v363
                  %v365 = vld [vmem:[%s345 + $0x6c] sm:$0xf]
                  %366 = vst [vmem:[%s346 + $0x24] sm:$0xf] %v365
                  %v367 = vld [vmem:[%s345 + $0x78] sm:$0xf]
                  %368 = vst [vmem:[%s346 + $0x28] sm:$0xf] %v367
                  %v369 = vld [vmem:[%s345 + $0x84] sm:$0xf]
                  %370 = vst [vmem:[%s346 + $0x2c] sm:$0xf] %v369
                  %v371 = vld [vmem:[%s345 + $0x90] sm:$0xf]
                  %372 = vst [vmem:[%s346 + $0x30] sm:$0xf] %v371
                  %v373 = vld [vmem:[%s345 + $0x9c] sm:$0xf]
                  %374 = vst [vmem:[%s346 + $0x34] sm:$0xf] %v373
                  %v375 = vld [vmem:[%s345 + $0xa8] sm:$0xf]
                  %376 = vst [vmem:[%s346 + $0x38] sm:$0xf] %v375
                  %v377 = vld [vmem:[%s345 + $0xb4] sm:$0xf]
                  %378 = vst [vmem:[%s346 + $0x3c] sm:$0xf] %v377
                $region67: #{run.13} parent=54 // loop_footer
                  %s344 = sadd.s32 1, %s340
                $region68: #{run.13} parent=54 // loop_footer_branch
                  %339 = sbr.rel target = $region64
                $region69: #{run.13} parent=54 // loop_exit
                  _
              $region55: #{run.13} parent=39 // pred_fallthru
                _
            $region40: #{run.13} parent=35 // pred_fallthru
              _
            // Predicated region
            $region41: #{run.13} parent=35 // pred_check
              _
            $region42: #{run.13} parent=35 // pred_check_branch
              %286 = sbr.rel (0) target = $region44
            $region43: #{run.13} parent=35 // pred_region
              loop: start=0, step=1, limit=1
              $region45: #{run.13} parent=43 // loop_pre_header
                _
              $region46: #{run.13} parent=43 // loop_header
                %s289 = sphi 0, %s293
                %p290 = scmp.ge.s32.totalorder %s289, 1
                %s294 = sphi %s280, %s280
                %s295 = sphi %s278, %s278
              $region47: #{run.13} parent=43 // loop_header_branch
                %292 = sbr.rel (%p290) target = $region51
              $region48: #{run.13} parent=43 // loop_body
                %v296 = vld [vmem:[%s294] sm:$0xf]
                %297 = vst [vmem:[%s295] sm:$0xf] %v296
                %v298 = vld [vmem:[%s294 + $0xc] sm:$0xf]
                %299 = vst [vmem:[%s295 + $0x4] sm:$0xf] %v298
                %v300 = vld [vmem:[%s294 + $0x18] sm:$0xf]
                %301 = vst [vmem:[%s295 + $0x8] sm:$0xf] %v300
                %v302 = vld [vmem:[%s294 + $0x24] sm:$0xf]
                %303 = vst [vmem:[%s295 + $0xc] sm:$0xf] %v302
                %v304 = vld [vmem:[%s294 + $0x30] sm:$0xf]
                %305 = vst [vmem:[%s295 + $0x10] sm:$0xf] %v304
                %v306 = vld [vmem:[%s294 + $0x3c] sm:$0xf]
                %307 = vst [vmem:[%s295 + $0x14] sm:$0xf] %v306
                %v308 = vld [vmem:[%s294 + $0x48] sm:$0xf]
                %309 = vst [vmem:[%s295 + $0x18] sm:$0xf] %v308
                %v310 = vld [vmem:[%s294 + $0x54] sm:$0xf]
                %311 = vst [vmem:[%s295 + $0x1c] sm:$0xf] %v310
                %v312 = vld [vmem:[%s294 + $0x60] sm:$0xf]
                %313 = vst [vmem:[%s295 + $0x20] sm:$0xf] %v312
                %v314 = vld [vmem:[%s294 + $0x6c] sm:$0xf]
                %315 = vst [vmem:[%s295 + $0x24] sm:$0xf] %v314
                %v316 = vld [vmem:[%s294 + $0x78] sm:$0xf]
                %317 = vst [vmem:[%s295 + $0x28] sm:$0xf] %v316
                %v318 = vld [vmem:[%s294 + $0x84] sm:$0xf]
                %319 = vst [vmem:[%s295 + $0x2c] sm:$0xf] %v318
                %v320 = vld [vmem:[%s294 + $0x90] sm:$0xf]
                %321 = vst [vmem:[%s295 + $0x30] sm:$0xf] %v320
                %v322 = vld [vmem:[%s294 + $0x9c] sm:$0xf]
                %323 = vst [vmem:[%s295 + $0x34] sm:$0xf] %v322
                %v324 = vld [vmem:[%s294 + $0xa8] sm:$0xf]
                %325 = vst [vmem:[%s295 + $0x38] sm:$0xf] %v324
                %v326 = vld [vmem:[%s294 + $0xb4] sm:$0xf]
                %327 = vst [vmem:[%s295 + $0x3c] sm:$0xf] %v326
              $region49: #{run.13} parent=43 // loop_footer
                %s293 = sadd.s32 1, %s289
              $region50: #{run.13} parent=43 // loop_footer_branch
                %288 = sbr.rel target = $region46
              $region51: #{run.13} parent=43 // loop_exit
                _
            $region44: #{run.13} parent=35 // pred_fallthru
              _
          $region36: #{run.13} parent=31 // pred_fallthru
            _
          %379 = vnop
        $region32: #{run.13} parent=15 // pred_fallthru
          _
        // Predicated region
        $region70: #{run.13} parent=15 // pred_check
          %p380 = pneg %p163
        $region71: #{run.13} parent=15 // pred_check_branch
          %382 = sbr.rel (%p380) target = $region73
        $region72: #{run.13} parent=15 // pred_region
          %p383 = scmp.lt.s32.totalorder %s21, 1
          %s384 = scalar_select %p383, %s21, 1
          %p385 = scmp.lt.s32.totalorder %s20, 0
          %s386 = scalar_select %p385, %s20, 0
          %p387 = scmp.lt.s32.totalorder %s384, 1
          %s388 = scalar_select %p387, %s384, 1
          %s389 = smul.addr %s386, 2
          %s390 = sadd.s32 %s388, %s389
          %s391 = smul.addr %s390, 4
          %s392 = scalar_lea.vmem %s4, %s391
          %p393 = scmp.lt.s32.totalorder %s21, 1
          %s394 = scalar_select %p393, %s21, 1
        $region73: #{run.13} parent=15 // pred_fallthru
          _
        // Predicated region
        $region74: #{run.13} parent=15 // pred_check
          %p395 = pneg %p195
        $region75: #{run.13} parent=15 // pred_check_branch
          %397 = sbr.rel (%p395) target = $region77
        $region76: #{run.13} parent=15 // pred_region
          %p398 = scmp.lt.s32.totalorder %s21, 1
          %s399 = scalar_select %p398, %s21, 1
          %p400 = scmp.lt.s32.totalorder %s20, 0
          %s401 = scalar_select %p400, %s20, 0
          %p402 = scmp.lt.s32.totalorder %s399, 1
          %s403 = scalar_select %p402, %s399, 1
          %s404 = smul.addr %s401, 2
          %s405 = sadd.s32 %s403, %s404
          %s406 = smul.addr %s405, 4
          %s407 = scalar_lea.vmem %s5, %s406
          %p408 = scmp.lt.s32.totalorder %s21, 1
          %s409 = scalar_select %p408, %s21, 1
        $region77: #{run.13} parent=15 // pred_fallthru
          _
      $region16: #{run.13} parent=5 // pred_fallthru
        _
      %p410 = scmp.le.s32.totalorder 1, %s12
      %p411 = scmp.lt.s32.totalorder %s12, 7
      %p412 = pnand %p410, %p411
      %p413 = pneg %p412
      // Predicated region
      $region78: #{run.13} parent=5 // pred_check
        _
      $region79: #{run.13} parent=5 // pred_check_branch
        %415 = sbr.rel (%p412) target = $region81
      $region80: #{run.13} parent=5 // pred_region
        %s416 = ssub.s32 %s12, 1
        %s417 = sand.u32 %s124, 1
        %s418 = sand.u32 %s124, 1
        %s419 = smul.addr %s418, 64
        %s420 = scalar_lea.vmem [#allocation3], %s419
        // Predicated region
        $region82: #{run.13} parent=80 // pred_check
          %p421 = pneg %p137
        $region83: #{run.13} parent=80 // pred_check_branch
          %423 = sbr.rel (%p421) target = $region85
        $region84: #{run.13} parent=80 // pred_region
          _
        $region85: #{run.13} parent=80 // pred_fallthru
          _
        %p424 = scmp.lt.s32.totalorder %s22, 1
        %s425 = scalar_select %p424, %s22, 1
        %p426 = scmp.lt.s32.totalorder %s23, 0
        %s427 = scalar_select %p426, %s23, 0
        %s428 = sadd.s32 %s427, %s425
        %s429 = smul.addr %s428, 8
        %s430 = scalar_lea.vmem %s0, %s429
        %p431 = pneg %p59
        %p432 = pneg %p56
        %p433 = scmp.lt.s32.totalorder %s22, 1
        %s434 = scalar_select %p433, %s22, 1
        %s435 = scalar_lea.vmem %s1, %s434
        %p436 = pneg %p85
        %p437 = pneg %p82
        %p438 = scmp.lt.s32.totalorder %s22, 1
        %s439 = scalar_select %p438, %s22, 1
        %s440 = scalar_lea.vmem %s2, %s439
        %p441 = pneg %p111
        %p442 = pneg %p108
        %s443 = sand.u32 %s124, 1
        %s444 = sand.u32 %s124, 1
        %s445 = smul.addr %s444, 64
        %s446 = scalar_lea.vmem [#allocation3], %s445
        %p447 = pneg %p137
        %p448 = pneg %p134
        %p449 = scmp.lt.s32.totalorder %s24, 1
        %s450 = scalar_select %p449, %s24, 1
        %p451 = scmp.lt.s32.totalorder %s23, 0
        %s452 = scalar_select %p451, %s23, 0
        %p453 = scmp.lt.s32.totalorder %s450, 1
        %s454 = scalar_select %p453, %s450, 1
        %s455 = smul.addr %s452, 2
        %s456 = sadd.s32 %s454, %s455
        %s457 = smul.addr %s456, 4
        %s458 = scalar_lea.vmem %s4, %s457
        %p459 = pneg %p169
        %p460 = pneg %p166
        %p461 = scmp.lt.s32.totalorder %s24, 1
        %s462 = scalar_select %p461, %s24, 1
        %p463 = scmp.lt.s32.totalorder %s23, 0
        %s464 = scalar_select %p463, %s23, 0
        %p465 = scmp.lt.s32.totalorder %s462, 1
        %s466 = scalar_select %p465, %s462, 1
        %s467 = smul.addr %s464, 2
        %s468 = sadd.s32 %s466, %s467
        %s469 = smul.addr %s468, 4
        %s470 = scalar_lea.vmem %s5, %s469
        %p471 = pneg %p201
        %p472 = pneg %p198
        %p473 = pneg %p231
        %p474 = pneg %p228
        %p475 = scmp.lt.s32.totalorder %s22, 1
        %s476 = scalar_select %p475, %s22, 1
        %p477 = scmp.lt.s32.totalorder %s23, 0
        %s478 = scalar_select %p477, %s23, 0
        %p479 = scmp.lt.s32.totalorder %s24, 2
        %s480 = scalar_select %p479, %s24, 2
        %s481 = smul.addr %s478, 3
        %s482 = sadd.s32 %s480, %s481
        %s483 = smul.addr %s476, 3
        %s484 = sadd.s32 %s482, %s483
        %s485 = smul.addr %s484, 4
        %s486 = scalar_lea.vmem %s6, %s485
        %p487 = scmp.lt.s32.totalorder %s22, 1
        %s488 = scalar_select %p487, %s22, 1
        %p489 = scmp.lt.s32.totalorder %s23, 0
        %s490 = scalar_select %p489, %s23, 0
        %s491 = sadd.s32 %s490, %s488
        %s492 = smul.addr %s491, 8
        %s493 = scalar_lea.vmem %s0, %s492
        %p494 = scmp.lt.s32.totalorder %s22, 1
        %s495 = scalar_select %p494, %s22, 1
        %s496 = scalar_lea.vmem %s1, %s495
        %p497 = scmp.lt.s32.totalorder %s22, 1
        %s498 = scalar_select %p497, %s22, 1
        %s499 = scalar_lea.vmem %s2, %s498
        %p500 = scmp.lt.s32.totalorder %s24, 1
        %s501 = scalar_select %p500, %s24, 1
        %p502 = scmp.lt.s32.totalorder %s23, 0
        %s503 = scalar_select %p502, %s23, 0
        %p504 = scmp.lt.s32.totalorder %s501, 1
        %s505 = scalar_select %p504, %s501, 1
        %s506 = smul.addr %s503, 2
        %s507 = sadd.s32 %s505, %s506
        %s508 = smul.addr %s507, 4
        %s509 = scalar_lea.vmem %s4, %s508
        %p510 = scmp.lt.s32.totalorder %s24, 1
        %s511 = scalar_select %p510, %s24, 1
        %p512 = scmp.lt.s32.totalorder %s24, 1
        %s513 = scalar_select %p512, %s24, 1
        %p514 = scmp.lt.s32.totalorder %s23, 0
        %s515 = scalar_select %p514, %s23, 0
        %p516 = scmp.lt.s32.totalorder %s513, 1
        %s517 = scalar_select %p516, %s513, 1
        %s518 = smul.addr %s515, 2
        %s519 = sadd.s32 %s517, %s518
        %s520 = smul.addr %s519, 4
        %s521 = scalar_lea.vmem %s5, %s520
        %p522 = scmp.lt.s32.totalorder %s24, 1
        %s523 = scalar_select %p522, %s24, 1
        %p524 = scmp.lt.s32.totalorder %s22, 1
        %s525 = scalar_select %p524, %s22, 1
        %p526 = scmp.lt.s32.totalorder %s23, 0
        %s527 = scalar_select %p526, %s23, 0
        %p528 = scmp.lt.s32.totalorder %s24, 2
        %s529 = scalar_select %p528, %s24, 2
        %s530 = smul.addr %s527, 3
        %s531 = sadd.s32 %s529, %s530
        %s532 = smul.addr %s525, 3
        %s533 = sadd.s32 %s531, %s532
        %s534 = smul.addr %s533, 4
        %s535 = scalar_lea.vmem %s6, %s534
        %p537 = scmp.eq.s32.totalorder %s24, 0
        // Predicated region
        $region86: #{run.13} parent=80 // pred_check
          %p538 = pneg %p537
        $region87: #{run.13} parent=80 // pred_check_branch
          %540 = sbr.rel (%p538) target = $region89
        $region88: #{run.13} parent=80 // pred_region
          %v541 = vld [vmem:[%s493] sm:$0xff]
          %v542 = vmul.f32 %v541, %v541
          %543 = vadd.xlane.f32.xlu0 %v542
          %v544 = vpop.xlane.xlu0 %543
          %v545 = vrcp.pop 128.0
          %v546 = vmul.f32 %v544, %v545
          %v547 = vadd.f32 %v546, 1e-05
          %v548 = vrsqrt.pop %v547
          %v549 = vmul.f32 %v541, %v548
          %v550 = vld [vmem:[%s496] sm:$0x1]
          %v552 = vlaneseq
          %v553 = vshrl.u32 %v552, 7
          %v554 = vsub.s32 0, %v553
          %v555 = vrot.slane %v550, %v554
          %v557 = vmul.f32 %v549, %v555
          %v558 = vld [vmem:[%s499] sm:$0x1]
          %v560 = vlaneseq
          %v561 = vshrl.u32 %v560, 7
          %v562 = vsub.s32 0, %v561
          %v563 = vrot.slane %v558, %v562
          %v565 = vadd.f32 %v557, %v563
          %v566 = vpack.c.bf16 %v565, %v565
          %567 = vst [vmem:[#allocation2] sm:$0xf] %v566
        $region89: #{run.13} parent=80 // pred_fallthru
          _
        %v568 = vld [vmem:[#allocation2] sm:$0xf]
        %v569 = vld [vmem:[%s420] sm:$0xf]
        %v570 = vld [vmem:[%s420 + $0x4] sm:$0xf]
        %v571 = vld [vmem:[%s420 + $0x8] sm:$0xf]
        %v572 = vld [vmem:[%s420 + $0xc] sm:$0xf]
        %v573 = vld [vmem:[%s420 + $0x10] sm:$0xf]
        %v574 = vld [vmem:[%s420 + $0x14] sm:$0xf]
        %v575 = vld [vmem:[%s420 + $0x18] sm:$0xf]
        %v576 = vld [vmem:[%s420 + $0x1c] sm:$0xf]
        %v577 = vld [vmem:[%s420 + $0x20] sm:$0xf]
        %v578 = vld [vmem:[%s420 + $0x24] sm:$0xf]
        %v579 = vld [vmem:[%s420 + $0x28] sm:$0xf]
        %v580 = vld [vmem:[%s420 + $0x2c] sm:$0xf]
        %v581 = vld [vmem:[%s420 + $0x30] sm:$0xf]
        %v582 = vld [vmem:[%s420 + $0x34] sm:$0xf]
        %v583 = vld [vmem:[%s420 + $0x38] sm:$0xf]
        %v584 = vld [vmem:[%s420 + $0x3c] sm:$0xf]
        %v601 = vunpack.c.l.b16 %v569
        %v602 = vunpack.c.l.b16 %v570
        %v603 = vunpack.c.l.b16 %v571
        %v604 = vunpack.c.l.b16 %v572
        %v605 = vunpack.c.l.b16 %v573
        %v606 = vunpack.c.l.b16 %v574
        %v607 = vunpack.c.l.b16 %v575
        %v608 = vunpack.c.l.b16 %v576
        %v609 = vunpack.c.l.b16 %v577
        %v610 = vunpack.c.l.b16 %v578
        %v611 = vunpack.c.l.b16 %v579
        %v612 = vunpack.c.l.b16 %v580
        %v613 = vunpack.c.l.b16 %v581
        %v614 = vunpack.c.l.b16 %v582
        %v615 = vunpack.c.l.b16 %v583
        %v616 = vunpack.c.l.b16 %v584
        %v617 = vpack.c.b16 %v602, %v601
        %v618 = vpack.c.b16 %v604, %v603
        %v619 = vpack.c.b16 %v606, %v605
        %v620 = vpack.c.b16 %v608, %v607
        %v621 = vpack.c.b16 %v610, %v609
        %v622 = vpack.c.b16 %v612, %v611
        %v623 = vpack.c.b16 %v614, %v613
        %v624 = vpack.c.b16 %v616, %v615
        %633 = vmatprep.subr.bf16.mxu0 0
        %634 = vmatpush1.bf16.msra.mxu0 %v617
        %635 = vmatprep.subr.bf16.mxu0 0
        %636 = vmatpush1.bf16.msra.mxu0 %v618
        %637 = vmatprep.subr.bf16.mxu0 0
        %638 = vmatpush1.bf16.msra.mxu0 %v619
        %639 = vmatprep.subr.bf16.mxu0 0
        %640 = vmatpush1.bf16.msra.mxu0 %v620
        %641 = vmatprep.subr.bf16.mxu0 0
        %642 = vmatpush1.bf16.msra.mxu0 %v621
        %643 = vmatprep.subr.bf16.mxu0 0
        %644 = vmatpush1.bf16.msra.mxu0 %v622
        %645 = vmatprep.subr.bf16.mxu0 0
        %646 = vmatpush1.bf16.msra.mxu0 %v623
        %647 = vmatprep.subr.bf16.mxu0 0
        %648 = vmatpush1.bf16.msra.mxu0 %v624
        %649 = vmatprep.subr.bf16.mxu0 0
        %650 = vmatpush1.bf16.msra.mxu0 0
        %651 = vmatprep.subr.bf16.mxu0 0
        %652 = vmatpush1.bf16.msra.mxu0 0
        %653 = vmatprep.subr.bf16.mxu0 0
        %654 = vmatpush1.bf16.msra.mxu0 0
        %655 = vmatprep.subr.bf16.mxu0 0
        %656 = vmatpush1.bf16.msra.mxu0 0
        %657 = vmatprep.subr.bf16.mxu0 0
        %658 = vmatpush1.bf16.msra.mxu0 0
        %659 = vmatprep.subr.bf16.mxu0 0
        %660 = vmatpush1.bf16.msra.mxu0 0
        %661 = vmatprep.subr.bf16.mxu0 0
        %662 = vmatpush1.bf16.msra.mxu0 0
        %663 = vmatprep.subr.bf16.mxu0 0
        %664 = vmatpush1.bf16.msra.mxu0 0
        %665 = vmatprep.mubr.bf16.mxu0 0
        %666 = vmatmul.mubr.bf16.gmra.mrb[0].mxu0 %v568
        %v667 = vpop.f32.mrb[0].mxu0
        %v668 = vadd.f32 0.0, %v667
        %v669 = vpop.f32.mrb[0].mxu0
        %v670 = vpop.f32.mrb[0].mxu0
        %v671 = vpop.f32.mrb[0].mxu0
        %672 = vdwg.mxu0
        %s673 = smul.u32 %s24, 128
        %p674 = scmp.lt.s32.totalorder %s673, 256
        // Predicated region
        $region90: #{run.13} parent=80 // pred_check
          %p675 = pneg %p674
        $region91: #{run.13} parent=80 // pred_check_branch
          %677 = sbr.rel (%p675) target = $region93
        $region92: #{run.13} parent=80 // pred_region
          %v678 = vlaneseq
          %v679 = vand.u32 %v678, 127
          %vm680 = vcmp.lt.s32.totalorder %v679, 0
          %v681 = vsub.s32 0, %v679
          %v682 = vsel %vm680, %v681, %v679
          %v683 = vshrl.u32 %v682, 1
          %v684 = vand.u32 %v682, 1
          %v685 = vsub.s32 0, %v684
          %v686 = vsel %vm680, %v685, %v684
          %vm687 = vcmp.ne.s32.totalorder %v686, 0
          %vm688 = vcmp.lt.s32.totalorder %v686, 0
          %vm689 = vmand %vm688, %vm687
          %v690 = vadd.s32 %v686, 2
          %v691 = vsel %vm689, %v690, %v686
          %692 = vrot.lane.b32.xlu0 %v668, 127
          %v693 = vpop.permute.xlu0 %692
          %694 = vrot.lane.b32.xlu0 %v668, 1
          %v695 = vpop.permute.xlu0 %694
          %vm696 = vcmp.eq.s32.totalorder %v691, 0
          %v697 = vsel %vm696, %v693, %v695
          %v698 = vld [vmem:[%s509] sm:$0xf]
          %v699 = vunpack.c.l.bf16 %v698
          %v700 = vmul.f32 %v668, %v699
          %v701 = vld [vmem:[%s521] sm:$0xf]
          %v702 = vunpack.c.l.bf16 %v701
          %v703 = vmul.f32 %v697, %v702
          %v704 = vadd.f32 %v700, %v703
          %v705 = vpack.c.bf16 %v704, %v704
          %706 = vst [vmem:[%s535] sm:$0xf] %v705
        $region93: #{run.13} parent=80 // pred_fallthru
          _
        %p707 = scmp.ge.s32.totalorder %s673, 256
        // Predicated region
        $region94: #{run.13} parent=80 // pred_check
          %p708 = pneg %p707
        $region95: #{run.13} parent=80 // pred_check_branch
          %710 = sbr.rel (%p708) target = $region97
        $region96: #{run.13} parent=80 // pred_region
          %v711 = vpack.c.bf16 %v668, %v668
          %712 = vst [vmem:[%s535] sm:$0xf] %v711
        $region97: #{run.13} parent=80 // pred_fallthru
          _
        %p713 = scmp.lt.s32.totalorder %s22, 1
        %s714 = scalar_select %p713, %s22, 1
        %p715 = scmp.lt.s32.totalorder %s23, 0
        %s716 = scalar_select %p715, %s23, 0
        %p717 = scmp.lt.s32.totalorder %s24, 2
        %s718 = scalar_select %p717, %s24, 2
        %s719 = smul.addr %s716, 3
        %s720 = sadd.s32 %s718, %s719
        %s721 = smul.addr %s714, 3
        %s722 = sadd.s32 %s720, %s721
        %s723 = smul.addr %s722, 4
        %s724 = scalar_lea.vmem %s6, %s723
        // Predicated region
        $region98: #{run.13} parent=80 // pred_check
          %p725 = pneg %p228
        $region99: #{run.13} parent=80 // pred_check_branch
          %727 = sbr.rel (%p725) target = $region101
        $region100: #{run.13} parent=80 // pred_region
          _
        $region101: #{run.13} parent=80 // pred_fallthru
          _
      $region81: #{run.13} parent=5 // pred_fallthru
        _
      %p728 = scmp.le.s32.totalorder 2, %s12
      // Predicated region
      $region102: #{run.13} parent=5 // pred_check
        %p729 = pneg %p728
      $region103: #{run.13} parent=5 // pred_check_branch
        %731 = sbr.rel (%p729) target = $region105
      $region104: #{run.13} parent=5 // pred_region
        %s732 = ssub.s32 %s12, 2
        // Predicated region
        $region106: #{run.13} parent=104 // pred_check
          %p733 = pneg %p234
        $region107: #{run.13} parent=104 // pred_check_branch
          %735 = sbr.rel (%p733) target = $region109
        $region108: #{run.13} parent=104 // pred_region
          %p736 = scmp.lt.s32.totalorder %s25, 1
          %s737 = scalar_select %p736, %s25, 1
          %p738 = scmp.lt.s32.totalorder %s26, 0
          %s739 = scalar_select %p738, %s26, 0
          %p740 = scmp.lt.s32.totalorder %s27, 2
          %s741 = scalar_select %p740, %s27, 2
          %s742 = smul.addr %s739, 3
          %s743 = sadd.s32 %s741, %s742
          %s744 = smul.addr %s737, 3
          %s745 = sadd.s32 %s743, %s744
          %s746 = smul.addr %s745, 4
          %s747 = scalar_lea.vmem %s6, %s746
        $region109: #{run.13} parent=104 // pred_fallthru
          _
      $region105: #{run.13} parent=5 // pred_fallthru
        _
    $region6: #{run.13} parent=1 // loop_footer
      %s16 = sadd.s32 1, %s12
    $region7: #{run.13} parent=1 // loop_footer_branch
      %11 = sbr.rel target = $region3
    $region8: #{run.13} parent=1 // loop_exit
      _

// kernel: run.15
$region0: #{run.15}
  #allocation0 [shape = 'u32[]', space=smem, size = 0x4, offset = 0x4, fixed_abs, tag = 'smem constant byte address 0x4 - core index']
  #allocation1 [shape = 'u32[144,128]{1,0:T(1,128)}', space=vmem, size = 0x12000, scoped, tag = 'internal scratch']
  %s0 = inlined_call_operand.vmem [shape: bf16[2,8,128], index: 0, kind: input, shape index: {}]
  %s1 = inlined_call_operand.vmem [shape: bf16[128,128], index: 1, kind: input, shape index: {}]
  %s2 = inlined_call_operand.vmem [shape: f32[2,1,128], index: 2, kind: input, shape index: {}]
  %s3 = inlined_call_operand.vmem [shape: f32[2,8,128], index: 3, kind: input, shape index: {}]
  %s4 = inlined_call_operand.vmem [shape: f32[2,8,128], index: 4, kind: output, shape index: {}]
  %s5 = sld [smem:[#allocation0]]
  $region49: #{run.15} parent=0
    _
  %s7 = ssub.s32 1, %s5
  %s8 = scalar_select 0, %s7, %s5
  loop: start=0, step=1, limit=4
  $region2: #{run.15} parent=0 // loop_pre_header
    _
  $region3: #{run.15} parent=0 // loop_header
    %s10 = sphi 0, %s14
    %p11 = scmp.ge.s32.totalorder %s10, 4
    %s17 = sphi 0, %s36
    %s18 = sphi 0, %s32
    %s19 = sphi 0, %s28
    %s20 = sphi 0, %s17
    %s21 = sphi 0, %s18
    %s22 = sphi 0, %s19
    %s23 = sphi 0, %s20
    %s24 = sphi 0, %s21
    %s25 = sphi 0, %s22
    %s41 = sphi 0, %s43
    %s44 = sphi 0, %s41
    %s45 = sphi 0, %s44
    %s61 = sphi 0, %s45
    %s67 = sphi 0, %s69
    %s70 = sphi 0, %s67
    %s71 = sphi 0, %s70
    %s87 = sphi 0, %s71
    %s95 = sphi 0, %s97
    %s98 = sphi 0, %s95
    %s99 = sphi 0, %s98
    %s115 = sphi 0, %s99
    %s125 = sphi 0, %s127
    %s128 = sphi 0, %s125
    %s129 = sphi 0, %s128
    %s145 = sphi 0, %s129
    %s155 = sphi 0, %s157
    %s158 = sphi 0, %s155
    %s159 = sphi 0, %s158
    %s175 = sphi 0, %s159
  $region4: #{run.15} parent=0 // loop_header_branch
    %13 = sbr.rel (%p11) target = $region8
  $region5: #{run.15} parent=0 // loop_body
    %s15 = ssub.s32 %s10, 1
    %s16 = ssub.s32 %s10, 2
    %s26 = sadd.s32 1, %s19
    %p27 = scmp.ge.s32.totalorder %s26, 1
    %s28 = scalar_select %p27, 0, %s26
    %s29 = sadd.s32 1, %s18
    %s30 = scalar_select %p27, %s29, %s18
    %p31 = scmp.ge.s32.totalorder %s30, 1
    %s32 = scalar_select %p31, 0, %s30
    %s33 = sadd.s32 1, %s17
    %s34 = scalar_select %p31, %s33, %s17
    %p35 = scmp.ge.s32.totalorder %s34, 2
    %s36 = scalar_select %p35, 0, %s34
    %s37 = ssub.s32 %s17, %s36
    %s38 = ssub.s32 %s18, %s32
    %s39 = sor.u32 %s37, %s38
    %p40 = scmp.eq.s32.totalorder %s39, 0
    %s42 = sadd.s32 %s41, 1
    %s43 = scalar_select %p40, %s41, %s42
    %p46 = pneg %p40
    %p47 = scmp.eq.s32.totalorder %s10, 1
    %p48 = por %p46, %p47
    %p49 = scmp.ne.s32.totalorder %s41, %s44
    %p50 = scmp.eq.s32.totalorder %s10, 0
    %p51 = por %p49, %p50
    %p52 = scmp.ne.s32.totalorder %s41, %s44
    %p53 = scmp.eq.s32.totalorder %s15, 1
    %p54 = por %p52, %p53
    %p55 = scmp.ne.s32.totalorder %s44, %s45
    %p56 = scmp.eq.s32.totalorder %s15, 0
    %p57 = por %p55, %p56
    %p58 = scmp.ne.s32.totalorder %s44, %s45
    %p59 = scmp.eq.s32.totalorder %s16, 1
    %p60 = por %p58, %p59
    %p62 = scmp.ne.s32.totalorder %s45, %s61
    %p63 = scmp.eq.s32.totalorder %s16, 0
    %p64 = por %p62, %p63
    %s65 = ssub.s32 %s19, %s28
    %p66 = scmp.eq.s32.totalorder %s65, 0
    %s68 = sadd.s32 %s67, 1
    %s69 = scalar_select %p66, %s67, %s68
    %p72 = pneg %p66
    %p73 = scmp.eq.s32.totalorder %s10, 1
    %p74 = por %p72, %p73
    %p75 = scmp.ne.s32.totalorder %s67, %s70
    %p76 = scmp.eq.s32.totalorder %s10, 0
    %p77 = por %p75, %p76
    %p78 = scmp.ne.s32.totalorder %s67, %s70
    %p79 = scmp.eq.s32.totalorder %s15, 1
    %p80 = por %p78, %p79
    %p81 = scmp.ne.s32.totalorder %s70, %s71
    %p82 = scmp.eq.s32.totalorder %s15, 0
    %p83 = por %p81, %p82
    %p84 = scmp.ne.s32.totalorder %s70, %s71
    %p85 = scmp.eq.s32.totalorder %s16, 1
    %p86 = por %p84, %p85
    %p88 = scmp.ne.s32.totalorder %s71, %s87
    %p89 = scmp.eq.s32.totalorder %s16, 0
    %p90 = por %p88, %p89
    %s91 = ssub.s32 %s17, %s36
    %s92 = ssub.s32 %s19, %s28
    %s93 = sor.u32 %s91, %s92
    %p94 = scmp.eq.s32.totalorder %s93, 0
    %s96 = sadd.s32 %s95, 1
    %s97 = scalar_select %p94, %s95, %s96
    %p100 = pneg %p94
    %p101 = scmp.eq.s32.totalorder %s10, 1
    %p102 = por %p100, %p101
    %p103 = scmp.ne.s32.totalorder %s95, %s98
    %p104 = scmp.eq.s32.totalorder %s10, 0
    %p105 = por %p103, %p104
    %p106 = scmp.ne.s32.totalorder %s95, %s98
    %p107 = scmp.eq.s32.totalorder %s15, 1
    %p108 = por %p106, %p107
    %p109 = scmp.ne.s32.totalorder %s98, %s99
    %p110 = scmp.eq.s32.totalorder %s15, 0
    %p111 = por %p109, %p110
    %p112 = scmp.ne.s32.totalorder %s98, %s99
    %p113 = scmp.eq.s32.totalorder %s16, 1
    %p114 = por %p112, %p113
    %p116 = scmp.ne.s32.totalorder %s99, %s115
    %p117 = scmp.eq.s32.totalorder %s16, 0
    %p118 = por %p116, %p117
    %s119 = ssub.s32 %s17, %s36
    %s120 = ssub.s32 %s18, %s32
    %s121 = sor.u32 %s119, %s120
    %s122 = ssub.s32 %s19, %s28
    %s123 = sor.u32 %s121, %s122
    %p124 = scmp.eq.s32.totalorder %s123, 0
    %s126 = sadd.s32 %s125, 1
    %s127 = scalar_select %p124, %s125, %s126
    %p130 = pneg %p124
    %p131 = scmp.eq.s32.totalorder %s10, 1
    %p132 = por %p130, %p131
    %p133 = scmp.ne.s32.totalorder %s125, %s128
    %p134 = scmp.eq.s32.totalorder %s10, 0
    %p135 = por %p133, %p134
    %p136 = scmp.ne.s32.totalorder %s125, %s128
    %p137 = scmp.eq.s32.totalorder %s15, 1
    %p138 = por %p136, %p137
    %p139 = scmp.ne.s32.totalorder %s128, %s129
    %p140 = scmp.eq.s32.totalorder %s15, 0
    %p141 = por %p139, %p140
    %p142 = scmp.ne.s32.totalorder %s128, %s129
    %p143 = scmp.eq.s32.totalorder %s16, 1
    %p144 = por %p142, %p143
    %p146 = scmp.ne.s32.totalorder %s129, %s145
    %p147 = scmp.eq.s32.totalorder %s16, 0
    %p148 = por %p146, %p147
    %s149 = ssub.s32 %s17, %s36
    %s150 = ssub.s32 %s18, %s32
    %s151 = sor.u32 %s149, %s150
    %s152 = ssub.s32 %s19, %s28
    %s153 = sor.u32 %s151, %s152
    %p154 = scmp.eq.s32.totalorder %s153, 0
    %s156 = sadd.s32 %s155, 1
    %s157 = scalar_select %p154, %s155, %s156
    %p160 = pneg %p154
    %p161 = scmp.eq.s32.totalorder %s10, 1
    %p162 = por %p160, %p161
    %p163 = scmp.ne.s32.totalorder %s155, %s158
    %p164 = scmp.eq.s32.totalorder %s10, 0
    %p165 = por %p163, %p164
    %p166 = scmp.ne.s32.totalorder %s155, %s158
    %p167 = scmp.eq.s32.totalorder %s15, 1
    %p168 = por %p166, %p167
    %p169 = scmp.ne.s32.totalorder %s158, %s159
    %p170 = scmp.eq.s32.totalorder %s15, 0
    %p171 = por %p169, %p170
    %p172 = scmp.ne.s32.totalorder %s158, %s159
    %p173 = scmp.eq.s32.totalorder %s16, 1
    %p174 = por %p172, %p173
    %p176 = scmp.ne.s32.totalorder %s159, %s175
    %p177 = scmp.eq.s32.totalorder %s16, 0
    %p178 = por %p176, %p177
    %p179 = scmp.le.s32.totalorder 1, %s10
    %p180 = scmp.lt.s32.totalorder %s10, 3
    %p181 = pnand %p179, %p180
    %p182 = pneg %p181
    // Predicated region
    $region9: #{run.15} parent=5 // pred_check
      _
    $region10: #{run.15} parent=5 // pred_check_branch
      %184 = sbr.rel (%p181) target = $region12
    $region11: #{run.15} parent=5 // pred_region
      %s185 = ssub.s32 %s10, 1
      // Predicated region
      $region13: #{run.15} parent=11 // pred_check
        %p186 = pneg %p83
      $region14: #{run.15} parent=11 // pred_check_branch
        %188 = sbr.rel (%p186) target = $region16
      $region15: #{run.15} parent=11 // pred_region
        %p189 = scmp.lt.s32.totalorder %s22, 0
        %s190 = scalar_select %p189, %s22, 0
        %s191 = smul.addr %s190, 4
        %s192 = scalar_lea.vmem %s1, %s191
      $region16: #{run.15} parent=11 // pred_fallthru
        _
    $region12: #{run.15} parent=5 // pred_fallthru
      _
    %p193 = scmp.lt.s32.totalorder %s10, 2
    // Predicated region
    $region17: #{run.15} parent=5 // pred_check
      %p194 = pneg %p193
    $region18: #{run.15} parent=5 // pred_check_branch
      %196 = sbr.rel (%p194) target = $region20
    $region19: #{run.15} parent=5 // pred_region
      // Predicated region
      $region21: #{run.15} parent=19 // pred_check
        %p197 = pneg %p51
      $region22: #{run.15} parent=19 // pred_check_branch
        %199 = sbr.rel (%p197) target = $region24
      $region23: #{run.15} parent=19 // pred_region
        %p200 = scmp.lt.s32.totalorder %s17, 1
        %s201 = scalar_select %p200, %s17, 1
        %p202 = scmp.lt.s32.totalorder %s18, 0
        %s203 = scalar_select %p202, %s18, 0
        %s204 = sadd.s32 %s203, %s201
        %s205 = smul.addr %s204, 4
        %s206 = scalar_lea.vmem %s0, %s205
      $region24: #{run.15} parent=19 // pred_fallthru
        _
      // Predicated region
      $region25: #{run.15} parent=19 // pred_check
        %p207 = pneg %p105
      $region26: #{run.15} parent=19 // pred_check_branch
        %209 = sbr.rel (%p207) target = $region28
      $region27: #{run.15} parent=19 // pred_region
        %p210 = scmp.lt.s32.totalorder %s17, 1
        %s211 = scalar_select %p210, %s17, 1
        %p212 = scmp.lt.s32.totalorder %s19, 0
        %s213 = scalar_select %p212, %s19, 0
        %s214 = sadd.s32 %s213, %s211
        %s215 = scalar_lea.vmem %s2, %s214
      $region28: #{run.15} parent=19 // pred_fallthru
        _
      // Predicated region
      $region29: #{run.15} parent=19 // pred_check
        %p216 = pneg %p135
      $region30: #{run.15} parent=19 // pred_check_branch
        %218 = sbr.rel (%p216) target = $region32
      $region31: #{run.15} parent=19 // pred_region
        %p219 = scmp.lt.s32.totalorder %s17, 1
        %s220 = scalar_select %p219, %s17, 1
        %p221 = scmp.lt.s32.totalorder %s18, 0
        %s222 = scalar_select %p221, %s18, 0
        %p223 = scmp.lt.s32.totalorder %s19, 0
        %s224 = scalar_select %p223, %s19, 0
        %s225 = sadd.s32 %s224, %s222
        %s226 = sadd.s32 %s225, %s220
        %s227 = smul.addr %s226, 8
        %s228 = scalar_lea.vmem %s3, %s227
      $region32: #{run.15} parent=19 // pred_fallthru
        _
    $region20: #{run.15} parent=5 // pred_fallthru
      _
    %p229 = scmp.le.s32.totalorder 1, %s10
    %p230 = scmp.lt.s32.totalorder %s10, 3
    %p231 = pnand %p229, %p230
    %p232 = pneg %p231
    // Predicated region
    $region33: #{run.15} parent=5 // pred_check
      _
    $region34: #{run.15} parent=5 // pred_check_branch
      %234 = sbr.rel (%p231) target = $region36
    $region35: #{run.15} parent=5 // pred_region
      %s235 = ssub.s32 %s10, 1
      %p236 = scmp.lt.s32.totalorder %s20, 1
      %s237 = scalar_select %p236, %s20, 1
      %p238 = scmp.lt.s32.totalorder %s21, 0
      %s239 = scalar_select %p238, %s21, 0
      %s240 = sadd.s32 %s239, %s237
      %s241 = smul.addr %s240, 4
      %s242 = scalar_lea.vmem %s0, %s241
      %p243 = pneg %p57
      %p244 = pneg %p54
      %p245 = scmp.lt.s32.totalorder %s22, 0
      %s246 = scalar_select %p245, %s22, 0
      %s247 = smul.addr %s246, 4
      %s248 = scalar_lea.vmem %s1, %s247
      %p249 = pneg %p83
      %p250 = pneg %p80
      %p251 = scmp.lt.s32.totalorder %s20, 1
      %s252 = scalar_select %p251, %s20, 1
      %p253 = scmp.lt.s32.totalorder %s22, 0
      %s254 = scalar_select %p253, %s22, 0
      %s255 = sadd.s32 %s254, %s252
      %s256 = scalar_lea.vmem %s2, %s255
      %p257 = pneg %p111
      %p258 = pneg %p108
      %p259 = scmp.lt.s32.totalorder %s20, 1
      %s260 = scalar_select %p259, %s20, 1
      %p261 = scmp.lt.s32.totalorder %s21, 0
      %s262 = scalar_select %p261, %s21, 0
      %p263 = scmp.lt.s32.totalorder %s22, 0
      %s264 = scalar_select %p263, %s22, 0
      %s265 = sadd.s32 %s264, %s262
      %s266 = sadd.s32 %s265, %s260
      %s267 = smul.addr %s266, 8
      %s268 = scalar_lea.vmem %s3, %s267
      %p269 = pneg %p141
      %p270 = pneg %p138
      %p271 = pneg %p171
      %p272 = pneg %p168
      %p273 = scmp.lt.s32.totalorder %s20, 1
      %s274 = scalar_select %p273, %s20, 1
      %p275 = scmp.lt.s32.totalorder %s21, 0
      %s276 = scalar_select %p275, %s21, 0
      %p277 = scmp.lt.s32.totalorder %s22, 0
      %s278 = scalar_select %p277, %s22, 0
      %s279 = sadd.s32 %s278, %s276
      %s280 = sadd.s32 %s279, %s274
      %s281 = smul.addr %s280, 8
      %s282 = scalar_lea.vmem %s4, %s281
      %p283 = scmp.lt.s32.totalorder %s20, 1
      %s284 = scalar_select %p283, %s20, 1
      %p285 = scmp.lt.s32.totalorder %s21, 0
      %s286 = scalar_select %p285, %s21, 0
      %s287 = sadd.s32 %s286, %s284
      %s288 = smul.addr %s287, 4
      %s289 = scalar_lea.vmem %s0, %s288
      %p290 = scmp.lt.s32.totalorder %s22, 0
      %s291 = scalar_select %p290, %s22, 0
      %s292 = smul.addr %s291, 4
      %s293 = scalar_lea.vmem %s1, %s292
      %p294 = scmp.lt.s32.totalorder %s20, 1
      %s295 = scalar_select %p294, %s20, 1
      %p296 = scmp.lt.s32.totalorder %s22, 0
      %s297 = scalar_select %p296, %s22, 0
      %s298 = sadd.s32 %s297, %s295
      %s299 = scalar_lea.vmem %s2, %s298
      %p300 = scmp.lt.s32.totalorder %s20, 1
      %s301 = scalar_select %p300, %s20, 1
      %p302 = scmp.lt.s32.totalorder %s21, 0
      %s303 = scalar_select %p302, %s21, 0
      %p304 = scmp.lt.s32.totalorder %s22, 0
      %s305 = scalar_select %p304, %s22, 0
      %s306 = sadd.s32 %s305, %s303
      %s307 = sadd.s32 %s306, %s301
      %s308 = smul.addr %s307, 8
      %s309 = scalar_lea.vmem %s3, %s308
      %p310 = scmp.lt.s32.totalorder %s20, 1
      %s311 = scalar_select %p310, %s20, 1
      %p312 = scmp.lt.s32.totalorder %s21, 0
      %s313 = scalar_select %p312, %s21, 0
      %p314 = scmp.lt.s32.totalorder %s22, 0
      %s315 = scalar_select %p314, %s22, 0
      %s316 = sadd.s32 %s315, %s313
      %s317 = sadd.s32 %s316, %s311
      %s318 = smul.addr %s317, 8
      %s319 = scalar_lea.vmem %s4, %s318
      %v321 = vld [vmem:[%s289] sm:$0xf]
      %v322 = vld [vmem:[%s293] sm:$0xf]
      %v323 = vld [vmem:[%s293 + $0x4] sm:$0xf]
      %v324 = vld [vmem:[%s293 + $0x8] sm:$0xf]
      %v325 = vld [vmem:[%s293 + $0xc] sm:$0xf]
      %v326 = vld [vmem:[%s293 + $0x10] sm:$0xf]
      %v327 = vld [vmem:[%s293 + $0x14] sm:$0xf]
      %v328 = vld [vmem:[%s293 + $0x18] sm:$0xf]
      %v329 = vld [vmem:[%s293 + $0x1c] sm:$0xf]
      %v330 = vld [vmem:[%s293 + $0x20] sm:$0xf]
      %v331 = vld [vmem:[%s293 + $0x24] sm:$0xf]
      %v332 = vld [vmem:[%s293 + $0x28] sm:$0xf]
      %v333 = vld [vmem:[%s293 + $0x2c] sm:$0xf]
      %v334 = vld [vmem:[%s293 + $0x30] sm:$0xf]
      %v335 = vld [vmem:[%s293 + $0x34] sm:$0xf]
      %v336 = vld [vmem:[%s293 + $0x38] sm:$0xf]
      %v337 = vld [vmem:[%s293 + $0x3c] sm:$0xf]
      %v354 = vunpack.c.l.b16 %v322
      %v355 = vunpack.c.l.b16 %v323
      %v356 = vunpack.c.l.b16 %v324
      %v357 = vunpack.c.l.b16 %v325
      %v358 = vunpack.c.l.b16 %v326
      %v359 = vunpack.c.l.b16 %v327
      %v360 = vunpack.c.l.b16 %v328
      %v361 = vunpack.c.l.b16 %v329
      %v362 = vunpack.c.l.b16 %v330
      %v363 = vunpack.c.l.b16 %v331
      %v364 = vunpack.c.l.b16 %v332
      %v365 = vunpack.c.l.b16 %v333
      %v366 = vunpack.c.l.b16 %v334
      %v367 = vunpack.c.l.b16 %v335
      %v368 = vunpack.c.l.b16 %v336
      %v369 = vunpack.c.l.b16 %v337
      %v370 = vpack.c.b16 %v355, %v354
      %v371 = vpack.c.b16 %v357, %v356
      %v372 = vpack.c.b16 %v359, %v358
      %v373 = vpack.c.b16 %v361, %v360
      %v374 = vpack.c.b16 %v363, %v362
      %v375 = vpack.c.b16 %v365, %v364
      %v376 = vpack.c.b16 %v367, %v366
      %v377 = vpack.c.b16 %v369, %v368
      %386 = vmatprep.subr.bf16.mxu0 0
      %387 = vmatpush1.bf16.msra.mxu0 %v370
      %388 = vmatprep.subr.bf16.mxu0 0
      %389 = vmatpush1.bf16.msra.mxu0 %v371
      %390 = vmatprep.subr.bf16.mxu0 0
      %391 = vmatpush1.bf16.msra.mxu0 %v372
      %392 = vmatprep.subr.bf16.mxu0 0
      %393 = vmatpush1.bf16.msra.mxu0 %v373
      %394 = vmatprep.subr.bf16.mxu0 0
      %395 = vmatpush1.bf16.msra.mxu0 %v374
      %396 = vmatprep.subr.bf16.mxu0 0
      %397 = vmatpush1.bf16.msra.mxu0 %v375
      %398 = vmatprep.subr.bf16.mxu0 0
      %399 = vmatpush1.bf16.msra.mxu0 %v376
      %400 = vmatprep.subr.bf16.mxu0 0
      %401 = vmatpush1.bf16.msra.mxu0 %v377
      %402 = vmatprep.subr.bf16.mxu0 0
      %403 = vmatpush1.bf16.msra.mxu0 0
      %404 = vmatprep.subr.bf16.mxu0 0
      %405 = vmatpush1.bf16.msra.mxu0 0
      %406 = vmatprep.subr.bf16.mxu0 0
      %407 = vmatpush1.bf16.msra.mxu0 0
      %408 = vmatprep.subr.bf16.mxu0 0
      %409 = vmatpush1.bf16.msra.mxu0 0
      %410 = vmatprep.subr.bf16.mxu0 0
      %411 = vmatpush1.bf16.msra.mxu0 0
      %412 = vmatprep.subr.bf16.mxu0 0
      %413 = vmatpush1.bf16.msra.mxu0 0
      %414 = vmatprep.subr.bf16.mxu0 0
      %415 = vmatpush1.bf16.msra.mxu0 0
      %416 = vmatprep.subr.bf16.mxu0 0
      %417 = vmatpush1.bf16.msra.mxu0 0
      %418 = vmatprep.mubr.bf16.mxu0 0
      %419 = vmatmul.mubr.bf16.gmra.mrb[0].mxu0 %v321
      %v420 = vpop.f32.mrb[0].mxu0
      %v421 = vadd.f32 0.0, %v420
      %v422 = vpop.f32.mrb[0].mxu0
      %v423 = vpop.f32.mrb[0].mxu0
      %v424 = vpop.f32.mrb[0].mxu0
      %425 = vdwg.mxu0
      %v426 = vld [vmem:[%s309] sm:$0xff]
      %v427 = vld [vmem:[%s299] sm:$0x1]
      %v429 = vlaneseq
      %v430 = vshrl.u32 %v429, 7
      %v431 = vsub.s32 0, %v430
      %v432 = vrot.slane %v427, %v431
      %v434 = vmul.f32 %v432, %v421
      %v435 = vadd.f32 %v426, %v434
      %436 = vst [vmem:[%s319] sm:$0xff] %v435
      %p437 = scmp.lt.s32.totalorder %s20, 1
      %s438 = scalar_select %p437, %s20, 1
      %p439 = scmp.lt.s32.totalorder %s21, 0
      %s440 = scalar_select %p439, %s21, 0
      %p441 = scmp.lt.s32.totalorder %s22, 0
      %s442 = scalar_select %p441, %s22, 0
      %s443 = sadd.s32 %s442, %s440
      %s444 = sadd.s32 %s443, %s438
      %s445 = smul.addr %s444, 8
      %s446 = scalar_lea.vmem %s4, %s445
      // Predicated region
      $region37: #{run.15} parent=35 // pred_check
        %p447 = pneg %p168
      $region38: #{run.15} parent=35 // pred_check_branch
        %449 = sbr.rel (%p447) target = $region40
      $region39: #{run.15} parent=35 // pred_region
        _
      $region40: #{run.15} parent=35 // pred_fallthru
        _
    $region36: #{run.15} parent=5 // pred_fallthru
      _
    %p450 = scmp.le.s32.totalorder 2, %s10
    // Predicated region
    $region41: #{run.15} parent=5 // pred_check
      %p451 = pneg %p450
    $region42: #{run.15} parent=5 // pred_check_branch
      %453 = sbr.rel (%p451) target = $region44
    $region43: #{run.15} parent=5 // pred_region
      %s454 = ssub.s32 %s10, 2
      // Predicated region
      $region45: #{run.15} parent=43 // pred_check
        %p455 = pneg %p174
      $region46: #{run.15} parent=43 // pred_check_branch
        %457 = sbr.rel (%p455) target = $region48
      $region47: #{run.15} parent=43 // pred_region
        %p458 = scmp.lt.s32.totalorder %s23, 1
        %s459 = scalar_select %p458, %s23, 1
        %p460 = scmp.lt.s32.totalorder %s24, 0
        %s461 = scalar_select %p460, %s24, 0
        %p462 = scmp.lt.s32.totalorder %s25, 0
        %s463 = scalar_select %p462, %s25, 0
        %s464 = sadd.s32 %s463, %s461
        %s465 = sadd.s32 %s464, %s459
        %s466 = smul.addr %s465, 8
        %s467 = scalar_lea.vmem %s4, %s466
      $region48: #{run.15} parent=43 // pred_fallthru
        _
    $region44: #{run.15} parent=5 // pred_fallthru
      _
  $region6: #{run.15} parent=0 // loop_footer
    %s14 = sadd.s32 1, %s10
  $region7: #{run.15} parent=0 // loop_footer_branch
    %9 = sbr.rel target = $region3
  $region8: #{run.15} parent=0 // loop_exit
    _

// kernel: run.14
$region0: #{run.14}
  #allocation0 [shape = 'u32[]', space=smem, size = 0x4, offset = 0x4, fixed_abs, tag = 'smem constant byte address 0x4 - core index']
  #allocation1 [shape = 'u32[144,128]{1,0:T(1,128)}', space=vmem, size = 0x12000, scoped, tag = 'internal scratch']
  #allocation2 [shape = 'f32[4,8,1]{2,1,0:T(8,128)}', space=vmem, size = 0x4000, scoped, tag = 'scratch operand']
  #allocation3 [shape = 'f32[4,8,1]{2,1,0:T(8,128)}', space=vmem, size = 0x4000, scoped, tag = 'scratch operand']
  #allocation4 [shape = 'f32[4,8,32]{2,1,0:T(8,128)}', space=vmem, size = 0x4000, scoped, tag = 'scratch operand']
  #allocation5 [shape = 's32[1]{0}', space=sflag, size = 0x4, scoped, tag = 'scoped memory for run.14']
  #allocation6 [shape = 's32[1,1]{1,0:T(1,128)S(6)}', space=smem, size = 0x200, scoped, tag = 'prefetched SMEM operand 0']
  #allocation7 [shape = 's32[1,1]{1,0:T(1,128)S(6)}', space=smem, size = 0x200, scoped, tag = 'prefetched SMEM operand 1']
  %s0 = inlined_call_operand.<no memory space> [shape: s32[1,1], index: 0, kind: input, shape index: {}]
  %s1 = inlined_call_operand.<no memory space> [shape: s32[1,1], index: 1, kind: input, shape index: {}]
  %s2 = inlined_call_operand.vmem [shape: bf16[2,4,8,32], index: 2, kind: input, shape index: {}]
  %s3 = inlined_call_operand.vmem [shape: bf16[2,4,8,32], index: 3, kind: input, shape index: {}]
  %s4 = inlined_call_operand.vmem [shape: bf16[2,4,8,32], index: 4, kind: input, shape index: {}]
  %s5 = inlined_call_operand.vmem [shape: f32[8,8], index: 5, kind: input, shape index: {}]
  %s6 = inlined_call_operand.vmem [shape: bf16[2,4,8,32], index: 6, kind: output, shape index: {}]
  %s7 = sld [smem:[#allocation0]]
  $region61: #{run.14} parent=0
    _
  %s9 = ssub.s32 1, %s7
  %s10 = scalar_select 0, %s9, %s7
  %11 = sst [smem:[#allocation6]] %s0
  %12 = sst [smem:[#allocation7]] %s1
  loop: start=0, step=1, limit=4
  $region2: #{run.14} parent=0 // loop_pre_header
    _
  $region3: #{run.14} parent=0 // loop_header
    %s14 = sphi 0, %s18
    %p15 = scmp.ge.s32.totalorder %s14, 4
    %s21 = sphi 0, %s40
    %s22 = sphi 0, %s36
    %s23 = sphi 0, %s32
    %s24 = sphi 0, %s21
    %s25 = sphi 0, %s22
    %s26 = sphi 0, %s23
    %s27 = sphi 0, %s24
    %s28 = sphi 0, %s25
    %s29 = sphi 0, %s26
    %s45 = sphi 0, %s47
    %s48 = sphi 0, %s45
    %s49 = sphi 0, %s48
    %s65 = sphi 0, %s49
    %s89 = sphi 0, %s91
    %s92 = sphi 0, %s89
    %s93 = sphi 0, %s92
    %s109 = sphi 0, %s93
    %s133 = sphi 0, %s135
    %s136 = sphi 0, %s133
    %s137 = sphi 0, %s136
    %s153 = sphi 0, %s137
    %s177 = sphi 0, %s179
    %s180 = sphi 0, %s177
    %s181 = sphi 0, %s180
    %s197 = sphi 0, %s181
    %s205 = sphi 0, %s207
    %s208 = sphi 0, %s205
    %s209 = sphi 0, %s208
    %s225 = sphi 0, %s209
  $region4: #{run.14} parent=0 // loop_header_branch
    %17 = sbr.rel (%p15) target = $region8
  $region5: #{run.14} parent=0 // loop_body
    %s19 = ssub.s32 %s14, 1
    %s20 = ssub.s32 %s14, 2
    %s30 = sadd.s32 1, %s23
    %p31 = scmp.ge.s32.totalorder %s30, 1
    %s32 = scalar_select %p31, 0, %s30
    %s33 = sadd.s32 1, %s22
    %s34 = scalar_select %p31, %s33, %s22
    %p35 = scmp.ge.s32.totalorder %s34, 1
    %s36 = scalar_select %p35, 0, %s34
    %s37 = sadd.s32 1, %s21
    %s38 = scalar_select %p35, %s37, %s21
    %p39 = scmp.ge.s32.totalorder %s38, 2
    %s40 = scalar_select %p39, 0, %s38
    %s41 = ssub.s32 %s21, %s40
    %s42 = ssub.s32 %s22, %s36
    %s43 = sor.u32 %s41, %s42
    %p44 = scmp.eq.s32.totalorder %s43, 0
    %s46 = sadd.s32 %s45, 1
    %s47 = scalar_select %p44, %s45, %s46
    %p50 = pneg %p44
    %p51 = scmp.eq.s32.totalorder %s14, 1
    %p52 = por %p50, %p51
    %p53 = scmp.ne.s32.totalorder %s45, %s48
    %p54 = scmp.eq.s32.totalorder %s14, 0
    %p55 = por %p53, %p54
    %p56 = scmp.ne.s32.totalorder %s45, %s48
    %p57 = scmp.eq.s32.totalorder %s19, 1
    %p58 = por %p56, %p57
    %p59 = scmp.ne.s32.totalorder %s48, %s49
    %p60 = scmp.eq.s32.totalorder %s19, 0
    %p61 = por %p59, %p60
    %p62 = scmp.ne.s32.totalorder %s48, %s49
    %p63 = scmp.eq.s32.totalorder %s20, 1
    %p64 = por %p62, %p63
    %p66 = scmp.ne.s32.totalorder %s49, %s65
    %p67 = scmp.eq.s32.totalorder %s20, 0
    %p68 = por %p66, %p67
    %s69 = sshra.s32 %s23, 7
    %s70 = sand.u32 %s23, 127
    %s71 = sadd.s32 %s69, %s22
    %s72 = smul.u32 %s71, 128
    %s73 = sshra.s32 %s23, 7
    %s74 = sand.u32 %s23, 127
    %s75 = sadd.s32 %s72, %s74
    %s76 = sld [smem:[#allocation7 + %s75]]
    %s77 = sshra.s32 %s32, 7
    %s78 = sand.u32 %s32, 127
    %s79 = sadd.s32 %s77, %s36
    %s80 = smul.u32 %s79, 128
    %s81 = sshra.s32 %s32, 7
    %s82 = sand.u32 %s32, 127
    %s83 = sadd.s32 %s80, %s82
    %s84 = sld [smem:[#allocation7 + %s83]]
    %s85 = ssub.s32 %s21, %s40
    %s86 = ssub.s32 %s76, %s84
    %s87 = sor.u32 %s85, %s86
    %p88 = scmp.eq.s32.totalorder %s87, 0
    %s90 = sadd.s32 %s89, 1
    %s91 = scalar_select %p88, %s89, %s90
    %p94 = pneg %p88
    %p95 = scmp.eq.s32.totalorder %s14, 1
    %p96 = por %p94, %p95
    %p97 = scmp.ne.s32.totalorder %s89, %s92
    %p98 = scmp.eq.s32.totalorder %s14, 0
    %p99 = por %p97, %p98
    %p100 = scmp.ne.s32.totalorder %s89, %s92
    %p101 = scmp.eq.s32.totalorder %s19, 1
    %p102 = por %p100, %p101
    %p103 = scmp.ne.s32.totalorder %s92, %s93
    %p104 = scmp.eq.s32.totalorder %s19, 0
    %p105 = por %p103, %p104
    %p106 = scmp.ne.s32.totalorder %s92, %s93
    %p107 = scmp.eq.s32.totalorder %s20, 1
    %p108 = por %p106, %p107
    %p110 = scmp.ne.s32.totalorder %s93, %s109
    %p111 = scmp.eq.s32.totalorder %s20, 0
    %p112 = por %p110, %p111
    %s113 = sshra.s32 %s23, 7
    %s114 = sand.u32 %s23, 127
    %s115 = sadd.s32 %s113, %s22
    %s116 = smul.u32 %s115, 128
    %s117 = sshra.s32 %s23, 7
    %s118 = sand.u32 %s23, 127
    %s119 = sadd.s32 %s116, %s118
    %s120 = sld [smem:[#allocation7 + %s119]]
    %s121 = sshra.s32 %s32, 7
    %s122 = sand.u32 %s32, 127
    %s123 = sadd.s32 %s121, %s36
    %s124 = smul.u32 %s123, 128
    %s125 = sshra.s32 %s32, 7
    %s126 = sand.u32 %s32, 127
    %s127 = sadd.s32 %s124, %s126
    %s128 = sld [smem:[#allocation7 + %s127]]
    %s129 = ssub.s32 %s21, %s40
    %s130 = ssub.s32 %s120, %s128
    %s131 = sor.u32 %s129, %s130
    %p132 = scmp.eq.s32.totalorder %s131, 0
    %s134 = sadd.s32 %s133, 1
    %s135 = scalar_select %p132, %s133, %s134
    %p138 = pneg %p132
    %p139 = scmp.eq.s32.totalorder %s14, 1
    %p140 = por %p138, %p139
    %p141 = scmp.ne.s32.totalorder %s133, %s136
    %p142 = scmp.eq.s32.totalorder %s14, 0
    %p143 = por %p141, %p142
    %p144 = scmp.ne.s32.totalorder %s133, %s136
    %p145 = scmp.eq.s32.totalorder %s19, 1
    %p146 = por %p144, %p145
    %p147 = scmp.ne.s32.totalorder %s136, %s137
    %p148 = scmp.eq.s32.totalorder %s19, 0
    %p149 = por %p147, %p148
    %p150 = scmp.ne.s32.totalorder %s136, %s137
    %p151 = scmp.eq.s32.totalorder %s20, 1
    %p152 = por %p150, %p151
    %p154 = scmp.ne.s32.totalorder %s137, %s153
    %p155 = scmp.eq.s32.totalorder %s20, 0
    %p156 = por %p154, %p155
    %s157 = sshra.s32 %s23, 7
    %s158 = sand.u32 %s23, 127
    %s159 = sadd.s32 %s157, %s22
    %s160 = smul.u32 %s159, 128
    %s161 = sshra.s32 %s23, 7
    %s162 = sand.u32 %s23, 127
    %s163 = sadd.s32 %s160, %s162
    %s164 = sld [smem:[#allocation7 + %s163]]
    %s165 = sshra.s32 %s32, 7
    %s166 = sand.u32 %s32, 127
    %s167 = sadd.s32 %s165, %s36
    %s168 = smul.u32 %s167, 128
    %s169 = sshra.s32 %s32, 7
    %s170 = sand.u32 %s32, 127
    %s171 = sadd.s32 %s168, %s170
    %s172 = sld [smem:[#allocation7 + %s171]]
    %s173 = ssub.s32 %s22, %s36
    %s174 = ssub.s32 %s164, %s172
    %s175 = sor.u32 %s173, %s174
    %p176 = scmp.eq.s32.totalorder %s175, 0
    %s178 = sadd.s32 %s177, 1
    %s179 = scalar_select %p176, %s177, %s178
    %p182 = pneg %p176
    %p183 = scmp.eq.s32.totalorder %s14, 1
    %p184 = por %p182, %p183
    %p185 = scmp.ne.s32.totalorder %s177, %s180
    %p186 = scmp.eq.s32.totalorder %s14, 0
    %p187 = por %p185, %p186
    %p188 = scmp.ne.s32.totalorder %s177, %s180
    %p189 = scmp.eq.s32.totalorder %s19, 1
    %p190 = por %p188, %p189
    %p191 = scmp.ne.s32.totalorder %s180, %s181
    %p192 = scmp.eq.s32.totalorder %s19, 0
    %p193 = por %p191, %p192
    %p194 = scmp.ne.s32.totalorder %s180, %s181
    %p195 = scmp.eq.s32.totalorder %s20, 1
    %p196 = por %p194, %p195
    %p198 = scmp.ne.s32.totalorder %s181, %s197
    %p199 = scmp.eq.s32.totalorder %s20, 0
    %p200 = por %p198, %p199
    %s201 = ssub.s32 %s21, %s40
    %s202 = ssub.s32 %s22, %s36
    %s203 = sor.u32 %s201, %s202
    %p204 = scmp.eq.s32.totalorder %s203, 0
    %s206 = sadd.s32 %s205, 1
    %s207 = scalar_select %p204, %s205, %s206
    %p210 = pneg %p204
    %p211 = scmp.eq.s32.totalorder %s14, 1
    %p212 = por %p210, %p211
    %p213 = scmp.ne.s32.totalorder %s205, %s208
    %p214 = scmp.eq.s32.totalorder %s14, 0
    %p215 = por %p213, %p214
    %p216 = scmp.ne.s32.totalorder %s205, %s208
    %p217 = scmp.eq.s32.totalorder %s19, 1
    %p218 = por %p216, %p217
    %p219 = scmp.ne.s32.totalorder %s208, %s209
    %p220 = scmp.eq.s32.totalorder %s19, 0
    %p221 = por %p219, %p220
    %p222 = scmp.ne.s32.totalorder %s208, %s209
    %p223 = scmp.eq.s32.totalorder %s20, 1
    %p224 = por %p222, %p223
    %p226 = scmp.ne.s32.totalorder %s209, %s225
    %p227 = scmp.eq.s32.totalorder %s20, 0
    %p228 = por %p226, %p227
    %p229 = scmp.le.s32.totalorder 1, %s14
    %p230 = scmp.lt.s32.totalorder %s14, 3
    %p231 = pnand %p229, %p230
    %p232 = pneg %p231
    // Predicated region
    $region9: #{run.14} parent=5 // pred_check
      _
    $region10: #{run.14} parent=5 // pred_check_branch
      %234 = sbr.rel (%p231) target = $region12
    $region11: #{run.14} parent=5 // pred_region
      %s235 = ssub.s32 %s14, 1
      // Predicated region
      $region13: #{run.14} parent=11 // pred_check
        %p236 = pneg %p193
      $region14: #{run.14} parent=11 // pred_check_branch
        %238 = sbr.rel (%p236) target = $region16
      $region15: #{run.14} parent=11 // pred_region
        %s239 = sshra.s32 %s26, 7
        %s240 = sand.u32 %s26, 127
        %s241 = sadd.s32 %s239, %s25
        %s242 = smul.u32 %s241, 128
        %s243 = sshra.s32 %s26, 7
        %s244 = sand.u32 %s26, 127
        %s245 = sadd.s32 %s242, %s244
        %s246 = sld [smem:[#allocation7 + %s245]]
        %p247 = scmp.lt.s32.totalorder %s25, 0
        %s248 = scalar_select %p247, %s25, 0
        %p249 = scmp.lt.s32.totalorder %s246, 0
        %s250 = scalar_select %p249, %s246, 0
        %s251 = sadd.s32 %s250, %s248
        %s252 = smul.addr %s251, 8
        %s253 = scalar_lea.vmem %s5, %s252
        %s254 = sshra.s32 %s26, 7
        %s255 = sand.u32 %s26, 127
        %s256 = sadd.s32 %s254, %s25
        %s257 = smul.u32 %s256, 128
        %s258 = sshra.s32 %s26, 7
        %s259 = sand.u32 %s26, 127
        %s260 = sadd.s32 %s257, %s259
        %s261 = sld [smem:[#allocation7 + %s260]]
      $region16: #{run.14} parent=11 // pred_fallthru
        _
    $region12: #{run.14} parent=5 // pred_fallthru
      _
    %p262 = scmp.lt.s32.totalorder %s14, 2
    // Predicated region
    $region17: #{run.14} parent=5 // pred_check
      %p263 = pneg %p262
    $region18: #{run.14} parent=5 // pred_check_branch
      %265 = sbr.rel (%p263) target = $region20
    $region19: #{run.14} parent=5 // pred_region
      // Predicated region
      $region21: #{run.14} parent=19 // pred_check
        %p266 = pneg %p55
      $region22: #{run.14} parent=19 // pred_check_branch
        %268 = sbr.rel (%p266) target = $region24
      $region23: #{run.14} parent=19 // pred_region
        %p269 = scmp.lt.s32.totalorder %s21, 1
        %s270 = scalar_select %p269, %s21, 1
        %p271 = scmp.lt.s32.totalorder %s22, 0
        %s272 = scalar_select %p271, %s22, 0
        %s273 = smul.addr %s270, 4
        %s274 = sadd.s32 %s272, %s273
        %s275 = smul.addr %s274, 4
        %s276 = scalar_lea.vmem %s2, %s275
      $region24: #{run.14} parent=19 // pred_fallthru
        _
      // Predicated region
      $region25: #{run.14} parent=19 // pred_check
        %p277 = pneg %p99
      $region26: #{run.14} parent=19 // pred_check_branch
        %279 = sbr.rel (%p277) target = $region28
      $region27: #{run.14} parent=19 // pred_region
        %s280 = sshra.s32 %s23, 7
        %s281 = sand.u32 %s23, 127
        %s282 = sadd.s32 %s280, %s22
        %s283 = smul.u32 %s282, 128
        %s284 = sshra.s32 %s23, 7
        %s285 = sand.u32 %s23, 127
        %s286 = sadd.s32 %s283, %s285
        %s287 = sld [smem:[#allocation7 + %s286]]
        %p288 = scmp.lt.s32.totalorder %s21, 1
        %s289 = scalar_select %p288, %s21, 1
        %p290 = scmp.lt.s32.totalorder %s287, 0
        %s291 = scalar_select %p290, %s287, 0
        %s292 = smul.addr %s289, 4
        %s293 = sadd.s32 %s291, %s292
        %s294 = smul.addr %s293, 4
        %s295 = scalar_lea.vmem %s3, %s294
        %s296 = sshra.s32 %s23, 7
        %s297 = sand.u32 %s23, 127
        %s298 = sadd.s32 %s296, %s22
        %s299 = smul.u32 %s298, 128
        %s300 = sshra.s32 %s23, 7
        %s301 = sand.u32 %s23, 127
        %s302 = sadd.s32 %s299, %s301
        %s303 = sld [smem:[#allocation7 + %s302]]
      $region28: #{run.14} parent=19 // pred_fallthru
        _
      // Predicated region
      $region29: #{run.14} parent=19 // pred_check
        %p304 = pneg %p143
      $region30: #{run.14} parent=19 // pred_check_branch
        %306 = sbr.rel (%p304) target = $region32
      $region31: #{run.14} parent=19 // pred_region
        %s307 = sshra.s32 %s23, 7
        %s308 = sand.u32 %s23, 127
        %s309 = sadd.s32 %s307, %s22
        %s310 = smul.u32 %s309, 128
        %s311 = sshra.s32 %s23, 7
        %s312 = sand.u32 %s23, 127
        %s313 = sadd.s32 %s310, %s312
        %s314 = sld [smem:[#allocation7 + %s313]]
        %p315 = scmp.lt.s32.totalorder %s21, 1
        %s316 = scalar_select %p315, %s21, 1
        %p317 = scmp.lt.s32.totalorder %s314, 0
        %s318 = scalar_select %p317, %s314, 0
        %s319 = smul.addr %s316, 4
        %s320 = sadd.s32 %s318, %s319
        %s321 = smul.addr %s320, 4
        %s322 = scalar_lea.vmem %s4, %s321
        %s323 = sshra.s32 %s23, 7
        %s324 = sand.u32 %s23, 127
        %s325 = sadd.s32 %s323, %s22
        %s326 = smul.u32 %s325, 128
        %s327 = sshra.s32 %s23, 7
        %s328 = sand.u32 %s23, 127
        %s329 = sadd.s32 %s326, %s328
        %s330 = sld [smem:[#allocation7 + %s329]]
      $region32: #{run.14} parent=19 // pred_fallthru
        _
    $region20: #{run.14} parent=5 // pred_fallthru
      _
    %p331 = scmp.le.s32.totalorder 1, %s14
    %p332 = scmp.lt.s32.totalorder %s14, 3
    %p333 = pnand %p331, %p332
    %p334 = pneg %p333
    // Predicated region
    $region33: #{run.14} parent=5 // pred_check
      _
    $region34: #{run.14} parent=5 // pred_check_branch
      %336 = sbr.rel (%p333) target = $region36
    $region35: #{run.14} parent=5 // pred_region
      %s337 = ssub.s32 %s14, 1
      %p338 = scmp.lt.s32.totalorder %s24, 1
      %s339 = scalar_select %p338, %s24, 1
      %p340 = scmp.lt.s32.totalorder %s25, 0
      %s341 = scalar_select %p340, %s25, 0
      %s342 = smul.addr %s339, 4
      %s343 = sadd.s32 %s341, %s342
      %s344 = smul.addr %s343, 4
      %s345 = scalar_lea.vmem %s2, %s344
      %p346 = pneg %p61
      %p347 = pneg %p58
      %s348 = sshra.s32 %s26, 7
      %s349 = sand.u32 %s26, 127
      %s350 = sadd.s32 %s348, %s25
      %s351 = smul.u32 %s350, 128
      %s352 = sshra.s32 %s26, 7
      %s353 = sand.u32 %s26, 127
      %s354 = sadd.s32 %s351, %s353
      %s355 = sld [smem:[#allocation7 + %s354]]
      %p356 = scmp.lt.s32.totalorder %s24, 1
      %s357 = scalar_select %p356, %s24, 1
      %p358 = scmp.lt.s32.totalorder %s355, 0
      %s359 = scalar_select %p358, %s355, 0
      %s360 = smul.addr %s357, 4
      %s361 = sadd.s32 %s359, %s360
      %s362 = smul.addr %s361, 4
      %s363 = scalar_lea.vmem %s3, %s362
      %p364 = pneg %p105
      %p365 = pneg %p102
      %s366 = sshra.s32 %s26, 7
      %s367 = sand.u32 %s26, 127
      %s368 = sadd.s32 %s366, %s25
      %s369 = smul.u32 %s368, 128
      %s370 = sshra.s32 %s26, 7
      %s371 = sand.u32 %s26, 127
      %s372 = sadd.s32 %s369, %s371
      %s373 = sld [smem:[#allocation7 + %s372]]
      %p374 = scmp.lt.s32.totalorder %s24, 1
      %s375 = scalar_select %p374, %s24, 1
      %p376 = scmp.lt.s32.totalorder %s373, 0
      %s377 = scalar_select %p376, %s373, 0
      %s378 = smul.addr %s375, 4
      %s379 = sadd.s32 %s377, %s378
      %s380 = smul.addr %s379, 4
      %s381 = scalar_lea.vmem %s4, %s380
      %p382 = pneg %p149
      %p383 = pneg %p146
      %s384 = sshra.s32 %s26, 7
      %s385 = sand.u32 %s26, 127
      %s386 = sadd.s32 %s384, %s25
      %s387 = smul.u32 %s386, 128
      %s388 = sshra.s32 %s26, 7
      %s389 = sand.u32 %s26, 127
      %s390 = sadd.s32 %s387, %s389
      %s391 = sld [smem:[#allocation7 + %s390]]
      %p392 = scmp.lt.s32.totalorder %s25, 0
      %s393 = scalar_select %p392, %s25, 0
      %p394 = scmp.lt.s32.totalorder %s391, 0
      %s395 = scalar_select %p394, %s391, 0
      %s396 = sadd.s32 %s395, %s393
      %s397 = smul.addr %s396, 8
      %s398 = scalar_lea.vmem %s5, %s397
      %p399 = pneg %p193
      %p400 = pneg %p190
      %p401 = pneg %p221
      %p402 = pneg %p218
      %p403 = scmp.lt.s32.totalorder %s24, 1
      %s404 = scalar_select %p403, %s24, 1
      %p405 = scmp.lt.s32.totalorder %s25, 0
      %s406 = scalar_select %p405, %s25, 0
      %s407 = smul.addr %s404, 4
      %s408 = sadd.s32 %s406, %s407
      %s409 = smul.addr %s408, 4
      %s410 = scalar_lea.vmem %s6, %s409
      %p411 = scmp.lt.s32.totalorder %s24, 1
      %s412 = scalar_select %p411, %s24, 1
      %p413 = scmp.lt.s32.totalorder %s25, 0
      %s414 = scalar_select %p413, %s25, 0
      %s415 = smul.addr %s412, 4
      %s416 = sadd.s32 %s414, %s415
      %s417 = smul.addr %s416, 4
      %s418 = scalar_lea.vmem %s2, %s417
      %s419 = sshra.s32 %s26, 7
      %s420 = sand.u32 %s26, 127
      %s421 = sadd.s32 %s419, %s25
      %s422 = smul.u32 %s421, 128
      %s423 = sshra.s32 %s26, 7
      %s424 = sand.u32 %s26, 127
      %s425 = sadd.s32 %s422, %s424
      %s426 = sld [smem:[#allocation7 + %s425]]
      %p427 = scmp.lt.s32.totalorder %s24, 1
      %s428 = scalar_select %p427, %s24, 1
      %p429 = scmp.lt.s32.totalorder %s426, 0
      %s430 = scalar_select %p429, %s426, 0
      %s431 = smul.addr %s428, 4
      %s432 = sadd.s32 %s430, %s431
      %s433 = smul.addr %s432, 4
      %s434 = scalar_lea.vmem %s3, %s433
      %s435 = sshra.s32 %s26, 7
      %s436 = sand.u32 %s26, 127
      %s437 = sadd.s32 %s435, %s25
      %s438 = smul.u32 %s437, 128
      %s439 = sshra.s32 %s26, 7
      %s440 = sand.u32 %s26, 127
      %s441 = sadd.s32 %s438, %s440
      %s442 = sld [smem:[#allocation7 + %s441]]
      %s443 = sshra.s32 %s26, 7
      %s444 = sand.u32 %s26, 127
      %s445 = sadd.s32 %s443, %s25
      %s446 = smul.u32 %s445, 128
      %s447 = sshra.s32 %s26, 7
      %s448 = sand.u32 %s26, 127
      %s449 = sadd.s32 %s446, %s448
      %s450 = sld [smem:[#allocation7 + %s449]]
      %p451 = scmp.lt.s32.totalorder %s24, 1
      %s452 = scalar_select %p451, %s24, 1
      %p453 = scmp.lt.s32.totalorder %s450, 0
      %s454 = scalar_select %p453, %s450, 0
      %s455 = smul.addr %s452, 4
      %s456 = sadd.s32 %s454, %s455
      %s457 = smul.addr %s456, 4
      %s458 = scalar_lea.vmem %s4, %s457
      %s459 = sshra.s32 %s26, 7
      %s460 = sand.u32 %s26, 127
      %s461 = sadd.s32 %s459, %s25
      %s462 = smul.u32 %s461, 128
      %s463 = sshra.s32 %s26, 7
      %s464 = sand.u32 %s26, 127
      %s465 = sadd.s32 %s462, %s464
      %s466 = sld [smem:[#allocation7 + %s465]]
      %s467 = sshra.s32 %s26, 7
      %s468 = sand.u32 %s26, 127
      %s469 = sadd.s32 %s467, %s25
      %s470 = smul.u32 %s469, 128
      %s471 = sshra.s32 %s26, 7
      %s472 = sand.u32 %s26, 127
      %s473 = sadd.s32 %s470, %s472
      %s474 = sld [smem:[#allocation7 + %s473]]
      %p475 = scmp.lt.s32.totalorder %s25, 0
      %s476 = scalar_select %p475, %s25, 0
      %p477 = scmp.lt.s32.totalorder %s474, 0
      %s478 = scalar_select %p477, %s474, 0
      %s479 = sadd.s32 %s478, %s476
      %s480 = smul.addr %s479, 8
      %s481 = scalar_lea.vmem %s5, %s480
      %s482 = sshra.s32 %s26, 7
      %s483 = sand.u32 %s26, 127
      %s484 = sadd.s32 %s482, %s25
      %s485 = smul.u32 %s484, 128
      %s486 = sshra.s32 %s26, 7
      %s487 = sand.u32 %s26, 127
      %s488 = sadd.s32 %s485, %s487
      %s489 = sld [smem:[#allocation7 + %s488]]
      %p490 = scmp.lt.s32.totalorder %s24, 1
      %s491 = scalar_select %p490, %s24, 1
      %p492 = scmp.lt.s32.totalorder %s25, 0
      %s493 = scalar_select %p492, %s25, 0
      %s494 = smul.addr %s491, 4
      %s495 = sadd.s32 %s493, %s494
      %s496 = smul.addr %s495, 4
      %s497 = scalar_lea.vmem %s6, %s496
      %p499 = scmp.eq.s32.totalorder %s26, 0
      // Predicated region
      $region37: #{run.14} parent=35 // pred_check
        %p500 = pneg %p499
      $region38: #{run.14} parent=35 // pred_check_branch
        %502 = sbr.rel (%p500) target = $region40
      $region39: #{run.14} parent=35 // pred_region
        %vm503 = vcmask 7168
        %504 = vst.msk [vmem:[#allocation2] sm:$0xff] %vm503, -1e+30
        %505 = vst.msk [vmem:[#allocation2 + $0x8] sm:$0xff] %vm503, -1e+30
        %506 = vst.msk [vmem:[#allocation2 + $0x10] sm:$0xff] %vm503, -1e+30
        %507 = vst.msk [vmem:[#allocation2 + $0x18] sm:$0xff] %vm503, -1e+30
        %508 = vst.msk [vmem:[#allocation3] sm:$0xff] %vm503, 0.0
        %509 = vst.msk [vmem:[#allocation3 + $0x8] sm:$0xff] %vm503, 0.0
        %510 = vst.msk [vmem:[#allocation3 + $0x10] sm:$0xff] %vm503, 0.0
        %511 = vst.msk [vmem:[#allocation3 + $0x18] sm:$0xff] %vm503, 0.0
        %vm512 = vcmask 261120
        %513 = vst.msk [vmem:[#allocation4] sm:$0xff] %vm512, 0.0
        %514 = vst.msk [vmem:[#allocation4 + $0x8] sm:$0xff] %vm512, 0.0
        %515 = vst.msk [vmem:[#allocation4 + $0x10] sm:$0xff] %vm512, 0.0
        %516 = vst.msk [vmem:[#allocation4 + $0x18] sm:$0xff] %vm512, 0.0
      $region40: #{run.14} parent=35 // pred_fallthru
        _
      %s517 = sshra.s32 %s26, 7
      %s518 = sand.u32 %s26, 127
      %s519 = sadd.s32 %s517, %s25
      %s520 = smul.u32 %s519, 128
      %s521 = sshra.s32 %s26, 7
      %s522 = sand.u32 %s26, 127
      %s523 = sadd.s32 %s520, %s522
      %s524 = sld [smem:[#allocation6 + %s523]]
      %p525 = scmp.gt.s32.totalorder %s524, 0
      // Predicated region
      $region41: #{run.14} parent=35 // pred_check
        %p526 = pneg %p525
      $region42: #{run.14} parent=35 // pred_check_branch
        %528 = sbr.rel (%p526) target = $region44
      $region43: #{run.14} parent=35 // pred_region
        %v529 = vld [vmem:[%s418] sm:$0xf]
        %v530 = vld [vmem:[%s418 + $0x4] sm:$0xf]
        %v531 = vld [vmem:[%s418 + $0x8] sm:$0xf]
        %v532 = vld [vmem:[%s418 + $0xc] sm:$0xf]
        %v533 = vld [vmem:[%s434] sm:$0xf]
        %v534 = vld [vmem:[%s434 + $0x4] sm:$0xf]
        %v535 = vld [vmem:[%s434 + $0x8] sm:$0xf]
        %v536 = vld [vmem:[%s434 + $0xc] sm:$0xf]
        %v537 = vld [vmem:[%s458] sm:$0xf]
        %v538 = vld [vmem:[%s458 + $0x4] sm:$0xf]
        %v539 = vld [vmem:[%s458 + $0x8] sm:$0xf]
        %v540 = vld [vmem:[%s458 + $0xc] sm:$0xf]
        %vm541 = vcmask 261120
        %v543 = vsel %vm541, %v529, 0
        %v546 = vsel %vm541, %v533, 0
        %548 = vmatprep.subr.bf16.mxu0 0
        %549 = vmatpush1.bf16.xpose.msra.mxu0 %v546
        %550 = vmatprep.subr.bf16.mxu0 0
        %551 = vmatpush1.bf16.xpose.msra.mxu0 0
        %552 = vmatprep.subr.bf16.mxu0 0
        %553 = vmatpush1.bf16.xpose.msra.mxu0 0
        %554 = vmatprep.subr.bf16.mxu0 0
        %555 = vmatpush1.bf16.xpose.msra.mxu0 0
        %556 = vmatprep.subr.bf16.mxu0 0
        %557 = vmatpush1.bf16.xpose.msra.mxu0 0
        %558 = vmatprep.subr.bf16.mxu0 0
        %559 = vmatpush1.bf16.xpose.msra.mxu0 0
        %560 = vmatprep.subr.bf16.mxu0 0
        %561 = vmatpush1.bf16.xpose.msra.mxu0 0
        %562 = vmatprep.subr.bf16.mxu0 0
        %563 = vmatpush1.bf16.xpose.msra.mxu0 0
        %564 = vmatprep.subr.bf16.mxu0 0
        %565 = vmatpush1.bf16.xpose.msra.mxu0 0
        %566 = vmatprep.subr.bf16.mxu0 0
        %567 = vmatpush1.bf16.xpose.msra.mxu0 0
        %568 = vmatprep.subr.bf16.mxu0 0
        %569 = vmatpush1.bf16.xpose.msra.mxu0 0
        %570 = vmatprep.subr.bf16.mxu0 0
        %571 = vmatpush1.bf16.xpose.msra.mxu0 0
        %572 = vmatprep.subr.bf16.mxu0 0
        %573 = vmatpush1.bf16.xpose.msra.mxu0 0
        %574 = vmatprep.subr.bf16.mxu0 0
        %575 = vmatpush1.bf16.xpose.msra.mxu0 0
        %576 = vmatprep.subr.bf16.mxu0 0
        %577 = vmatpush1.bf16.xpose.msra.mxu0 0
        %578 = vmatprep.subr.bf16.mxu0 0
        %579 = vmatpush1.bf16.xpose.msra.mxu0 0
        %580 = vmatprep.mubr.bf16.mxu0 0
        %581 = vmatmul.mubr.bf16.gmra.mrb[0].mxu0 %v543
        %v582 = vpop.f32.mrb[0].mxu0
        %v583 = vadd.f32 0.0, %v582
        %v584 = vpop.f32.mrb[0].mxu0
        %v585 = vpop.f32.mrb[0].mxu0
        %v586 = vpop.f32.mrb[0].mxu0
        %587 = vdwg.mxu0
        %v589 = vsel %vm541, %v530, 0
        %v592 = vsel %vm541, %v534, 0
        %594 = vmatprep.subr.bf16.mxu0 0
        %595 = vmatpush1.bf16.xpose.msra.mxu0 %v592
        %596 = vmatprep.subr.bf16.mxu0 0
        %597 = vmatpush1.bf16.xpose.msra.mxu0 0
        %598 = vmatprep.subr.bf16.mxu0 0
        %599 = vmatpush1.bf16.xpose.msra.mxu0 0
        %600 = vmatprep.subr.bf16.mxu0 0
        %601 = vmatpush1.bf16.xpose.msra.mxu0 0
        %602 = vmatprep.subr.bf16.mxu0 0
        %603 = vmatpush1.bf16.xpose.msra.mxu0 0
        %604 = vmatprep.subr.bf16.mxu0 0
        %605 = vmatpush1.bf16.xpose.msra.mxu0 0
        %606 = vmatprep.subr.bf16.mxu0 0
        %607 = vmatpush1.bf16.xpose.msra.mxu0 0
        %608 = vmatprep.subr.bf16.mxu0 0
        %609 = vmatpush1.bf16.xpose.msra.mxu0 0
        %610 = vmatprep.subr.bf16.mxu0 0
        %611 = vmatpush1.bf16.xpose.msra.mxu0 0
        %612 = vmatprep.subr.bf16.mxu0 0
        %613 = vmatpush1.bf16.xpose.msra.mxu0 0
        %614 = vmatprep.subr.bf16.mxu0 0
        %615 = vmatpush1.bf16.xpose.msra.mxu0 0
        %616 = vmatprep.subr.bf16.mxu0 0
        %617 = vmatpush1.bf16.xpose.msra.mxu0 0
        %618 = vmatprep.subr.bf16.mxu0 0
        %619 = vmatpush1.bf16.xpose.msra.mxu0 0
        %620 = vmatprep.subr.bf16.mxu0 0
        %621 = vmatpush1.bf16.xpose.msra.mxu0 0
        %622 = vmatprep.subr.bf16.mxu0 0
        %623 = vmatpush1.bf16.xpose.msra.mxu0 0
        %624 = vmatprep.subr.bf16.mxu0 0
        %625 = vmatpush1.bf16.xpose.msra.mxu0 0
        %626 = vmatprep.mubr.bf16.mxu0 0
        %627 = vmatmul.mubr.bf16.gmra.mrb[0].mxu0 %v589
        %v628 = vpop.f32.mrb[0].mxu0
        %v629 = vadd.f32 0.0, %v628
        %v630 = vpop.f32.mrb[0].mxu0
        %v631 = vpop.f32.mrb[0].mxu0
        %v632 = vpop.f32.mrb[0].mxu0
        %633 = vdwg.mxu0
        %v635 = vsel %vm541, %v531, 0
        %v638 = vsel %vm541, %v535, 0
        %640 = vmatprep.subr.bf16.mxu0 0
        %641 = vmatpush1.bf16.xpose.msra.mxu0 %v638
        %642 = vmatprep.subr.bf16.mxu0 0
        %643 = vmatpush1.bf16.xpose.msra.mxu0 0
        %644 = vmatprep.subr.bf16.mxu0 0
        %645 = vmatpush1.bf16.xpose.msra.mxu0 0
        %646 = vmatprep.subr.bf16.mxu0 0
        %647 = vmatpush1.bf16.xpose.msra.mxu0 0
        %648 = vmatprep.subr.bf16.mxu0 0
        %649 = vmatpush1.bf16.xpose.msra.mxu0 0
        %650 = vmatprep.subr.bf16.mxu0 0
        %651 = vmatpush1.bf16.xpose.msra.mxu0 0
        %652 = vmatprep.subr.bf16.mxu0 0
        %653 = vmatpush1.bf16.xpose.msra.mxu0 0
        %654 = vmatprep.subr.bf16.mxu0 0
        %655 = vmatpush1.bf16.xpose.msra.mxu0 0
        %656 = vmatprep.subr.bf16.mxu0 0
        %657 = vmatpush1.bf16.xpose.msra.mxu0 0
        %658 = vmatprep.subr.bf16.mxu0 0
        %659 = vmatpush1.bf16.xpose.msra.mxu0 0
        %660 = vmatprep.subr.bf16.mxu0 0
        %661 = vmatpush1.bf16.xpose.msra.mxu0 0
        %662 = vmatprep.subr.bf16.mxu0 0
        %663 = vmatpush1.bf16.xpose.msra.mxu0 0
        %664 = vmatprep.subr.bf16.mxu0 0
        %665 = vmatpush1.bf16.xpose.msra.mxu0 0
        %666 = vmatprep.subr.bf16.mxu0 0
        %667 = vmatpush1.bf16.xpose.msra.mxu0 0
        %668 = vmatprep.subr.bf16.mxu0 0
        %669 = vmatpush1.bf16.xpose.msra.mxu0 0
        %670 = vmatprep.subr.bf16.mxu0 0
        %671 = vmatpush1.bf16.xpose.msra.mxu0 0
        %672 = vmatprep.mubr.bf16.mxu0 0
        %673 = vmatmul.mubr.bf16.gmra.mrb[0].mxu0 %v635
        %v674 = vpop.f32.mrb[0].mxu0
        %v675 = vadd.f32 0.0, %v674
        %v676 = vpop.f32.mrb[0].mxu0
        %v677 = vpop.f32.mrb[0].mxu0
        %v678 = vpop.f32.mrb[0].mxu0
        %679 = vdwg.mxu0
        %v681 = vsel %vm541, %v532, 0
        %v684 = vsel %vm541, %v536, 0
        %686 = vmatprep.subr.bf16.mxu0 0
        %687 = vmatpush1.bf16.xpose.msra.mxu0 %v684
        %688 = vmatprep.subr.bf16.mxu0 0
        %689 = vmatpush1.bf16.xpose.msra.mxu0 0
        %690 = vmatprep.subr.bf16.mxu0 0
        %691 = vmatpush1.bf16.xpose.msra.mxu0 0
        %692 = vmatprep.subr.bf16.mxu0 0
        %693 = vmatpush1.bf16.xpose.msra.mxu0 0
        %694 = vmatprep.subr.bf16.mxu0 0
        %695 = vmatpush1.bf16.xpose.msra.mxu0 0
        %696 = vmatprep.subr.bf16.mxu0 0
        %697 = vmatpush1.bf16.xpose.msra.mxu0 0
        %698 = vmatprep.subr.bf16.mxu0 0
        %699 = vmatpush1.bf16.xpose.msra.mxu0 0
        %700 = vmatprep.subr.bf16.mxu0 0
        %701 = vmatpush1.bf16.xpose.msra.mxu0 0
        %702 = vmatprep.subr.bf16.mxu0 0
        %703 = vmatpush1.bf16.xpose.msra.mxu0 0
        %704 = vmatprep.subr.bf16.mxu0 0
        %705 = vmatpush1.bf16.xpose.msra.mxu0 0
        %706 = vmatprep.subr.bf16.mxu0 0
        %707 = vmatpush1.bf16.xpose.msra.mxu0 0
        %708 = vmatprep.subr.bf16.mxu0 0
        %709 = vmatpush1.bf16.xpose.msra.mxu0 0
        %710 = vmatprep.subr.bf16.mxu0 0
        %711 = vmatpush1.bf16.xpose.msra.mxu0 0
        %712 = vmatprep.subr.bf16.mxu0 0
        %713 = vmatpush1.bf16.xpose.msra.mxu0 0
        %714 = vmatprep.subr.bf16.mxu0 0
        %715 = vmatpush1.bf16.xpose.msra.mxu0 0
        %716 = vmatprep.subr.bf16.mxu0 0
        %717 = vmatpush1.bf16.xpose.msra.mxu0 0
        %718 = vmatprep.mubr.bf16.mxu0 0
        %719 = vmatmul.mubr.bf16.gmra.mrb[0].mxu0 %v681
        %v720 = vpop.f32.mrb[0].mxu0
        %v721 = vadd.f32 0.0, %v720
        %v722 = vpop.f32.mrb[0].mxu0
        %v723 = vpop.f32.mrb[0].mxu0
        %v724 = vpop.f32.mrb[0].mxu0
        %725 = vdwg.mxu0
        %v726 = vmul.f32 %v583, 0.17677669
        %v727 = vmul.f32 %v629, 0.17677669
        %v728 = vmul.f32 %v675, 0.17677669
        %v729 = vmul.f32 %v721, 0.17677669
        %v730 = vld [vmem:[%s481] sm:$0xff]
        %v731 = vadd.f32 %v726, %v730
        %v732 = vadd.f32 %v727, %v730
        %v733 = vadd.f32 %v728, %v730
        %v734 = vadd.f32 %v729, %v730
        %v735 = vld [vmem:[#allocation2] sm:$0xff]
        %v736 = vld [vmem:[#allocation2 + $0x8] sm:$0xff]
        %v737 = vld [vmem:[#allocation2 + $0x10] sm:$0xff]
        %v738 = vld [vmem:[#allocation2 + $0x18] sm:$0xff]
        %vm739 = vcmask 64512
        %v740 = vsel %vm739, %v731, -inf
        %741 = vmax.xlane.f32.xlu0 %v740
        %v742 = vpop.xlane.xlu0 %741
        %v743 = vsel %vm739, %v732, -inf
        %744 = vmax.xlane.f32.xlu0 %v743
        %v745 = vpop.xlane.xlu0 %744
        %v746 = vsel %vm739, %v733, -inf
        %747 = vmax.xlane.f32.xlu0 %v746
        %v748 = vpop.xlane.xlu0 %747
        %v749 = vsel %vm739, %v734, -inf
        %750 = vmax.xlane.f32.xlu0 %v749
        %v751 = vpop.xlane.xlu0 %750
        %v752 = vmax.f32 %v735, %v742
        %v753 = vmax.f32 %v736, %v745
        %v754 = vmax.f32 %v737, %v748
        %v755 = vmax.f32 %v738, %v751
        %v756 = vsub.f32 %v735, %v752
        %v757 = vsub.f32 %v736, %v753
        %v758 = vsub.f32 %v737, %v754
        %v759 = vsub.f32 %v738, %v755
        %v760 = vmul.f32 %v756, 1.442695
        %v761 = vpow.pop %v760
        %v762 = vmul.f32 %v757, 1.442695
        %v763 = vpow.pop %v762
        %v764 = vmul.f32 %v758, 1.442695
        %v765 = vpow.pop %v764
        %v766 = vmul.f32 %v759, 1.442695
        %v767 = vpow.pop %v766
        %769 = vset.pattern.permute.xlu0 0
        %770 = vperm.xlu0 %769, %v752
        %v771 = vpop.permute.xlu0 %770
        %774 = vset.pattern.permute.xlu0 0
        %775 = vperm.xlu0 %774, %v753
        %v776 = vpop.permute.xlu0 %775
        %779 = vset.pattern.permute.xlu0 0
        %780 = vperm.xlu0 %779, %v754
        %v781 = vpop.permute.xlu0 %780
        %784 = vset.pattern.permute.xlu0 0
        %785 = vperm.xlu0 %784, %v755
        %v786 = vpop.permute.xlu0 %785
        %v788 = vsub.f32 %v731, %v771
        %v789 = vsub.f32 %v732, %v776
        %v790 = vsub.f32 %v733, %v781
        %v791 = vsub.f32 %v734, %v786
        %v792 = vmul.f32 %v788, 1.442695
        %v793 = vpow.pop %v792
        %v794 = vmul.f32 %v789, 1.442695
        %v795 = vpow.pop %v794
        %v796 = vmul.f32 %v790, 1.442695
        %v797 = vpow.pop %v796
        %v798 = vmul.f32 %v791, 1.442695
        %v799 = vpow.pop %v798
        %v800 = vld [vmem:[#allocation3] sm:$0xff]
        %v801 = vld [vmem:[#allocation3 + $0x8] sm:$0xff]
        %v802 = vld [vmem:[#allocation3 + $0x10] sm:$0xff]
        %v803 = vld [vmem:[#allocation3 + $0x18] sm:$0xff]
        %v804 = vmul.f32 %v761, %v800
        %v805 = vmul.f32 %v763, %v801
        %v806 = vmul.f32 %v765, %v802
        %v807 = vmul.f32 %v767, %v803
        %v808 = vsel %vm739, %v793, 0.0
        %809 = vadd.xlane.f32.xlu0 %v808
        %v810 = vpop.xlane.xlu0 %809
        %v811 = vsel %vm739, %v795, 0.0
        %812 = vadd.xlane.f32.xlu0 %v811
        %v813 = vpop.xlane.xlu0 %812
        %v814 = vsel %vm739, %v797, 0.0
        %815 = vadd.xlane.f32.xlu0 %v814
        %v816 = vpop.xlane.xlu0 %815
        %v817 = vsel %vm739, %v799, 0.0
        %818 = vadd.xlane.f32.xlu0 %v817
        %v819 = vpop.xlane.xlu0 %818
        %v820 = vadd.f32 %v804, %v810
        %v821 = vadd.f32 %v805, %v813
        %v822 = vadd.f32 %v806, %v816
        %v823 = vadd.f32 %v807, %v819
        %vm824 = vcmask 7168
        %825 = vst.msk [vmem:[#allocation3] sm:$0xff] %vm824, %v820
        %826 = vst.msk [vmem:[#allocation3 + $0x8] sm:$0xff] %vm824, %v821
        %827 = vst.msk [vmem:[#allocation3 + $0x10] sm:$0xff] %vm824, %v822
        %828 = vst.msk [vmem:[#allocation3 + $0x18] sm:$0xff] %vm824, %v823
        %v829 = vld [vmem:[#allocation4] sm:$0xff]
        %v830 = vld [vmem:[#allocation4 + $0x8] sm:$0xff]
        %v831 = vld [vmem:[#allocation4 + $0x10] sm:$0xff]
        %v832 = vld [vmem:[#allocation4 + $0x18] sm:$0xff]
        %834 = vset.pattern.permute.xlu0 0
        %835 = vperm.xlu0 %834, %v761
        %v836 = vpop.permute.xlu0 %835
        %839 = vset.pattern.permute.xlu0 0
        %840 = vperm.xlu0 %839, %v763
        %v841 = vpop.permute.xlu0 %840
        %844 = vset.pattern.permute.xlu0 0
        %845 = vperm.xlu0 %844, %v765
        %v846 = vpop.permute.xlu0 %845
        %849 = vset.pattern.permute.xlu0 0
        %850 = vperm.xlu0 %849, %v767
        %v851 = vpop.permute.xlu0 %850
        %v853 = vmul.f32 %v836, %v829
        %v854 = vmul.f32 %v841, %v830
        %v855 = vmul.f32 %v846, %v831
        %v856 = vmul.f32 %v851, %v832
        %v857 = vpack.c.bf16 %v793, %v793
        %v858 = vpack.c.bf16 %v795, %v795
        %v859 = vpack.c.bf16 %v797, %v797
        %v860 = vpack.c.bf16 %v799, %v799
        %v862 = vsel %vm739, %v857, 0
        %vm864 = vcmask 1043456
        %v866 = vsel %vm864, %v537, 0
        %868 = vmatprep.subr.bf16.mxu0 0
        %869 = vmatpush1.bf16.msra.mxu0 %v866
        %870 = vmatprep.subr.bf16.mxu0 0
        %871 = vmatpush1.bf16.msra.mxu0 0
        %872 = vmatprep.subr.bf16.mxu0 0
        %873 = vmatpush1.bf16.msra.mxu0 0
        %874 = vmatprep.subr.bf16.mxu0 0
        %875 = vmatpush1.bf16.msra.mxu0 0
        %876 = vmatprep.subr.bf16.mxu0 0
        %877 = vmatpush1.bf16.msra.mxu0 0
        %878 = vmatprep.subr.bf16.mxu0 0
        %879 = vmatpush1.bf16.msra.mxu0 0
        %880 = vmatprep.subr.bf16.mxu0 0
        %881 = vmatpush1.bf16.msra.mxu0 0
        %882 = vmatprep.subr.bf16.mxu0 0
        %883 = vmatpush1.bf16.msra.mxu0 0
        %884 = vmatprep.subr.bf16.mxu0 0
        %885 = vmatpush1.bf16.msra.mxu0 0
        %886 = vmatprep.subr.bf16.mxu0 0
        %887 = vmatpush1.bf16.msra.mxu0 0
        %888 = vmatprep.subr.bf16.mxu0 0
        %889 = vmatpush1.bf16.msra.mxu0 0
        %890 = vmatprep.subr.bf16.mxu0 0
        %891 = vmatpush1.bf16.msra.mxu0 0
        %892 = vmatprep.subr.bf16.mxu0 0
        %893 = vmatpush1.bf16.msra.mxu0 0
        %894 = vmatprep.subr.bf16.mxu0 0
        %895 = vmatpush1.bf16.msra.mxu0 0
        %896 = vmatprep.subr.bf16.mxu0 0
        %897 = vmatpush1.bf16.msra.mxu0 0
        %898 = vmatprep.subr.bf16.mxu0 0
        %899 = vmatpush1.bf16.msra.mxu0 0
        %900 = vmatprep.mubr.bf16.mxu0 0
        %901 = vmatmul.mubr.bf16.gmra.mrb[0].mxu0 %v862
        %v902 = vpop.f32.mrb[0].mxu0
        %v903 = vadd.f32 0.0, %v902
        %v904 = vpop.f32.mrb[0].mxu0
        %v905 = vpop.f32.mrb[0].mxu0
        %v906 = vpop.f32.mrb[0].mxu0
        %907 = vdwg.mxu0
        %v909 = vsel %vm739, %v858, 0
        %v912 = vsel %vm864, %v538, 0
        %914 = vmatprep.subr.bf16.mxu0 0
        %915 = vmatpush1.bf16.msra.mxu0 %v912
        %916 = vmatprep.subr.bf16.mxu0 0
        %917 = vmatpush1.bf16.msra.mxu0 0
        %918 = vmatprep.subr.bf16.mxu0 0
        %919 = vmatpush1.bf16.msra.mxu0 0
        %920 = vmatprep.subr.bf16.mxu0 0
        %921 = vmatpush1.bf16.msra.mxu0 0
        %922 = vmatprep.subr.bf16.mxu0 0
        %923 = vmatpush1.bf16.msra.mxu0 0
        %924 = vmatprep.subr.bf16.mxu0 0
        %925 = vmatpush1.bf16.msra.mxu0 0
        %926 = vmatprep.subr.bf16.mxu0 0
        %927 = vmatpush1.bf16.msra.mxu0 0
        %928 = vmatprep.subr.bf16.mxu0 0
        %929 = vmatpush1.bf16.msra.mxu0 0
        %930 = vmatprep.subr.bf16.mxu0 0
        %931 = vmatpush1.bf16.msra.mxu0 0
        %932 = vmatprep.subr.bf16.mxu0 0
        %933 = vmatpush1.bf16.msra.mxu0 0
        %934 = vmatprep.subr.bf16.mxu0 0
        %935 = vmatpush1.bf16.msra.mxu0 0
        %936 = vmatprep.subr.bf16.mxu0 0
        %937 = vmatpush1.bf16.msra.mxu0 0
        %938 = vmatprep.subr.bf16.mxu0 0
        %939 = vmatpush1.bf16.msra.mxu0 0
        %940 = vmatprep.subr.bf16.mxu0 0
        %941 = vmatpush1.bf16.msra.mxu0 0
        %942 = vmatprep.subr.bf16.mxu0 0
        %943 = vmatpush1.bf16.msra.mxu0 0
        %944 = vmatprep.subr.bf16.mxu0 0
        %945 = vmatpush1.bf16.msra.mxu0 0
        %946 = vmatprep.mubr.bf16.mxu0 0
        %947 = vmatmul.mubr.bf16.gmra.mrb[0].mxu0 %v909
        %v948 = vpop.f32.mrb[0].mxu0
        %v949 = vadd.f32 0.0, %v948
        %v950 = vpop.f32.mrb[0].mxu0
        %v951 = vpop.f32.mrb[0].mxu0
        %v952 = vpop.f32.mrb[0].mxu0
        %953 = vdwg.mxu0
        %v955 = vsel %vm739, %v859, 0
        %v958 = vsel %vm864, %v539, 0
        %960 = vmatprep.subr.bf16.mxu0 0
        %961 = vmatpush1.bf16.msra.mxu0 %v958
        %962 = vmatprep.subr.bf16.mxu0 0
        %963 = vmatpush1.bf16.msra.mxu0 0
        %964 = vmatprep.subr.bf16.mxu0 0
        %965 = vmatpush1.bf16.msra.mxu0 0
        %966 = vmatprep.subr.bf16.mxu0 0
        %967 = vmatpush1.bf16.msra.mxu0 0
        %968 = vmatprep.subr.bf16.mxu0 0
        %969 = vmatpush1.bf16.msra.mxu0 0
        %970 = vmatprep.subr.bf16.mxu0 0
        %971 = vmatpush1.bf16.msra.mxu0 0
        %972 = vmatprep.subr.bf16.mxu0 0
        %973 = vmatpush1.bf16.msra.mxu0 0
        %974 = vmatprep.subr.bf16.mxu0 0
        %975 = vmatpush1.bf16.msra.mxu0 0
        %976 = vmatprep.subr.bf16.mxu0 0
        %977 = vmatpush1.bf16.msra.mxu0 0
        %978 = vmatprep.subr.bf16.mxu0 0
        %979 = vmatpush1.bf16.msra.mxu0 0
        %980 = vmatprep.subr.bf16.mxu0 0
        %981 = vmatpush1.bf16.msra.mxu0 0
        %982 = vmatprep.subr.bf16.mxu0 0
        %983 = vmatpush1.bf16.msra.mxu0 0
        %984 = vmatprep.subr.bf16.mxu0 0
        %985 = vmatpush1.bf16.msra.mxu0 0
        %986 = vmatprep.subr.bf16.mxu0 0
        %987 = vmatpush1.bf16.msra.mxu0 0
        %988 = vmatprep.subr.bf16.mxu0 0
        %989 = vmatpush1.bf16.msra.mxu0 0
        %990 = vmatprep.subr.bf16.mxu0 0
        %991 = vmatpush1.bf16.msra.mxu0 0
        %992 = vmatprep.mubr.bf16.mxu0 0
        %993 = vmatmul.mubr.bf16.gmra.mrb[0].mxu0 %v955
        %v994 = vpop.f32.mrb[0].mxu0
        %v995 = vadd.f32 0.0, %v994
        %v996 = vpop.f32.mrb[0].mxu0
        %v997 = vpop.f32.mrb[0].mxu0
        %v998 = vpop.f32.mrb[0].mxu0
        %999 = vdwg.mxu0
        %v1001 = vsel %vm739, %v860, 0
        %v1004 = vsel %vm864, %v540, 0
        %1006 = vmatprep.subr.bf16.mxu0 0
        %1007 = vmatpush1.bf16.msra.mxu0 %v1004
        %1008 = vmatprep.subr.bf16.mxu0 0
        %1009 = vmatpush1.bf16.msra.mxu0 0
        %1010 = vmatprep.subr.bf16.mxu0 0
        %1011 = vmatpush1.bf16.msra.mxu0 0
        %1012 = vmatprep.subr.bf16.mxu0 0
        %1013 = vmatpush1.bf16.msra.mxu0 0
        %1014 = vmatprep.subr.bf16.mxu0 0
        %1015 = vmatpush1.bf16.msra.mxu0 0
        %1016 = vmatprep.subr.bf16.mxu0 0
        %1017 = vmatpush1.bf16.msra.mxu0 0
        %1018 = vmatprep.subr.bf16.mxu0 0
        %1019 = vmatpush1.bf16.msra.mxu0 0
        %1020 = vmatprep.subr.bf16.mxu0 0
        %1021 = vmatpush1.bf16.msra.mxu0 0
        %1022 = vmatprep.subr.bf16.mxu0 0
        %1023 = vmatpush1.bf16.msra.mxu0 0
        %1024 = vmatprep.subr.bf16.mxu0 0
        %1025 = vmatpush1.bf16.msra.mxu0 0
        %1026 = vmatprep.subr.bf16.mxu0 0
        %1027 = vmatpush1.bf16.msra.mxu0 0
        %1028 = vmatprep.subr.bf16.mxu0 0
        %1029 = vmatpush1.bf16.msra.mxu0 0
        %1030 = vmatprep.subr.bf16.mxu0 0
        %1031 = vmatpush1.bf16.msra.mxu0 0
        %1032 = vmatprep.subr.bf16.mxu0 0
        %1033 = vmatpush1.bf16.msra.mxu0 0
        %1034 = vmatprep.subr.bf16.mxu0 0
        %1035 = vmatpush1.bf16.msra.mxu0 0
        %1036 = vmatprep.subr.bf16.mxu0 0
        %1037 = vmatpush1.bf16.msra.mxu0 0
        %1038 = vmatprep.mubr.bf16.mxu0 0
        %1039 = vmatmul.mubr.bf16.gmra.mrb[0].mxu0 %v1001
        %v1040 = vpop.f32.mrb[0].mxu0
        %v1041 = vadd.f32 0.0, %v1040
        %v1042 = vpop.f32.mrb[0].mxu0
        %v1043 = vpop.f32.mrb[0].mxu0
        %v1044 = vpop.f32.mrb[0].mxu0
        %1045 = vdwg.mxu0
        %v1046 = vadd.f32 %v853, %v903
        %v1047 = vadd.f32 %v854, %v949
        %v1048 = vadd.f32 %v855, %v995
        %v1049 = vadd.f32 %v856, %v1041
        %1050 = vst.msk [vmem:[#allocation4] sm:$0xff] %vm541, %v1046
        %1051 = vst.msk [vmem:[#allocation4 + $0x8] sm:$0xff] %vm541, %v1047
        %1052 = vst.msk [vmem:[#allocation4 + $0x10] sm:$0xff] %vm541, %v1048
        %1053 = vst.msk [vmem:[#allocation4 + $0x18] sm:$0xff] %vm541, %v1049
        %1054 = vst.msk [vmem:[#allocation2] sm:$0xff] %vm824, %v752
        %1055 = vst.msk [vmem:[#allocation2 + $0x8] sm:$0xff] %vm824, %v753
        %1056 = vst.msk [vmem:[#allocation2 + $0x10] sm:$0xff] %vm824, %v754
        %1057 = vst.msk [vmem:[#allocation2 + $0x18] sm:$0xff] %vm824, %v755
      $region44: #{run.14} parent=35 // pred_fallthru
        _
      // Predicated region
      $region45: #{run.14} parent=35 // pred_check
        %p1058 = pneg %p499
      $region46: #{run.14} parent=35 // pred_check_branch
        %1060 = sbr.rel (%p1058) target = $region48
      $region47: #{run.14} parent=35 // pred_region
        %v1061 = vld [vmem:[#allocation4] sm:$0xff]
        %v1062 = vld [vmem:[#allocation4 + $0x8] sm:$0xff]
        %v1063 = vld [vmem:[#allocation4 + $0x10] sm:$0xff]
        %v1064 = vld [vmem:[#allocation4 + $0x18] sm:$0xff]
        %v1065 = vld [vmem:[#allocation3] sm:$0xff]
        %v1066 = vld [vmem:[#allocation3 + $0x8] sm:$0xff]
        %v1067 = vld [vmem:[#allocation3 + $0x10] sm:$0xff]
        %v1068 = vld [vmem:[#allocation3 + $0x18] sm:$0xff]
        %1070 = vset.pattern.permute.xlu0 0
        %1071 = vperm.xlu0 %1070, %v1065
        %v1072 = vpop.permute.xlu0 %1071
        %1075 = vset.pattern.permute.xlu0 0
        %1076 = vperm.xlu0 %1075, %v1066
        %v1077 = vpop.permute.xlu0 %1076
        %1080 = vset.pattern.permute.xlu0 0
        %1081 = vperm.xlu0 %1080, %v1067
        %v1082 = vpop.permute.xlu0 %1081
        %1085 = vset.pattern.permute.xlu0 0
        %1086 = vperm.xlu0 %1085, %v1068
        %v1087 = vpop.permute.xlu0 %1086
        %v1089 = vrcp.pop %v1072
        %v1090 = vmul.f32 %v1061, %v1089
        %v1091 = vrcp.pop %v1077
        %v1092 = vmul.f32 %v1062, %v1091
        %v1093 = vrcp.pop %v1082
        %v1094 = vmul.f32 %v1063, %v1093
        %v1095 = vrcp.pop %v1087
        %v1096 = vmul.f32 %v1064, %v1095
        %v1097 = vpack.c.bf16 %v1090, %v1090
        %v1098 = vpack.c.bf16 %v1092, %v1092
        %v1099 = vpack.c.bf16 %v1094, %v1094
        %v1100 = vpack.c.bf16 %v1096, %v1096
        %vm1101 = vcmask 257024
        %1102 = vst.msk [vmem:[%s497] sm:$0xf] %vm1101, %v1097
        %1103 = vst.msk [vmem:[%s497 + $0x4] sm:$0xf] %vm1101, %v1098
        %1104 = vst.msk [vmem:[%s497 + $0x8] sm:$0xf] %vm1101, %v1099
        %1105 = vst.msk [vmem:[%s497 + $0xc] sm:$0xf] %vm1101, %v1100
      $region48: #{run.14} parent=35 // pred_fallthru
        _
      %p1106 = scmp.lt.s32.totalorder %s24, 1
      %s1107 = scalar_select %p1106, %s24, 1
      %p1108 = scmp.lt.s32.totalorder %s25, 0
      %s1109 = scalar_select %p1108, %s25, 0
      %s1110 = smul.addr %s1107, 4
      %s1111 = sadd.s32 %s1109, %s1110
      %s1112 = smul.addr %s1111, 4
      %s1113 = scalar_lea.vmem %s6, %s1112
      // Predicated region
      $region49: #{run.14} parent=35 // pred_check
        %p1114 = pneg %p218
      $region50: #{run.14} parent=35 // pred_check_branch
        %1116 = sbr.rel (%p1114) target = $region52
      $region51: #{run.14} parent=35 // pred_region
        _
      $region52: #{run.14} parent=35 // pred_fallthru
        _
    $region36: #{run.14} parent=5 // pred_fallthru
      _
    %p1117 = scmp.le.s32.totalorder 2, %s14
    // Predicated region
    $region53: #{run.14} parent=5 // pred_check
      %p1118 = pneg %p1117
    $region54: #{run.14} parent=5 // pred_check_branch
      %1120 = sbr.rel (%p1118) target = $region56
    $region55: #{run.14} parent=5 // pred_region
      %s1121 = ssub.s32 %s14, 2
      // Predicated region
      $region57: #{run.14} parent=55 // pred_check
        %p1122 = pneg %p224
      $region58: #{run.14} parent=55 // pred_check_branch
        %1124 = sbr.rel (%p1122) target = $region60
      $region59: #{run.14} parent=55 // pred_region
        %p1125 = scmp.lt.s32.totalorder %s27, 1
        %s1126 = scalar_select %p1125, %s27, 1
        %p1127 = scmp.lt.s32.totalorder %s28, 0
        %s1128 = scalar_select %p1127, %s28, 0
        %s1129 = smul.addr %s1126, 4
        %s1130 = sadd.s32 %s1128, %s1129
        %s1131 = smul.addr %s1130, 4
        %s1132 = scalar_lea.vmem %s6, %s1131
      $region60: #{run.14} parent=55 // pred_fallthru
        _
    $region56: #{run.14} parent=5 // pred_fallthru
      _
  $region6: #{run.14} parent=0 // loop_footer
    %s18 = sadd.s32 1, %s14
  $region7: #{run.14} parent=0 // loop_footer_branch
    %13 = sbr.rel target = $region3
  $region8: #{run.14} parent=0 // loop_exit
    _

// kernel: run.16
$region0: #{run.16}
  #allocation0 [shape = 'u32[]', space=smem, size = 0x4, offset = 0x4, fixed_abs, tag = 'smem constant byte address 0x4 - core index']
  #allocation1 [shape = 'u32[144,128]{1,0:T(1,128)}', space=vmem, size = 0x12000, scoped, tag = 'internal scratch']
  #allocation2 [shape = 'f32[8,128]{1,0:T(8,128)}', space=vmem, size = 0x1000, scoped, tag = 'scratch operand']
  #allocation3 [shape = 'bf16[8,128]{1,0:T(8,128)(2,1)}', space=vmem, size = 0x800, scoped, tag = 'scratch operand']
  %s0 = inlined_call_operand.vmem [shape: f32[2,8,128], index: 0, kind: input, shape index: {}]
  %s1 = inlined_call_operand.vmem [shape: f32[2,1,128], index: 1, kind: input, shape index: {}]
  %s2 = inlined_call_operand.vmem [shape: f32[2,1,128], index: 2, kind: input, shape index: {}]
  %s3 = inlined_call_operand.vmem [shape: bf16[128,512], index: 3, kind: input, shape index: {}]
  %s4 = inlined_call_operand.vmem [shape: bf16[256,128], index: 4, kind: input, shape index: {}]
  %s5 = inlined_call_operand.vmem [shape: f32[2,1,128], index: 5, kind: input, shape index: {}]
  %s6 = inlined_call_operand.vmem [shape: f32[2,8,128], index: 6, kind: output, shape index: {}]
  %s7 = sld [smem:[#allocation0]]
  $region65: #{run.16} parent=0
    _
  %s9 = ssub.s32 1, %s7
  %s10 = scalar_select 0, %s9, %s7
  loop: start=0, step=1, limit=4
  $region2: #{run.16} parent=0 // loop_pre_header
    _
  $region3: #{run.16} parent=0 // loop_header
    %s12 = sphi 0, %s16
    %p13 = scmp.ge.s32.totalorder %s12, 4
    %s19 = sphi 0, %s38
    %s20 = sphi 0, %s34
    %s21 = sphi 0, %s30
    %s22 = sphi 0, %s19
    %s23 = sphi 0, %s20
    %s24 = sphi 0, %s21
    %s25 = sphi 0, %s22
    %s26 = sphi 0, %s23
    %s27 = sphi 0, %s24
    %s43 = sphi 0, %s45
    %s46 = sphi 0, %s43
    %s47 = sphi 0, %s46
    %s63 = sphi 0, %s47
    %s69 = sphi 0, %s71
    %s72 = sphi 0, %s69
    %s73 = sphi 0, %s72
    %s89 = sphi 0, %s73
    %s95 = sphi 0, %s97
    %s98 = sphi 0, %s95
    %s99 = sphi 0, %s98
    %s115 = sphi 0, %s99
    %s121 = sphi 0, %s123
    %s124 = sphi 0, %s121
    %s125 = sphi 0, %s124
    %s141 = sphi 0, %s125
    %s147 = sphi 0, %s149
    %s150 = sphi 0, %s147
    %s151 = sphi 0, %s150
    %s167 = sphi 0, %s151
    %s173 = sphi 0, %s175
    %s176 = sphi 0, %s173
    %s177 = sphi 0, %s176
    %s193 = sphi 0, %s177
    %s201 = sphi 0, %s203
    %s204 = sphi 0, %s201
    %s205 = sphi 0, %s204
    %s221 = sphi 0, %s205
  $region4: #{run.16} parent=0 // loop_header_branch
    %15 = sbr.rel (%p13) target = $region8
  $region5: #{run.16} parent=0 // loop_body
    %s17 = ssub.s32 %s12, 1
    %s18 = ssub.s32 %s12, 2
    %s28 = sadd.s32 1, %s21
    %p29 = scmp.ge.s32.totalorder %s28, 1
    %s30 = scalar_select %p29, 0, %s28
    %s31 = sadd.s32 1, %s20
    %s32 = scalar_select %p29, %s31, %s20
    %p33 = scmp.ge.s32.totalorder %s32, 1
    %s34 = scalar_select %p33, 0, %s32
    %s35 = sadd.s32 1, %s19
    %s36 = scalar_select %p33, %s35, %s19
    %p37 = scmp.ge.s32.totalorder %s36, 2
    %s38 = scalar_select %p37, 0, %s36
    %s39 = ssub.s32 %s19, %s38
    %s40 = ssub.s32 %s20, %s34
    %s41 = sor.u32 %s39, %s40
    %p42 = scmp.eq.s32.totalorder %s41, 0
    %s44 = sadd.s32 %s43, 1
    %s45 = scalar_select %p42, %s43, %s44
    %p48 = pneg %p42
    %p49 = scmp.eq.s32.totalorder %s12, 1
    %p50 = por %p48, %p49
    %p51 = scmp.ne.s32.totalorder %s43, %s46
    %p52 = scmp.eq.s32.totalorder %s12, 0
    %p53 = por %p51, %p52
    %p54 = scmp.ne.s32.totalorder %s43, %s46
    %p55 = scmp.eq.s32.totalorder %s17, 1
    %p56 = por %p54, %p55
    %p57 = scmp.ne.s32.totalorder %s46, %s47
    %p58 = scmp.eq.s32.totalorder %s17, 0
    %p59 = por %p57, %p58
    %p60 = scmp.ne.s32.totalorder %s46, %s47
    %p61 = scmp.eq.s32.totalorder %s18, 1
    %p62 = por %p60, %p61
    %p64 = scmp.ne.s32.totalorder %s47, %s63
    %p65 = scmp.eq.s32.totalorder %s18, 0
    %p66 = por %p64, %p65
    %s67 = ssub.s32 %s19, %s38
    %p68 = scmp.eq.s32.totalorder %s67, 0
    %s70 = sadd.s32 %s69, 1
    %s71 = scalar_select %p68, %s69, %s70
    %p74 = pneg %p68
    %p75 = scmp.eq.s32.totalorder %s12, 1
    %p76 = por %p74, %p75
    %p77 = scmp.ne.s32.totalorder %s69, %s72
    %p78 = scmp.eq.s32.totalorder %s12, 0
    %p79 = por %p77, %p78
    %p80 = scmp.ne.s32.totalorder %s69, %s72
    %p81 = scmp.eq.s32.totalorder %s17, 1
    %p82 = por %p80, %p81
    %p83 = scmp.ne.s32.totalorder %s72, %s73
    %p84 = scmp.eq.s32.totalorder %s17, 0
    %p85 = por %p83, %p84
    %p86 = scmp.ne.s32.totalorder %s72, %s73
    %p87 = scmp.eq.s32.totalorder %s18, 1
    %p88 = por %p86, %p87
    %p90 = scmp.ne.s32.totalorder %s73, %s89
    %p91 = scmp.eq.s32.totalorder %s18, 0
    %p92 = por %p90, %p91
    %s93 = ssub.s32 %s19, %s38
    %p94 = scmp.eq.s32.totalorder %s93, 0
    %s96 = sadd.s32 %s95, 1
    %s97 = scalar_select %p94, %s95, %s96
    %p100 = pneg %p94
    %p101 = scmp.eq.s32.totalorder %s12, 1
    %p102 = por %p100, %p101
    %p103 = scmp.ne.s32.totalorder %s95, %s98
    %p104 = scmp.eq.s32.totalorder %s12, 0
    %p105 = por %p103, %p104
    %p106 = scmp.ne.s32.totalorder %s95, %s98
    %p107 = scmp.eq.s32.totalorder %s17, 1
    %p108 = por %p106, %p107
    %p109 = scmp.ne.s32.totalorder %s98, %s99
    %p110 = scmp.eq.s32.totalorder %s17, 0
    %p111 = por %p109, %p110
    %p112 = scmp.ne.s32.totalorder %s98, %s99
    %p113 = scmp.eq.s32.totalorder %s18, 1
    %p114 = por %p112, %p113
    %p116 = scmp.ne.s32.totalorder %s99, %s115
    %p117 = scmp.eq.s32.totalorder %s18, 0
    %p118 = por %p116, %p117
    %s119 = ssub.s32 %s21, %s30
    %p120 = scmp.eq.s32.totalorder %s119, 0
    %s122 = sadd.s32 %s121, 1
    %s123 = scalar_select %p120, %s121, %s122
    %p126 = pneg %p120
    %p127 = scmp.eq.s32.totalorder %s12, 1
    %p128 = por %p126, %p127
    %p129 = scmp.ne.s32.totalorder %s121, %s124
    %p130 = scmp.eq.s32.totalorder %s12, 0
    %p131 = por %p129, %p130
    %p132 = scmp.ne.s32.totalorder %s121, %s124
    %p133 = scmp.eq.s32.totalorder %s17, 1
    %p134 = por %p132, %p133
    %p135 = scmp.ne.s32.totalorder %s124, %s125
    %p136 = scmp.eq.s32.totalorder %s17, 0
    %p137 = por %p135, %p136
    %p138 = scmp.ne.s32.totalorder %s124, %s125
    %p139 = scmp.eq.s32.totalorder %s18, 1
    %p140 = por %p138, %p139
    %p142 = scmp.ne.s32.totalorder %s125, %s141
    %p143 = scmp.eq.s32.totalorder %s18, 0
    %p144 = por %p142, %p143
    %s145 = ssub.s32 %s21, %s30
    %p146 = scmp.eq.s32.totalorder %s145, 0
    %s148 = sadd.s32 %s147, 1
    %s149 = scalar_select %p146, %s147, %s148
    %p152 = pneg %p146
    %p153 = scmp.eq.s32.totalorder %s12, 1
    %p154 = por %p152, %p153
    %p155 = scmp.ne.s32.totalorder %s147, %s150
    %p156 = scmp.eq.s32.totalorder %s12, 0
    %p157 = por %p155, %p156
    %p158 = scmp.ne.s32.totalorder %s147, %s150
    %p159 = scmp.eq.s32.totalorder %s17, 1
    %p160 = por %p158, %p159
    %p161 = scmp.ne.s32.totalorder %s150, %s151
    %p162 = scmp.eq.s32.totalorder %s17, 0
    %p163 = por %p161, %p162
    %p164 = scmp.ne.s32.totalorder %s150, %s151
    %p165 = scmp.eq.s32.totalorder %s18, 1
    %p166 = por %p164, %p165
    %p168 = scmp.ne.s32.totalorder %s151, %s167
    %p169 = scmp.eq.s32.totalorder %s18, 0
    %p170 = por %p168, %p169
    %s171 = ssub.s32 %s19, %s38
    %p172 = scmp.eq.s32.totalorder %s171, 0
    %s174 = sadd.s32 %s173, 1
    %s175 = scalar_select %p172, %s173, %s174
    %p178 = pneg %p172
    %p179 = scmp.eq.s32.totalorder %s12, 1
    %p180 = por %p178, %p179
    %p181 = scmp.ne.s32.totalorder %s173, %s176
    %p182 = scmp.eq.s32.totalorder %s12, 0
    %p183 = por %p181, %p182
    %p184 = scmp.ne.s32.totalorder %s173, %s176
    %p185 = scmp.eq.s32.totalorder %s17, 1
    %p186 = por %p184, %p185
    %p187 = scmp.ne.s32.totalorder %s176, %s177
    %p188 = scmp.eq.s32.totalorder %s17, 0
    %p189 = por %p187, %p188
    %p190 = scmp.ne.s32.totalorder %s176, %s177
    %p191 = scmp.eq.s32.totalorder %s18, 1
    %p192 = por %p190, %p191
    %p194 = scmp.ne.s32.totalorder %s177, %s193
    %p195 = scmp.eq.s32.totalorder %s18, 0
    %p196 = por %p194, %p195
    %s197 = ssub.s32 %s19, %s38
    %s198 = ssub.s32 %s20, %s34
    %s199 = sor.u32 %s197, %s198
    %p200 = scmp.eq.s32.totalorder %s199, 0
    %s202 = sadd.s32 %s201, 1
    %s203 = scalar_select %p200, %s201, %s202
    %p206 = pneg %p200
    %p207 = scmp.eq.s32.totalorder %s12, 1
    %p208 = por %p206, %p207
    %p209 = scmp.ne.s32.totalorder %s201, %s204
    %p210 = scmp.eq.s32.totalorder %s12, 0
    %p211 = por %p209, %p210
    %p212 = scmp.ne.s32.totalorder %s201, %s204
    %p213 = scmp.eq.s32.totalorder %s17, 1
    %p214 = por %p212, %p213
    %p215 = scmp.ne.s32.totalorder %s204, %s205
    %p216 = scmp.eq.s32.totalorder %s17, 0
    %p217 = por %p215, %p216
    %p218 = scmp.ne.s32.totalorder %s204, %s205
    %p219 = scmp.eq.s32.totalorder %s18, 1
    %p220 = por %p218, %p219
    %p222 = scmp.ne.s32.totalorder %s205, %s221
    %p223 = scmp.eq.s32.totalorder %s18, 0
    %p224 = por %p222, %p223
    %p225 = scmp.le.s32.totalorder 1, %s12
    %p226 = scmp.lt.s32.totalorder %s12, 3
    %p227 = pnand %p225, %p226
    %p228 = pneg %p227
    // Predicated region
    $region9: #{run.16} parent=5 // pred_check
      _
    $region10: #{run.16} parent=5 // pred_check_branch
      %230 = sbr.rel (%p227) target = $region12
    $region11: #{run.16} parent=5 // pred_region
      %s231 = ssub.s32 %s12, 1
      // Predicated region
      $region13: #{run.16} parent=11 // pred_check
        %p232 = pneg %p137
      $region14: #{run.16} parent=11 // pred_check_branch
        %234 = sbr.rel (%p232) target = $region16
      $region15: #{run.16} parent=11 // pred_region
        %s235 = smul.u32 4, %s24
        %p236 = scmp.lt.s32.totalorder %s235, 3
        %s237 = scalar_select %p236, %s235, 3
        %s238 = smul.addr %s237, 4
        %s239 = scalar_lea.vmem %s3, %s238
        %s240 = smul.u32 4, %s24
      $region16: #{run.16} parent=11 // pred_fallthru
        _
      // Predicated region
      $region17: #{run.16} parent=11 // pred_check
        %p241 = pneg %p163
      $region18: #{run.16} parent=11 // pred_check_branch
        %243 = sbr.rel (%p241) target = $region20
      $region19: #{run.16} parent=11 // pred_region
        %s244 = smul.u32 32, %s24
        %p245 = scmp.lt.s32.totalorder %s244, 31
        %s246 = scalar_select %p245, %s244, 31
        %s247 = smul.addr %s246, 4
        %s248 = scalar_lea.vmem %s4, %s247
        %s249 = smul.u32 32, %s24
      $region20: #{run.16} parent=11 // pred_fallthru
        _
    $region12: #{run.16} parent=5 // pred_fallthru
      _
    %p250 = scmp.lt.s32.totalorder %s12, 2
    // Predicated region
    $region21: #{run.16} parent=5 // pred_check
      %p251 = pneg %p250
    $region22: #{run.16} parent=5 // pred_check_branch
      %253 = sbr.rel (%p251) target = $region24
    $region23: #{run.16} parent=5 // pred_region
      // Predicated region
      $region25: #{run.16} parent=23 // pred_check
        %p254 = pneg %p53
      $region26: #{run.16} parent=23 // pred_check_branch
        %256 = sbr.rel (%p254) target = $region28
      $region27: #{run.16} parent=23 // pred_region
        %p257 = scmp.lt.s32.totalorder %s19, 1
        %s258 = scalar_select %p257, %s19, 1
        %p259 = scmp.lt.s32.totalorder %s20, 0
        %s260 = scalar_select %p259, %s20, 0
        %s261 = sadd.s32 %s260, %s258
        %s262 = smul.addr %s261, 8
        %s263 = scalar_lea.vmem %s0, %s262
      $region28: #{run.16} parent=23 // pred_fallthru
        _
      // Predicated region
      $region29: #{run.16} parent=23 // pred_check
        %p264 = pneg %p79
      $region30: #{run.16} parent=23 // pred_check_branch
        %266 = sbr.rel (%p264) target = $region32
      $region31: #{run.16} parent=23 // pred_region
        %p267 = scmp.lt.s32.totalorder %s19, 1
        %s268 = scalar_select %p267, %s19, 1
        %s269 = scalar_lea.vmem %s1, %s268
      $region32: #{run.16} parent=23 // pred_fallthru
        _
      // Predicated region
      $region33: #{run.16} parent=23 // pred_check
        %p270 = pneg %p105
      $region34: #{run.16} parent=23 // pred_check_branch
        %272 = sbr.rel (%p270) target = $region36
      $region35: #{run.16} parent=23 // pred_region
        %p273 = scmp.lt.s32.totalorder %s19, 1
        %s274 = scalar_select %p273, %s19, 1
        %s275 = scalar_lea.vmem %s2, %s274
      $region36: #{run.16} parent=23 // pred_fallthru
        _
      // Predicated region
      $region37: #{run.16} parent=23 // pred_check
        %p276 = pneg %p183
      $region38: #{run.16} parent=23 // pred_check_branch
        %278 = sbr.rel (%p276) target = $region40
      $region39: #{run.16} parent=23 // pred_region
        %p279 = scmp.lt.s32.totalorder %s19, 1
        %s280 = scalar_select %p279, %s19, 1
        %s281 = scalar_lea.vmem %s5, %s280
      $region40: #{run.16} parent=23 // pred_fallthru
        _
    $region24: #{run.16} parent=5 // pred_fallthru
      _
    %p282 = scmp.le.s32.totalorder 1, %s12
    %p283 = scmp.lt.s32.totalorder %s12, 3
    %p284 = pnand %p282, %p283
    %p285 = pneg %p284
    // Predicated region
    $region41: #{run.16} parent=5 // pred_check
      _
    $region42: #{run.16} parent=5 // pred_check_branch
      %287 = sbr.rel (%p284) target = $region44
    $region43: #{run.16} parent=5 // pred_region
      %s288 = ssub.s32 %s12, 1
      %p289 = scmp.lt.s32.totalorder %s22, 1
      %s290 = scalar_select %p289, %s22, 1
      %p291 = scmp.lt.s32.totalorder %s23, 0
      %s292 = scalar_select %p291, %s23, 0
      %s293 = sadd.s32 %s292, %s290
      %s294 = smul.addr %s293, 8
      %s295 = scalar_lea.vmem %s0, %s294
      %p296 = pneg %p59
      %p297 = pneg %p56
      %p298 = scmp.lt.s32.totalorder %s22, 1
      %s299 = scalar_select %p298, %s22, 1
      %s300 = scalar_lea.vmem %s1, %s299
      %p301 = pneg %p85
      %p302 = pneg %p82
      %p303 = scmp.lt.s32.totalorder %s22, 1
      %s304 = scalar_select %p303, %s22, 1
      %s305 = scalar_lea.vmem %s2, %s304
      %p306 = pneg %p111
      %p307 = pneg %p108
      %s308 = smul.u32 4, %s24
      %p309 = scmp.lt.s32.totalorder %s308, 3
      %s310 = scalar_select %p309, %s308, 3
      %s311 = smul.addr %s310, 4
      %s312 = scalar_lea.vmem %s3, %s311
      %p313 = pneg %p137
      %p314 = pneg %p134
      %s315 = smul.u32 32, %s24
      %p316 = scmp.lt.s32.totalorder %s315, 31
      %s317 = scalar_select %p316, %s315, 31
      %s318 = smul.addr %s317, 4
      %s319 = scalar_lea.vmem %s4, %s318
      %p320 = pneg %p163
      %p321 = pneg %p160
      %p322 = scmp.lt.s32.totalorder %s22, 1
      %s323 = scalar_select %p322, %s22, 1
      %s324 = scalar_lea.vmem %s5, %s323
      %p325 = pneg %p189
      %p326 = pneg %p186
      %p327 = pneg %p217
      %p328 = pneg %p214
      %p329 = scmp.lt.s32.totalorder %s22, 1
      %s330 = scalar_select %p329, %s22, 1
      %p331 = scmp.lt.s32.totalorder %s23, 0
      %s332 = scalar_select %p331, %s23, 0
      %s333 = sadd.s32 %s332, %s330
      %s334 = smul.addr %s333, 8
      %s335 = scalar_lea.vmem %s6, %s334
      %p336 = scmp.lt.s32.totalorder %s22, 1
      %s337 = scalar_select %p336, %s22, 1
      %p338 = scmp.lt.s32.totalorder %s23, 0
      %s339 = scalar_select %p338, %s23, 0
      %s340 = sadd.s32 %s339, %s337
      %s341 = smul.addr %s340, 8
      %s342 = scalar_lea.vmem %s0, %s341
      %p343 = scmp.lt.s32.totalorder %s22, 1
      %s344 = scalar_select %p343, %s22, 1
      %s345 = scalar_lea.vmem %s1, %s344
      %p346 = scmp.lt.s32.totalorder %s22, 1
      %s347 = scalar_select %p346, %s22, 1
      %s348 = scalar_lea.vmem %s2, %s347
      %s349 = smul.u32 4, %s24
      %p350 = scmp.lt.s32.totalorder %s349, 3
      %s351 = scalar_select %p350, %s349, 3
      %s352 = smul.addr %s351, 4
      %s353 = scalar_lea.vmem %s3, %s352
      %s354 = smul.u32 4, %s24
      %s355 = smul.u32 32, %s24
      %p356 = scmp.lt.s32.totalorder %s355, 31
      %s357 = scalar_select %p356, %s355, 31
      %s358 = smul.addr %s357, 4
      %s359 = scalar_lea.vmem %s4, %s358
      %s360 = smul.u32 32, %s24
      %p361 = scmp.lt.s32.totalorder %s22, 1
      %s362 = scalar_select %p361, %s22, 1
      %s363 = scalar_lea.vmem %s5, %s362
      %p364 = scmp.lt.s32.totalorder %s22, 1
      %s365 = scalar_select %p364, %s22, 1
      %p366 = scmp.lt.s32.totalorder %s23, 0
      %s367 = scalar_select %p366, %s23, 0
      %s368 = sadd.s32 %s367, %s365
      %s369 = smul.addr %s368, 8
      %s370 = scalar_lea.vmem %s6, %s369
      %p372 = scmp.eq.s32.totalorder %s24, 0
      // Predicated region
      $region45: #{run.16} parent=43 // pred_check
        %p373 = pneg %p372
      $region46: #{run.16} parent=43 // pred_check_branch
        %375 = sbr.rel (%p373) target = $region48
      $region47: #{run.16} parent=43 // pred_region
        %v376 = vld [vmem:[%s342] sm:$0xff]
        %v377 = vmul.f32 %v376, %v376
        %378 = vadd.xlane.f32.xlu0 %v377
        %v379 = vpop.xlane.xlu0 %378
        %v380 = vrcp.pop 128.0
        %v381 = vmul.f32 %v379, %v380
        %v382 = vadd.f32 %v381, 1e-05
        %v383 = vrsqrt.pop %v382
        %v384 = vmul.f32 %v376, %v383
        %v385 = vld [vmem:[%s345] sm:$0x1]
        %v387 = vlaneseq
        %v388 = vshrl.u32 %v387, 7
        %v389 = vsub.s32 0, %v388
        %v390 = vrot.slane %v385, %v389
        %v392 = vmul.f32 %v384, %v390
        %v393 = vld [vmem:[%s348] sm:$0x1]
        %v395 = vlaneseq
        %v396 = vshrl.u32 %v395, 7
        %v397 = vsub.s32 0, %v396
        %v398 = vrot.slane %v393, %v397
        %v400 = vadd.f32 %v392, %v398
        %v401 = vpack.c.bf16 %v400, %v400
        %402 = vst [vmem:[#allocation3] sm:$0xf] %v401
        %403 = vst [vmem:[#allocation2] sm:$0xff] 0.0
      $region48: #{run.16} parent=43 // pred_fallthru
        _
      %v404 = vld [vmem:[#allocation3] sm:$0xf]
      %v405 = vld [vmem:[%s353] sm:$0xff]
      %v406 = vld [vmem:[%s353 + $0x8] sm:$0xff]
      %v407 = vld [vmem:[%s353 + $0x10] sm:$0xff]
      %v408 = vld [vmem:[%s353 + $0x18] sm:$0xff]
      %v409 = vld [vmem:[%s353 + $0x20] sm:$0xff]
      %v410 = vld [vmem:[%s353 + $0x28] sm:$0xff]
      %v411 = vld [vmem:[%s353 + $0x30] sm:$0xff]
      %v412 = vld [vmem:[%s353 + $0x38] sm:$0xff]
      %v413 = vld [vmem:[%s353 + $0x40] sm:$0xff]
      %v414 = vld [vmem:[%s353 + $0x48] sm:$0xff]
      %v415 = vld [vmem:[%s353 + $0x50] sm:$0xff]
      %v416 = vld [vmem:[%s353 + $0x58] sm:$0xff]
      %v417 = vld [vmem:[%s353 + $0x60] sm:$0xff]
      %v418 = vld [vmem:[%s353 + $0x68] sm:$0xff]
      %v419 = vld [vmem:[%s353 + $0x70] sm:$0xff]
      %v420 = vld [vmem:[%s353 + $0x78] sm:$0xff]
      %v421 = vld [vmem:[%s353 + $0x80] sm:$0xff]
      %v422 = vld [vmem:[%s353 + $0x88] sm:$0xff]
      %v423 = vld [vmem:[%s353 + $0x90] sm:$0xff]
      %v424 = vld [vmem:[%s353 + $0x98] sm:$0xff]
      %v425 = vld [vmem:[%s353 + $0xa0] sm:$0xff]
      %v426 = vld [vmem:[%s353 + $0xa8] sm:$0xff]
      %v427 = vld [vmem:[%s353 + $0xb0] sm:$0xff]
      %v428 = vld [vmem:[%s353 + $0xb8] sm:$0xff]
      %v429 = vld [vmem:[%s353 + $0xc0] sm:$0xff]
      %v430 = vld [vmem:[%s353 + $0xc8] sm:$0xff]
      %v431 = vld [vmem:[%s353 + $0xd0] sm:$0xff]
      %v432 = vld [vmem:[%s353 + $0xd8] sm:$0xff]
      %v433 = vld [vmem:[%s353 + $0xe0] sm:$0xff]
      %v434 = vld [vmem:[%s353 + $0xe8] sm:$0xff]
      %v435 = vld [vmem:[%s353 + $0xf0] sm:$0xff]
      %v436 = vld [vmem:[%s353 + $0xf8] sm:$0xff]
      %v469 = vunpack.c.l.b16 %v405
      %v470 = vunpack.c.h.b16 %v405
      %v471 = vunpack.c.l.b16 %v406
      %v472 = vunpack.c.h.b16 %v406
      %v473 = vunpack.c.l.b16 %v407
      %v474 = vunpack.c.h.b16 %v407
      %v475 = vunpack.c.l.b16 %v408
      %v476 = vunpack.c.h.b16 %v408
      %v477 = vunpack.c.l.b16 %v409
      %v478 = vunpack.c.h.b16 %v409
      %v479 = vunpack.c.l.b16 %v410
      %v480 = vunpack.c.h.b16 %v410
      %v481 = vunpack.c.l.b16 %v411
      %v482 = vunpack.c.h.b16 %v411
      %v483 = vunpack.c.l.b16 %v412
      %v484 = vunpack.c.h.b16 %v412
      %v485 = vunpack.c.l.b16 %v413
      %v486 = vunpack.c.h.b16 %v413
      %v487 = vunpack.c.l.b16 %v414
      %v488 = vunpack.c.h.b16 %v414
      %v489 = vunpack.c.l.b16 %v415
      %v490 = vunpack.c.h.b16 %v415
      %v491 = vunpack.c.l.b16 %v416
      %v492 = vunpack.c.h.b16 %v416
      %v493 = vunpack.c.l.b16 %v417
      %v494 = vunpack.c.h.b16 %v417
      %v495 = vunpack.c.l.b16 %v418
      %v496 = vunpack.c.h.b16 %v418
      %v497 = vunpack.c.l.b16 %v419
      %v498 = vunpack.c.h.b16 %v419
      %v499 = vunpack.c.l.b16 %v420
      %v500 = vunpack.c.h.b16 %v420
      %v501 = vunpack.c.l.b16 %v421
      %v502 = vunpack.c.h.b16 %v421
      %v503 = vunpack.c.l.b16 %v422
      %v504 = vunpack.c.h.b16 %v422
      %v505 = vunpack.c.l.b16 %v423
      %v506 = vunpack.c.h.b16 %v423
      %v507 = vunpack.c.l.b16 %v424
      %v508 = vunpack.c.h.b16 %v424
      %v509 = vunpack.c.l.b16 %v425
      %v510 = vunpack.c.h.b16 %v425
      %v511 = vunpack.c.l.b16 %v426
      %v512 = vunpack.c.h.b16 %v426
      %v513 = vunpack.c.l.b16 %v427
      %v514 = vunpack.c.h.b16 %v427
      %v515 = vunpack.c.l.b16 %v428
      %v516 = vunpack.c.h.b16 %v428
      %v517 = vunpack.c.l.b16 %v429
      %v518 = vunpack.c.h.b16 %v429
      %v519 = vunpack.c.l.b16 %v430
      %v520 = vunpack.c.h.b16 %v430
      %v521 = vunpack.c.l.b16 %v431
      %v522 = vunpack.c.h.b16 %v431
      %v523 = vunpack.c.l.b16 %v432
      %v524 = vunpack.c.h.b16 %v432
      %v525 = vunpack.c.l.b16 %v433
      %v526 = vunpack.c.h.b16 %v433
      %v527 = vunpack.c.l.b16 %v434
      %v528 = vunpack.c.h.b16 %v434
      %v529 = vunpack.c.l.b16 %v435
      %v530 = vunpack.c.h.b16 %v435
      %v531 = vunpack.c.l.b16 %v436
      %v532 = vunpack.c.h.b16 %v436
      %v533 = vpack.c.b16 %v473, %v469
      %v534 = vpack.c.b16 %v474, %v470
      %v535 = vpack.c.b16 %v475, %v471
      %v536 = vpack.c.b16 %v476, %v472
      %v537 = vpack.c.b16 %v481, %v477
      %v538 = vpack.c.b16 %v482, %v478
      %v539 = vpack.c.b16 %v483, %v479
      %v540 = vpack.c.b16 %v484, %v480
      %v541 = vpack.c.b16 %v489, %v485
      %v542 = vpack.c.b16 %v490, %v486
      %v543 = vpack.c.b16 %v491, %v487
      %v544 = vpack.c.b16 %v492, %v488
      %v545 = vpack.c.b16 %v497, %v493
      %v546 = vpack.c.b16 %v498, %v494
      %v547 = vpack.c.b16 %v499, %v495
      %v548 = vpack.c.b16 %v500, %v496
      %v549 = vpack.c.b16 %v505, %v501
      %v550 = vpack.c.b16 %v506, %v502
      %v551 = vpack.c.b16 %v507, %v503
      %v552 = vpack.c.b16 %v508, %v504
      %v553 = vpack.c.b16 %v513, %v509
      %v554 = vpack.c.b16 %v514, %v510
      %v555 = vpack.c.b16 %v515, %v511
      %v556 = vpack.c.b16 %v516, %v512
      %v557 = vpack.c.b16 %v521, %v517
      %v558 = vpack.c.b16 %v522, %v518
      %v559 = vpack.c.b16 %v523, %v519
      %v560 = vpack.c.b16 %v524, %v520
      %v561 = vpack.c.b16 %v529, %v525
      %v562 = vpack.c.b16 %v530, %v526
      %v563 = vpack.c.b16 %v531, %v527
      %v564 = vpack.c.b16 %v532, %v528
      %597 = vmatprep.subr.bf16.mxu0 %v534
      %598 = vmatpush1.bf16.msra.mxu0 %v533
      %599 = vmatprep.subr.bf16.mxu0 %v538
      %600 = vmatpush1.bf16.msra.mxu0 %v537
      %601 = vmatprep.subr.bf16.mxu0 %v542
      %602 = vmatpush1.bf16.msra.mxu0 %v541
      %603 = vmatprep.subr.bf16.mxu0 %v546
      %604 = vmatpush1.bf16.msra.mxu0 %v545
      %605 = vmatprep.subr.bf16.mxu0 %v550
      %606 = vmatpush1.bf16.msra.mxu0 %v549
      %607 = vmatprep.subr.bf16.mxu0 %v554
      %608 = vmatpush1.bf16.msra.mxu0 %v553
      %609 = vmatprep.subr.bf16.mxu0 %v558
      %610 = vmatpush1.bf16.msra.mxu0 %v557
      %611 = vmatprep.subr.bf16.mxu0 %v562
      %612 = vmatpush1.bf16.msra.mxu0 %v561
      %613 = vmatprep.subr.bf16.mxu0 0
      %614 = vmatpush1.bf16.msra.mxu0 0
      %615 = vmatprep.subr.bf16.mxu0 0
      %616 = vmatpush1.bf16.msra.mxu0 0
      %617 = vmatprep.subr.bf16.mxu0 0
      %618 = vmatpush1.bf16.msra.mxu0 0
      %619 = vmatprep.subr.bf16.mxu0 0
      %620 = vmatpush1.bf16.msra.mxu0 0
      %621 = vmatprep.subr.bf16.mxu0 0
      %622 = vmatpush1.bf16.msra.mxu0 0
      %623 = vmatprep.subr.bf16.mxu0 0
      %624 = vmatpush1.bf16.msra.mxu0 0
      %625 = vmatprep.subr.bf16.mxu0 0
      %626 = vmatpush1.bf16.msra.mxu0 0
      %627 = vmatprep.subr.bf16.mxu0 0
      %628 = vmatpush1.bf16.msra.mxu0 0
      %629 = vmatprep.mubr.bf16.mxu0 0
      %630 = vmatmul.mubr.bf16.gmra.mrb[0].mxu0 %v404
      %v631 = vpop.f32.mrb[0].mxu0
      %v632 = vadd.f32 0.0, %v631
      %v633 = vpop.f32.mrb[0].mxu0
      %v634 = vadd.f32 0.0, %v633
      %v635 = vpop.f32.mrb[0].mxu0
      %v636 = vpop.f32.mrb[0].mxu0
      %637 = vdwg.mxu0
      %638 = vmatprep.subr.bf16.mxu0 %v536
      %639 = vmatpush1.bf16.msra.mxu0 %v535
      %640 = vmatprep.subr.bf16.mxu0 %v540
      %641 = vmatpush1.bf16.msra.mxu0 %v539
      %642 = vmatprep.subr.bf16.mxu0 %v544
      %643 = vmatpush1.bf16.msra.mxu0 %v543
      %644 = vmatprep.subr.bf16.mxu0 %v548
      %645 = vmatpush1.bf16.msra.mxu0 %v547
      %646 = vmatprep.subr.bf16.mxu0 %v552
      %647 = vmatpush1.bf16.msra.mxu0 %v551
      %648 = vmatprep.subr.bf16.mxu0 %v556
      %649 = vmatpush1.bf16.msra.mxu0 %v555
      %650 = vmatprep.subr.bf16.mxu0 %v560
      %651 = vmatpush1.bf16.msra.mxu0 %v559
      %652 = vmatprep.subr.bf16.mxu0 %v564
      %653 = vmatpush1.bf16.msra.mxu0 %v563
      %654 = vmatprep.subr.bf16.mxu0 0
      %655 = vmatpush1.bf16.msra.mxu0 0
      %656 = vmatprep.subr.bf16.mxu0 0
      %657 = vmatpush1.bf16.msra.mxu0 0
      %658 = vmatprep.subr.bf16.mxu0 0
      %659 = vmatpush1.bf16.msra.mxu0 0
      %660 = vmatprep.subr.bf16.mxu0 0
      %661 = vmatpush1.bf16.msra.mxu0 0
      %662 = vmatprep.subr.bf16.mxu0 0
      %663 = vmatpush1.bf16.msra.mxu0 0
      %664 = vmatprep.subr.bf16.mxu0 0
      %665 = vmatpush1.bf16.msra.mxu0 0
      %666 = vmatprep.subr.bf16.mxu0 0
      %667 = vmatpush1.bf16.msra.mxu0 0
      %668 = vmatprep.subr.bf16.mxu0 0
      %669 = vmatpush1.bf16.msra.mxu0 0
      %670 = vmatprep.mubr.bf16.mxu0 0
      %671 = vmatmul.mubr.bf16.gmra.mrb[0].mxu0 %v404
      %v672 = vpop.f32.mrb[0].mxu0
      %v673 = vadd.f32 0.0, %v672
      %v674 = vpop.f32.mrb[0].mxu0
      %v675 = vadd.f32 0.0, %v674
      %v676 = vpop.f32.mrb[0].mxu0
      %v677 = vpop.f32.mrb[0].mxu0
      %678 = vdwg.mxu0
      %v679 = vsub.f32 0.0, %v632
      %v680 = vsub.f32 0.0, %v634
      %v681 = vmul.f32 %v679, 1.442695
      %v682 = vpow.pop %v681
      %v683 = vmul.f32 %v680, 1.442695
      %v684 = vpow.pop %v683
      %v685 = vadd.f32 %v682, 1.0
      %v686 = vadd.f32 %v684, 1.0
      %v687 = vrcp.pop %v685
      %v688 = vmul.f32 1.0, %v687
      %v689 = vrcp.pop %v686
      %v690 = vmul.f32 1.0, %v689
      %v691 = vmul.f32 %v632, %v688
      %v692 = vmul.f32 %v634, %v690
      %v693 = vmul.f32 %v691, %v673
      %v694 = vmul.f32 %v692, %v675
      %v695 = vld [vmem:[#allocation2] sm:$0xff]
      %v696 = vpack.c.bf16 %v693, %v693
      %v697 = vpack.c.bf16 %v694, %v694
      %v698 = vld [vmem:[%s359] sm:$0xf]
      %v699 = vld [vmem:[%s359 + $0x4] sm:$0xf]
      %v700 = vld [vmem:[%s359 + $0x8] sm:$0xf]
      %v701 = vld [vmem:[%s359 + $0xc] sm:$0xf]
      %v702 = vld [vmem:[%s359 + $0x10] sm:$0xf]
      %v703 = vld [vmem:[%s359 + $0x14] sm:$0xf]
      %v704 = vld [vmem:[%s359 + $0x18] sm:$0xf]
      %v705 = vld [vmem:[%s359 + $0x1c] sm:$0xf]
      %v706 = vld [vmem:[%s359 + $0x20] sm:$0xf]
      %v707 = vld [vmem:[%s359 + $0x24] sm:$0xf]
      %v708 = vld [vmem:[%s359 + $0x28] sm:$0xf]
      %v709 = vld [vmem:[%s359 + $0x2c] sm:$0xf]
      %v710 = vld [vmem:[%s359 + $0x30] sm:$0xf]
      %v711 = vld [vmem:[%s359 + $0x34] sm:$0xf]
      %v712 = vld [vmem:[%s359 + $0x38] sm:$0xf]
      %v713 = vld [vmem:[%s359 + $0x3c] sm:$0xf]
      %v714 = vld [vmem:[%s359 + $0x40] sm:$0xf]
      %v715 = vld [vmem:[%s359 + $0x44] sm:$0xf]
      %v716 = vld [vmem:[%s359 + $0x48] sm:$0xf]
      %v717 = vld [vmem:[%s359 + $0x4c] sm:$0xf]
      %v718 = vld [vmem:[%s359 + $0x50] sm:$0xf]
      %v719 = vld [vmem:[%s359 + $0x54] sm:$0xf]
      %v720 = vld [vmem:[%s359 + $0x58] sm:$0xf]
      %v721 = vld [vmem:[%s359 + $0x5c] sm:$0xf]
      %v722 = vld [vmem:[%s359 + $0x60] sm:$0xf]
      %v723 = vld [vmem:[%s359 + $0x64] sm:$0xf]
      %v724 = vld [vmem:[%s359 + $0x68] sm:$0xf]
      %v725 = vld [vmem:[%s359 + $0x6c] sm:$0xf]
      %v726 = vld [vmem:[%s359 + $0x70] sm:$0xf]
      %v727 = vld [vmem:[%s359 + $0x74] sm:$0xf]
      %v728 = vld [vmem:[%s359 + $0x78] sm:$0xf]
      %v729 = vld [vmem:[%s359 + $0x7c] sm:$0xf]
      %v762 = vunpack.c.l.b16 %v698
      %v763 = vunpack.c.l.b16 %v699
      %v764 = vunpack.c.l.b16 %v700
      %v765 = vunpack.c.l.b16 %v701
      %v766 = vunpack.c.l.b16 %v702
      %v767 = vunpack.c.l.b16 %v703
      %v768 = vunpack.c.l.b16 %v704
      %v769 = vunpack.c.l.b16 %v705
      %v770 = vunpack.c.l.b16 %v706
      %v771 = vunpack.c.l.b16 %v707
      %v772 = vunpack.c.l.b16 %v708
      %v773 = vunpack.c.l.b16 %v709
      %v774 = vunpack.c.l.b16 %v710
      %v775 = vunpack.c.l.b16 %v711
      %v776 = vunpack.c.l.b16 %v712
      %v777 = vunpack.c.l.b16 %v713
      %v778 = vunpack.c.l.b16 %v714
      %v779 = vunpack.c.l.b16 %v715
      %v780 = vunpack.c.l.b16 %v716
      %v781 = vunpack.c.l.b16 %v717
      %v782 = vunpack.c.l.b16 %v718
      %v783 = vunpack.c.l.b16 %v719
      %v784 = vunpack.c.l.b16 %v720
      %v785 = vunpack.c.l.b16 %v721
      %v786 = vunpack.c.l.b16 %v722
      %v787 = vunpack.c.l.b16 %v723
      %v788 = vunpack.c.l.b16 %v724
      %v789 = vunpack.c.l.b16 %v725
      %v790 = vunpack.c.l.b16 %v726
      %v791 = vunpack.c.l.b16 %v727
      %v792 = vunpack.c.l.b16 %v728
      %v793 = vunpack.c.l.b16 %v729
      %v794 = vpack.c.b16 %v763, %v762
      %v795 = vpack.c.b16 %v765, %v764
      %v796 = vpack.c.b16 %v767, %v766
      %v797 = vpack.c.b16 %v769, %v768
      %v798 = vpack.c.b16 %v771, %v770
      %v799 = vpack.c.b16 %v773, %v772
      %v800 = vpack.c.b16 %v775, %v774
      %v801 = vpack.c.b16 %v777, %v776
      %v802 = vpack.c.b16 %v779, %v778
      %v803 = vpack.c.b16 %v781, %v780
      %v804 = vpack.c.b16 %v783, %v782
      %v805 = vpack.c.b16 %v785, %v784
      %v806 = vpack.c.b16 %v787, %v786
      %v807 = vpack.c.b16 %v789, %v788
      %v808 = vpack.c.b16 %v791, %v790
      %v809 = vpack.c.b16 %v793, %v792
      %826 = vmatprep.subr.bf16.mxu0 0
      %827 = vmatpush1.bf16.msra.mxu0 %v794
      %828 = vmatprep.subr.bf16.mxu0 0
      %829 = vmatpush1.bf16.msra.mxu0 %v795
      %830 = vmatprep.subr.bf16.mxu0 0
      %831 = vmatpush1.bf16.msra.mxu0 %v796
      %832 = vmatprep.subr.bf16.mxu0 0
      %833 = vmatpush1.bf16.msra.mxu0 %v797
      %834 = vmatprep.subr.bf16.mxu0 0
      %835 = vmatpush1.bf16.msra.mxu0 %v798
      %836 = vmatprep.subr.bf16.mxu0 0
      %837 = vmatpush1.bf16.msra.mxu0 %v799
      %838 = vmatprep.subr.bf16.mxu0 0
      %839 = vmatpush1.bf16.msra.mxu0 %v800
      %840 = vmatprep.subr.bf16.mxu0 0
      %841 = vmatpush1.bf16.msra.mxu0 %v801
      %842 = vmatprep.subr.bf16.mxu0 0
      %843 = vmatpush1.bf16.msra.mxu0 %v802
      %844 = vmatprep.subr.bf16.mxu0 0
      %845 = vmatpush1.bf16.msra.mxu0 %v803
      %846 = vmatprep.subr.bf16.mxu0 0
      %847 = vmatpush1.bf16.msra.mxu0 %v804
      %848 = vmatprep.subr.bf16.mxu0 0
      %849 = vmatpush1.bf16.msra.mxu0 %v805
      %850 = vmatprep.subr.bf16.mxu0 0
      %851 = vmatpush1.bf16.msra.mxu0 %v806
      %852 = vmatprep.subr.bf16.mxu0 0
      %853 = vmatpush1.bf16.msra.mxu0 %v807
      %854 = vmatprep.subr.bf16.mxu0 0
      %855 = vmatpush1.bf16.msra.mxu0 %v808
      %856 = vmatprep.subr.bf16.mxu0 0
      %857 = vmatpush1.bf16.msra.mxu0 %v809
      %858 = vmatprep.mubr.bf16.mxu0 %v697
      %859 = vmatmul.mubr.bf16.gmra.mrb[0].mxu0 %v696
      %v860 = vpop.f32.mrb[0].mxu0
      %v861 = vadd.f32 0.0, %v860
      %v862 = vpop.f32.mrb[0].mxu0
      %v863 = vpop.f32.mrb[0].mxu0
      %v864 = vpop.f32.mrb[0].mxu0
      %865 = vdwg.mxu0
      %v866 = vadd.f32 %v695, %v861
      %867 = vst [vmem:[#allocation2] sm:$0xff] %v866
      // Predicated region
      $region49: #{run.16} parent=43 // pred_check
        %p868 = pneg %p372
      $region50: #{run.16} parent=43 // pred_check_branch
        %870 = sbr.rel (%p868) target = $region52
      $region51: #{run.16} parent=43 // pred_region
        %v871 = vld [vmem:[%s342] sm:$0xff]
        %v872 = vld [vmem:[%s363] sm:$0x1]
        %v873 = vld [vmem:[#allocation2] sm:$0xff]
        %v875 = vlaneseq
        %v876 = vshrl.u32 %v875, 7
        %v877 = vsub.s32 0, %v876
        %v878 = vrot.slane %v872, %v877
        %v880 = vmul.f32 %v878, %v873
        %v881 = vadd.f32 %v871, %v880
        %882 = vst [vmem:[%s370] sm:$0xff] %v881
      $region52: #{run.16} parent=43 // pred_fallthru
        _
      %p883 = scmp.lt.s32.totalorder %s22, 1
      %s884 = scalar_select %p883, %s22, 1
      %p885 = scmp.lt.s32.totalorder %s23, 0
      %s886 = scalar_select %p885, %s23, 0
      %s887 = sadd.s32 %s886, %s884
      %s888 = smul.addr %s887, 8
      %s889 = scalar_lea.vmem %s6, %s888
      // Predicated region
      $region53: #{run.16} parent=43 // pred_check
        %p890 = pneg %p214
      $region54: #{run.16} parent=43 // pred_check_branch
        %892 = sbr.rel (%p890) target = $region56
      $region55: #{run.16} parent=43 // pred_region
        _
      $region56: #{run.16} parent=43 // pred_fallthru
        _
    $region44: #{run.16} parent=5 // pred_fallthru
      _
    %p893 = scmp.le.s32.totalorder 2, %s12
    // Predicated region
    $region57: #{run.16} parent=5 // pred_check
      %p894 = pneg %p893
    $region58: #{run.16} parent=5 // pred_check_branch
      %896 = sbr.rel (%p894) target = $region60
    $region59: #{run.16} parent=5 // pred_region
      %s897 = ssub.s32 %s12, 2
      // Predicated region
      $region61: #{run.16} parent=59 // pred_check
        %p898 = pneg %p220
      $region62: #{run.16} parent=59 // pred_check_branch
        %900 = sbr.rel (%p898) target = $region64
      $region63: #{run.16} parent=59 // pred_region
        %p901 = scmp.lt.s32.totalorder %s25, 1
        %s902 = scalar_select %p901, %s25, 1
        %p903 = scmp.lt.s32.totalorder %s26, 0
        %s904 = scalar_select %p903, %s26, 0
        %s905 = sadd.s32 %s904, %s902
        %s906 = smul.addr %s905, 8
        %s907 = scalar_lea.vmem %s6, %s906
      $region64: #{run.16} parent=59 // pred_fallthru
        _
    $region60: #{run.16} parent=5 // pred_fallthru
      _
  $region6: #{run.16} parent=0 // loop_footer
    %s16 = sadd.s32 1, %s12
  $region7: #{run.16} parent=0 // loop_footer_branch
    %11 = sbr.rel target = $region3
  $region8: #{run.16} parent=0 // loop_exit
    _

// kernel: run.12
$region0: #{run.12}
  #allocation0 [shape = 'u32[]', space=smem, size = 0x4, offset = 0x4, fixed_abs, tag = 'smem constant byte address 0x4 - core index']
  #allocation1 [shape = 'u32[144,128]{1,0:T(1,128)}', space=vmem, size = 0x12000, scoped, tag = 'internal scratch']
  %s0 = inlined_call_operand.vmem [shape: bf16[2,128], index: 0, kind: input, shape index: {}]
  %s1 = inlined_call_operand.vmem [shape: bf16[1,128,256], index: 1, kind: input, shape index: {}]
  %s2 = inlined_call_operand.vmem [shape: f32[1,1,256], index: 2, kind: input, shape index: {}]
  %s3 = inlined_call_operand.vmem [shape: f32[1,2,256], index: 3, kind: output, shape index: {}]
  %s4 = sld [smem:[#allocation0]]
  $region22: #{run.12} parent=0
    _
  %s6 = ssub.s32 1, %s4
  %s7 = scalar_select 0, %s6, %s4
  // Predicated region
  $region2: #{run.12} parent=0 // pred_check
    _
  $region3: #{run.12} parent=0 // pred_check_branch
    %9 = sbr.rel (0) target = $region5
  $region4: #{run.12} parent=0 // pred_region
    _
  $region5: #{run.12} parent=0 // pred_fallthru
    _
  // Predicated region
  $region6: #{run.12} parent=0 // pred_check
    _
  $region7: #{run.12} parent=0 // pred_check_branch
    %11 = sbr.rel (0) target = $region9
  $region8: #{run.12} parent=0 // pred_region
    _
  $region9: #{run.12} parent=0 // pred_fallthru
    _
  // Predicated region
  $region10: #{run.12} parent=0 // pred_check
    _
  $region11: #{run.12} parent=0 // pred_check_branch
    %13 = sbr.rel (0) target = $region13
  $region12: #{run.12} parent=0 // pred_region
    _
  $region13: #{run.12} parent=0 // pred_fallthru
    _
  %v15 = vld [vmem:[%s0] sm:$0x1]
  %v16 = vld [vmem:[%s1] sm:$0xff]
  %v17 = vld [vmem:[%s1 + $0x8] sm:$0xff]
  %v18 = vld [vmem:[%s1 + $0x10] sm:$0xff]
  %v19 = vld [vmem:[%s1 + $0x18] sm:$0xff]
  %v20 = vld [vmem:[%s1 + $0x20] sm:$0xff]
  %v21 = vld [vmem:[%s1 + $0x28] sm:$0xff]
  %v22 = vld [vmem:[%s1 + $0x30] sm:$0xff]
  %v23 = vld [vmem:[%s1 + $0x38] sm:$0xff]
  %v24 = vld [vmem:[%s1 + $0x40] sm:$0xff]
  %v25 = vld [vmem:[%s1 + $0x48] sm:$0xff]
  %v26 = vld [vmem:[%s1 + $0x50] sm:$0xff]
  %v27 = vld [vmem:[%s1 + $0x58] sm:$0xff]
  %v28 = vld [vmem:[%s1 + $0x60] sm:$0xff]
  %v29 = vld [vmem:[%s1 + $0x68] sm:$0xff]
  %v30 = vld [vmem:[%s1 + $0x70] sm:$0xff]
  %v31 = vld [vmem:[%s1 + $0x78] sm:$0xff]
  %v32 = vld [vmem:[%s2] sm:$0x3]
  %v34 = vlaneseq
  %v35 = vshrl.u32 %v34, 7
  %v36 = vsub.s32 0, %v35
  %v37 = vrot.slane %v32, %v36
  %v38 = vlaneseq
  %v39 = vshrl.u32 %v38, 7
  %v40 = vsub.s32 1, %v39
  %v41 = vrot.slane %v32, %v40
  %v60 = vunpack.c.l.b16 %v16
  %v61 = vunpack.c.h.b16 %v16
  %v62 = vunpack.c.l.b16 %v17
  %v63 = vunpack.c.h.b16 %v17
  %v64 = vunpack.c.l.b16 %v18
  %v65 = vunpack.c.h.b16 %v18
  %v66 = vunpack.c.l.b16 %v19
  %v67 = vunpack.c.h.b16 %v19
  %v68 = vunpack.c.l.b16 %v20
  %v69 = vunpack.c.h.b16 %v20
  %v70 = vunpack.c.l.b16 %v21
  %v71 = vunpack.c.h.b16 %v21
  %v72 = vunpack.c.l.b16 %v22
  %v73 = vunpack.c.h.b16 %v22
  %v74 = vunpack.c.l.b16 %v23
  %v75 = vunpack.c.h.b16 %v23
  %v76 = vunpack.c.l.b16 %v24
  %v77 = vunpack.c.h.b16 %v24
  %v78 = vunpack.c.l.b16 %v25
  %v79 = vunpack.c.h.b16 %v25
  %v80 = vunpack.c.l.b16 %v26
  %v81 = vunpack.c.h.b16 %v26
  %v82 = vunpack.c.l.b16 %v27
  %v83 = vunpack.c.h.b16 %v27
  %v84 = vunpack.c.l.b16 %v28
  %v85 = vunpack.c.h.b16 %v28
  %v86 = vunpack.c.l.b16 %v29
  %v87 = vunpack.c.h.b16 %v29
  %v88 = vunpack.c.l.b16 %v30
  %v89 = vunpack.c.h.b16 %v30
  %v90 = vunpack.c.l.b16 %v31
  %v91 = vunpack.c.h.b16 %v31
  %v92 = vpack.c.b16 %v62, %v60
  %v93 = vpack.c.b16 %v63, %v61
  %v94 = vpack.c.b16 %v66, %v64
  %v95 = vpack.c.b16 %v67, %v65
  %v96 = vpack.c.b16 %v70, %v68
  %v97 = vpack.c.b16 %v71, %v69
  %v98 = vpack.c.b16 %v74, %v72
  %v99 = vpack.c.b16 %v75, %v73
  %v100 = vpack.c.b16 %v78, %v76
  %v101 = vpack.c.b16 %v79, %v77
  %v102 = vpack.c.b16 %v82, %v80
  %v103 = vpack.c.b16 %v83, %v81
  %v104 = vpack.c.b16 %v86, %v84
  %v105 = vpack.c.b16 %v87, %v85
  %v106 = vpack.c.b16 %v90, %v88
  %v107 = vpack.c.b16 %v91, %v89
  %124 = vmatprep.subr.bf16.mxu0 %v93
  %125 = vmatpush1.bf16.msra.mxu0 %v92
  %126 = vmatprep.subr.bf16.mxu0 %v95
  %127 = vmatpush1.bf16.msra.mxu0 %v94
  %128 = vmatprep.subr.bf16.mxu0 %v97
  %129 = vmatpush1.bf16.msra.mxu0 %v96
  %130 = vmatprep.subr.bf16.mxu0 %v99
  %131 = vmatpush1.bf16.msra.mxu0 %v98
  %132 = vmatprep.subr.bf16.mxu0 %v101
  %133 = vmatpush1.bf16.msra.mxu0 %v100
  %134 = vmatprep.subr.bf16.mxu0 %v103
  %135 = vmatpush1.bf16.msra.mxu0 %v102
  %136 = vmatprep.subr.bf16.mxu0 %v105
  %137 = vmatpush1.bf16.msra.mxu0 %v104
  %138 = vmatprep.subr.bf16.mxu0 %v107
  %139 = vmatpush1.bf16.msra.mxu0 %v106
  %140 = vmatprep.subr.bf16.mxu0 0
  %141 = vmatpush1.bf16.msra.mxu0 0
  %142 = vmatprep.subr.bf16.mxu0 0
  %143 = vmatpush1.bf16.msra.mxu0 0
  %144 = vmatprep.subr.bf16.mxu0 0
  %145 = vmatpush1.bf16.msra.mxu0 0
  %146 = vmatprep.subr.bf16.mxu0 0
  %147 = vmatpush1.bf16.msra.mxu0 0
  %148 = vmatprep.subr.bf16.mxu0 0
  %149 = vmatpush1.bf16.msra.mxu0 0
  %150 = vmatprep.subr.bf16.mxu0 0
  %151 = vmatpush1.bf16.msra.mxu0 0
  %152 = vmatprep.subr.bf16.mxu0 0
  %153 = vmatpush1.bf16.msra.mxu0 0
  %154 = vmatprep.subr.bf16.mxu0 0
  %155 = vmatpush1.bf16.msra.mxu0 0
  %156 = vmatprep.mubr.bf16.mxu0 0
  %157 = vmatmul.mubr.bf16.gmra.mrb[0].mxu0 %v15
  %v158 = vpop.f32.mrb[0].mxu0
  %v159 = vadd.f32 %v37, %v158
  %v160 = vpop.f32.mrb[0].mxu0
  %v161 = vadd.f32 %v41, %v160
  %v162 = vpop.f32.mrb[0].mxu0
  %v163 = vpop.f32.mrb[0].mxu0
  %164 = vdwg.mxu0
  %v167 = vcombine.low %v159, %v161
  %v169 = vunpack.c.l.s4 1983009808
  %v170 = vunpack.c.0.s8 %v169
  %v171 = vlaneseq
  %v172 = vshrl.u32 %v171, 7
  %v173 = vsub.s32 %v170, %v172
  %v174 = vrot.slane %v167, %v173
  %176 = vst [vmem:[%s3] sm:$0xf] %v174
  // Predicated region
  $region14: #{run.12} parent=0 // pred_check
    _
  $region15: #{run.12} parent=0 // pred_check_branch
    %178 = sbr.rel (0) target = $region17
  $region16: #{run.12} parent=0 // pred_region
    _
  $region17: #{run.12} parent=0 // pred_fallthru
    _
  // Predicated region
  $region18: #{run.12} parent=0 // pred_check
    _
  $region19: #{run.12} parent=0 // pred_check_branch
    %180 = sbr.rel (0) target = $region21
  $region20: #{run.12} parent=0 // pred_region
    _
  $region21: #{run.12} parent=0 // pred_fallthru
    _

// kernel: run.21
$region0: #{run.21}
  #allocation0 [shape = 'u32[]', space=smem, size = 0x4, offset = 0x4, fixed_abs, tag = 'smem constant byte address 0x4 - core index']
  #allocation1 [shape = 'u32[144,128]{1,0:T(1,128)}', space=vmem, size = 0x12000, scoped, tag = 'internal scratch']
  %s0 = inlined_call_operand.vmem [shape: f32[2,8,128], index: 0, kind: input, shape index: {}]
  %s1 = inlined_call_operand.vmem [shape: f32[2,1,128], index: 1, kind: input, shape index: {}]
  %s2 = inlined_call_operand.vmem [shape: f32[2,1,128], index: 2, kind: input, shape index: {}]
  %s3 = inlined_call_operand.hbm [shape: f32[2,8,128], index: 3, kind: output, shape index: {}]
  %s4 = sld [smem:[#allocation0]]
  $region45: #{run.21} parent=0
    _
  %s6 = ssub.s32 1, %s4
  %s7 = scalar_select 0, %s6, %s4
  $region1: #{run.21} parent=0
    #allocation2 [shape = 'u8[8192]{0}', space=vmem, size = 0x2000, scoped, tag = 'output window, operand 0']
    #allocation3 [shape = 's32[2]{0}', space=sflag, size = 0x8, scoped, tag = 'scoped memory for run.21']
    %8 = vsyncpa [#allocation3], 0
    %s9 = scalar_lea.sflag [#allocation3], 1
    %10 = vsyncpa %s9, 0
    loop: start=0, step=1, limit=4
    $region2: #{run.21} parent=1 // loop_pre_header
      _
    $region3: #{run.21} parent=1 // loop_header
      %s12 = sphi 0, %s16
      %p13 = scmp.ge.s32.totalorder %s12, 4
      %s19 = sphi 0, %s31
      %s20 = sphi 0, %s27
      %s21 = sphi 0, %s19
      %s22 = sphi 0, %s20
      %s23 = sphi 0, %s21
      %s24 = sphi 0, %s22
      %s36 = sphi 0, %s38
      %s39 = sphi 0, %s36
      %s40 = sphi 0, %s39
      %s56 = sphi 0, %s40
      %s62 = sphi 0, %s64
      %s65 = sphi 0, %s62
      %s66 = sphi 0, %s65
      %s82 = sphi 0, %s66
      %s88 = sphi 0, %s90
      %s91 = sphi 0, %s88
      %s92 = sphi 0, %s91
      %s108 = sphi 0, %s92
      %s116 = sphi 0, %s118
      %s119 = sphi 0, %s116
      %s120 = sphi 0, %s119
      %s136 = sphi 0, %s120
    $region4: #{run.21} parent=1 // loop_header_branch
      %15 = sbr.rel (%p13) target = $region8
    $region5: #{run.21} parent=1 // loop_body
      %s17 = ssub.s32 %s12, 1
      %s18 = ssub.s32 %s12, 2
      %s25 = sadd.s32 1, %s20
      %p26 = scmp.ge.s32.totalorder %s25, 1
      %s27 = scalar_select %p26, 0, %s25
      %s28 = sadd.s32 1, %s19
      %s29 = scalar_select %p26, %s28, %s19
      %p30 = scmp.ge.s32.totalorder %s29, 2
      %s31 = scalar_select %p30, 0, %s29
      %s32 = ssub.s32 %s19, %s31
      %s33 = ssub.s32 %s20, %s27
      %s34 = sor.u32 %s32, %s33
      %p35 = scmp.eq.s32.totalorder %s34, 0
      %s37 = sadd.s32 %s36, 1
      %s38 = scalar_select %p35, %s36, %s37
      %p41 = pneg %p35
      %p42 = scmp.eq.s32.totalorder %s12, 1
      %p43 = por %p41, %p42
      %p44 = scmp.ne.s32.totalorder %s36, %s39
      %p45 = scmp.eq.s32.totalorder %s12, 0
      %p46 = por %p44, %p45
      %p47 = scmp.ne.s32.totalorder %s36, %s39
      %p48 = scmp.eq.s32.totalorder %s17, 1
      %p49 = por %p47, %p48
      %p50 = scmp.ne.s32.totalorder %s39, %s40
      %p51 = scmp.eq.s32.totalorder %s17, 0
      %p52 = por %p50, %p51
      %p53 = scmp.ne.s32.totalorder %s39, %s40
      %p54 = scmp.eq.s32.totalorder %s18, 1
      %p55 = por %p53, %p54
      %p57 = scmp.ne.s32.totalorder %s40, %s56
      %p58 = scmp.eq.s32.totalorder %s18, 0
      %p59 = por %p57, %p58
      %s60 = ssub.s32 %s19, %s31
      %p61 = scmp.eq.s32.totalorder %s60, 0
      %s63 = sadd.s32 %s62, 1
      %s64 = scalar_select %p61, %s62, %s63
      %p67 = pneg %p61
      %p68 = scmp.eq.s32.totalorder %s12, 1
      %p69 = por %p67, %p68
      %p70 = scmp.ne.s32.totalorder %s62, %s65
      %p71 = scmp.eq.s32.totalorder %s12, 0
      %p72 = por %p70, %p71
      %p73 = scmp.ne.s32.totalorder %s62, %s65
      %p74 = scmp.eq.s32.totalorder %s17, 1
      %p75 = por %p73, %p74
      %p76 = scmp.ne.s32.totalorder %s65, %s66
      %p77 = scmp.eq.s32.totalorder %s17, 0
      %p78 = por %p76, %p77
      %p79 = scmp.ne.s32.totalorder %s65, %s66
      %p80 = scmp.eq.s32.totalorder %s18, 1
      %p81 = por %p79, %p80
      %p83 = scmp.ne.s32.totalorder %s66, %s82
      %p84 = scmp.eq.s32.totalorder %s18, 0
      %p85 = por %p83, %p84
      %s86 = ssub.s32 %s19, %s31
      %p87 = scmp.eq.s32.totalorder %s86, 0
      %s89 = sadd.s32 %s88, 1
      %s90 = scalar_select %p87, %s88, %s89
      %p93 = pneg %p87
      %p94 = scmp.eq.s32.totalorder %s12, 1
      %p95 = por %p93, %p94
      %p96 = scmp.ne.s32.totalorder %s88, %s91
      %p97 = scmp.eq.s32.totalorder %s12, 0
      %p98 = por %p96, %p97
      %p99 = scmp.ne.s32.totalorder %s88, %s91
      %p100 = scmp.eq.s32.totalorder %s17, 1
      %p101 = por %p99, %p100
      %p102 = scmp.ne.s32.totalorder %s91, %s92
      %p103 = scmp.eq.s32.totalorder %s17, 0
      %p104 = por %p102, %p103
      %p105 = scmp.ne.s32.totalorder %s91, %s92
      %p106 = scmp.eq.s32.totalorder %s18, 1
      %p107 = por %p105, %p106
      %p109 = scmp.ne.s32.totalorder %s92, %s108
      %p110 = scmp.eq.s32.totalorder %s18, 0
      %p111 = por %p109, %p110
      %s112 = ssub.s32 %s19, %s31
      %s113 = ssub.s32 %s20, %s27
      %s114 = sor.u32 %s112, %s113
      %p115 = scmp.eq.s32.totalorder %s114, 0
      %s117 = sadd.s32 %s116, 1
      %s118 = scalar_select %p115, %s116, %s117
      %p121 = pneg %p115
      %p122 = scmp.eq.s32.totalorder %s12, 1
      %p123 = por %p121, %p122
      %p124 = scmp.ne.s32.totalorder %s116, %s119
      %p125 = scmp.eq.s32.totalorder %s12, 0
      %p126 = por %p124, %p125
      %p127 = scmp.ne.s32.totalorder %s116, %s119
      %p128 = scmp.eq.s32.totalorder %s17, 1
      %p129 = por %p127, %p128
      %p130 = scmp.ne.s32.totalorder %s119, %s120
      %p131 = scmp.eq.s32.totalorder %s17, 0
      %p132 = por %p130, %p131
      %p133 = scmp.ne.s32.totalorder %s119, %s120
      %p134 = scmp.eq.s32.totalorder %s18, 1
      %p135 = por %p133, %p134
      %p137 = scmp.ne.s32.totalorder %s120, %s136
      %p138 = scmp.eq.s32.totalorder %s18, 0
      %p139 = por %p137, %p138
      %p140 = scmp.le.s32.totalorder 1, %s12
      %p141 = scmp.lt.s32.totalorder %s12, 3
      %p142 = pnand %p140, %p141
      %p143 = pneg %p142
      // Predicated region
      $region9: #{run.21} parent=5 // pred_check
        _
      $region10: #{run.21} parent=5 // pred_check_branch
        %145 = sbr.rel (%p142) target = $region12
      $region11: #{run.21} parent=5 // pred_region
        %s146 = ssub.s32 %s12, 1
      $region12: #{run.21} parent=5 // pred_fallthru
        _
      %p147 = scmp.lt.s32.totalorder %s12, 2
      // Predicated region
      $region13: #{run.21} parent=5 // pred_check
        %p148 = pneg %p147
      $region14: #{run.21} parent=5 // pred_check_branch
        %150 = sbr.rel (%p148) target = $region16
      $region15: #{run.21} parent=5 // pred_region
        // Predicated region
        $region17: #{run.21} parent=15 // pred_check
          %p151 = pneg %p46
        $region18: #{run.21} parent=15 // pred_check_branch
          %153 = sbr.rel (%p151) target = $region20
        $region19: #{run.21} parent=15 // pred_region
          %p154 = scmp.lt.s32.totalorder %s19, 1
          %s155 = scalar_select %p154, %s19, 1
          %p156 = scmp.lt.s32.totalorder %s20, 0
          %s157 = scalar_select %p156, %s20, 0
          %s158 = sadd.s32 %s157, %s155
          %s159 = smul.addr %s158, 8
          %s160 = scalar_lea.vmem %s0, %s159
        $region20: #{run.21} parent=15 // pred_fallthru
          _
        // Predicated region
        $region21: #{run.21} parent=15 // pred_check
          %p161 = pneg %p72
        $region22: #{run.21} parent=15 // pred_check_branch
          %163 = sbr.rel (%p161) target = $region24
        $region23: #{run.21} parent=15 // pred_region
          %p164 = scmp.lt.s32.totalorder %s19, 1
          %s165 = scalar_select %p164, %s19, 1
          %s166 = scalar_lea.vmem %s1, %s165
        $region24: #{run.21} parent=15 // pred_fallthru
          _
        // Predicated region
        $region25: #{run.21} parent=15 // pred_check
          %p167 = pneg %p98
        $region26: #{run.21} parent=15 // pred_check_branch
          %169 = sbr.rel (%p167) target = $region28
        $region27: #{run.21} parent=15 // pred_region
          %p170 = scmp.lt.s32.totalorder %s19, 1
          %s171 = scalar_select %p170, %s19, 1
          %s172 = scalar_lea.vmem %s2, %s171
        $region28: #{run.21} parent=15 // pred_fallthru
          _
      $region16: #{run.21} parent=5 // pred_fallthru
        _
      %p173 = scmp.le.s32.totalorder 1, %s12
      %p174 = scmp.lt.s32.totalorder %s12, 3
      %p175 = pnand %p173, %p174
      %p176 = pneg %p175
      // Predicated region
      $region29: #{run.21} parent=5 // pred_check
        _
      $region30: #{run.21} parent=5 // pred_check_branch
        %178 = sbr.rel (%p175) target = $region32
      $region31: #{run.21} parent=5 // pred_region
        %s179 = ssub.s32 %s12, 1
        %p180 = scmp.lt.s32.totalorder %s21, 1
        %s181 = scalar_select %p180, %s21, 1
        %p182 = scmp.lt.s32.totalorder %s22, 0
        %s183 = scalar_select %p182, %s22, 0
        %s184 = sadd.s32 %s183, %s181
        %s185 = smul.addr %s184, 8
        %s186 = scalar_lea.vmem %s0, %s185
        %p187 = pneg %p52
        %p188 = pneg %p49
        %p189 = scmp.lt.s32.totalorder %s21, 1
        %s190 = scalar_select %p189, %s21, 1
        %s191 = scalar_lea.vmem %s1, %s190
        %p192 = pneg %p78
        %p193 = pneg %p75
        %p194 = scmp.lt.s32.totalorder %s21, 1
        %s195 = scalar_select %p194, %s21, 1
        %s196 = scalar_lea.vmem %s2, %s195
        %p197 = pneg %p104
        %p198 = pneg %p101
        %p199 = pneg %p132
        %p200 = pneg %p129
        %s201 = sand.u32 %s119, 1
        %s202 = scalar_lea.sflag [#allocation3], %s201
        %s203 = sand.u32 %s119, 1
        %s204 = smul.addr %s203, 8
        %s205 = scalar_lea.vmem [#allocation2], %s204
        %p206 = scmp.lt.s32.totalorder %s21, 1
        %s207 = scalar_select %p206, %s21, 1
        %p208 = scmp.lt.s32.totalorder %s22, 0
        %s209 = scalar_select %p208, %s22, 0
        %s210 = sadd.s32 %s209, %s207
        %s211 = smul.addr %s210, 8
        %s212 = scalar_lea.vmem %s0, %s211
        %p213 = scmp.lt.s32.totalorder %s21, 1
        %s214 = scalar_select %p213, %s21, 1
        %s215 = scalar_lea.vmem %s1, %s214
        %p216 = scmp.lt.s32.totalorder %s21, 1
        %s217 = scalar_select %p216, %s21, 1
        %s218 = scalar_lea.vmem %s2, %s217
        %v219 = vld [vmem:[%s212] sm:$0xff]
        %v220 = vmul.f32 %v219, %v219
        %221 = vadd.xlane.f32.xlu0 %v220
        %v222 = vpop.xlane.xlu0 %221
        %v223 = vrcp.pop 128.0
        %v224 = vmul.f32 %v222, %v223
        %v225 = vadd.f32 %v224, 1e-05
        %v226 = vrsqrt.pop %v225
        %v227 = vmul.f32 %v219, %v226
        %v228 = vld [vmem:[%s215] sm:$0x1]
        %v230 = vlaneseq
        %v231 = vshrl.u32 %v230, 7
        %v232 = vsub.s32 0, %v231
        %v233 = vrot.slane %v228, %v232
        %v235 = vmul.f32 %v227, %v233
        %v236 = vld [vmem:[%s218] sm:$0x1]
        %v238 = vlaneseq
        %v239 = vshrl.u32 %v238, 7
        %v240 = vsub.s32 0, %v239
        %v241 = vrot.slane %v236, %v240
        %v243 = vadd.f32 %v235, %v241
        %244 = vst [vmem:[%s205] sm:$0xff] %v243
        %s245 = sand.u32 %s119, 1
        %s246 = scalar_lea.sflag [#allocation3], %s245
        %s247 = sand.u32 %s119, 1
        %s248 = smul.addr %s247, 8
        %s249 = scalar_lea.vmem [#allocation2], %s248
        // Predicated region
        $region33: #{run.21} parent=31 // pred_check
          %p250 = pneg %p129
        $region34: #{run.21} parent=31 // pred_check_branch
          %252 = sbr.rel (%p250) target = $region36
        $region35: #{run.21} parent=31 // pred_region
          %s254 = ssub.s32 128, 128
          %255 = vsyncadd %s246, %s254
          %s256 = sadd.s32 %s22, %s21
          %s257 = smul.addr %s256, 128
          %s258 = scalar_lea.hbm %s3, %s257
          %s260 = sshll.u32 %s249, 4
          %s261 = int_to_ptr.vmem [resolvable:$true] %s260
          %263 = dma.vmem_to_hbm [thread:$0]  %s261, 128, %s258, %s246
        $region36: #{run.21} parent=31 // pred_fallthru
          _
      $region32: #{run.21} parent=5 // pred_fallthru
        _
      %p264 = scmp.le.s32.totalorder 2, %s12
      // Predicated region
      $region37: #{run.21} parent=5 // pred_check
        %p265 = pneg %p264
      $region38: #{run.21} parent=5 // pred_check_branch
        %267 = sbr.rel (%p265) target = $region40
      $region39: #{run.21} parent=5 // pred_region
        %s268 = ssub.s32 %s12, 2
        // Predicated region
        $region41: #{run.21} parent=39 // pred_check
          %p269 = pneg %p135
        $region42: #{run.21} parent=39 // pred_check_branch
          %271 = sbr.rel (%p269) target = $region44
        $region43: #{run.21} parent=39 // pred_region
          %s272 = sand.u32 %s120, 1
          %s273 = scalar_lea.sflag [#allocation3], %s272
          %s274 = sand.u32 %s120, 1
          %s275 = smul.addr %s274, 8
          %s276 = scalar_lea.vmem [#allocation2], %s275
          %277 = dma.done %s273, 128
        $region44: #{run.21} parent=39 // pred_fallthru
          _
      $region40: #{run.21} parent=5 // pred_fallthru
        _
    $region6: #{run.21} parent=1 // loop_footer
      %s16 = sadd.s32 1, %s12
    $region7: #{run.21} parent=1 // loop_footer_branch
      %11 = sbr.rel target = $region3
    $region8: #{run.21} parent=1 // loop_exit
      _
    %278 = vsyncpa [#allocation3], 1
    %s279 = scalar_lea.sflag [#allocation3], 1
    %280 = vsyncpa %s279, 1

</llo_original>
